<compile_context>
chip_gen: v7x
topology: tpu7x:2x2x1
jax: 0.10.0
libtpu: 0.0.40
codegen_flags: <defaults>
</compile_context>

<pallas_src>
import functools

import jax
import jax.numpy as jnp
from jax import lax
from jax.experimental import pallas as pl
from jax.experimental.pallas import tpu as pltpu

LN_EPS = 1e-5       # PyTorch nn.LayerNorm default
MASK_FILL = -1e30   # large finite negative; exp() -> 0, never NaN


def _layernorm(x, gamma, beta):
    mean = jnp.mean(x, axis=-1, keepdims=True)
    var = jnp.mean((x - mean) ** 2, axis=-1, keepdims=True)
    return (x - mean) * lax.rsqrt(var + LN_EPS) * gamma + beta


def clip_layer_kernel(n_heads, head_group,
                      x_ref,
                      ln1_g_ref, ln1_b_ref,
                      w_in_ref, b_in_ref,
                      w_out_ref, b_out_ref,
                      ln2_g_ref, ln2_b_ref,
                      w1_ref, b1_ref,
                      w2_ref, b2_ref,
                      o_ref,
                      qkv_sc, attn_acc):
    BB, S, D = x_ref.shape
    M = BB * S
    d_head = D // n_heads
    PW = head_group * d_head           # lane width handled per loop step
    n_pairs = n_heads // head_group

    # ---- LayerNorm 1 + fused-batch qkv projection -------------------------
    x = x_ref[...].reshape(M, D).astype(jnp.float32)
    residue = x
    h = _layernorm(x, ln1_g_ref[...], ln1_b_ref[...])

    qkv = jnp.dot(h.astype(jnp.bfloat16), w_in_ref[...],
                  preferred_element_type=jnp.float32) + b_in_ref[...]
    # fold 1/sqrt(d_head) into q once (O(M*D) instead of O(S*S) per head)
    q_scaled = qkv[:, :D] * (1.0 / jnp.sqrt(jnp.float32(d_head)))

    # Stage bf16 q|k|v slabs per (head-pair, batch element) so the f32 qkv
    # value dies here and the attention loop only touches VMEM scratch.
    for pi in range(n_pairs):
        lo = pi * PW
        for bb in range(BB):
            r0 = bb * S
            qkv_sc[pi, bb, :, 0:PW] = (
                q_scaled[r0:r0 + S, lo:lo + PW].astype(jnp.bfloat16))
            qkv_sc[pi, bb, :, PW:2 * PW] = (
                qkv[r0:r0 + S, D + lo:D + lo + PW].astype(jnp.bfloat16))
            qkv_sc[pi, bb, :, 2 * PW:3 * PW] = (
                qkv[r0:r0 + S, 2 * D + lo:2 * D + lo + PW].astype(jnp.bfloat16))

    row = lax.broadcasted_iota(jnp.int32, (S, S), 0)
    col = lax.broadcasted_iota(jnp.int32, (S, S), 1)
    causal = (col > row)[None, :, :]   # strictly above diagonal, bcast over BB

    attn_acc[...] = jnp.zeros_like(attn_acc)

    def pair_body(pi, carry):
        blk = qkv_sc[pi]               # (BB, S, 3*PW) bf16, lane-dense load
        q = blk[:, :, 0:PW]
        k = blk[:, :, PW:2 * PW]
        v = blk[:, :, 2 * PW:3 * PW]
        outs = []
        for hj in range(head_group):
            lo = hj * d_head
            qh = q[:, :, lo:lo + d_head]
            kh = k[:, :, lo:lo + d_head]
            vh = v[:, :, lo:lo + d_head]
            s = jnp.einsum("bqd,bkd->bqk", qh, kh,
                           preferred_element_type=jnp.float32)
            s = jnp.where(causal, MASK_FILL, s)
            m = jnp.max(s, axis=-1, keepdims=True)
            e = jnp.exp(s - m)
            l = jnp.sum(e, axis=-1, keepdims=True)
            o = jnp.einsum("bqk,bkd->bqd", e.astype(jnp.bfloat16), vh,
                           preferred_element_type=jnp.float32)
            # deferred softmax normalization: scale the f32 (.., d_head)
            # output instead of the (.., S) probabilities.
            outs.append(o * pl.reciprocal(l, approx=True))
        o_pair = outs[0] if head_group == 1 else jnp.concatenate(outs, axis=-1)
        o_pair = o_pair.reshape(M, PW).astype(jnp.bfloat16)
        # fold out-projection into the loop: lane-dense f32 accumulation
        w_off = pl.multiple_of(pi * PW, PW)
        w_blk = w_out_ref[pl.ds(w_off, PW), :]            # (PW, D) bf16
        attn_acc[...] += jnp.dot(o_pair, w_blk,
                                 preferred_element_type=jnp.float32)
        return carry

    lax.fori_loop(0, n_pairs, pair_body, 0,
                  unroll=2 if n_pairs >= 2 else 1)

    x = attn_acc[...] + b_out_ref[...] + residue

    # ---- MLP block ---------------------------------------------------------
    residue = x
    h = _layernorm(x, ln2_g_ref[...], ln2_b_ref[...])
    h = jnp.dot(h.astype(jnp.bfloat16), w1_ref[...],
                preferred_element_type=jnp.float32) + b1_ref[...]
    h = h.astype(jnp.bfloat16)
    h = h * jax.nn.sigmoid(1.702 * h)   # QuickGELU in bf16, feeds w2 dot
    # TODO(synk): keep this elementwise block in f32 on v5e (no bf16 VPU/EUP).
    h = jnp.dot(h, w2_ref[...], preferred_element_type=jnp.float32) + b2_ref[...]

    o_ref[...] = (h + residue).reshape(BB, S, D).astype(o_ref.dtype)


def prepare_clip_params(params):
    """Cast big matmul weights to bf16 once (hoisted out of clip_layer)."""
    (ln1_g, ln1_b, w_in, b_in, w_out, b_out,
     ln2_g, ln2_b, w1, b1, w2, b2) = params
    return (ln1_g, ln1_b,
            w_in.astype(jnp.bfloat16), b_in,
            w_out.astype(jnp.bfloat16), b_out,
            ln2_g, ln2_b,
            w1.astype(jnp.bfloat16), b1,
            w2.astype(jnp.bfloat16), b2)


def _vmem_limit_bytes():
    # generation-aware scoped VMEM limit (v7x: 64 MiB/TC, v5e/v6e: 128 MiB)
    try:
        cap = pltpu.get_tpu_info().vmem_capacity_bytes
    except Exception:
        cap = 64 * 1024 * 1024
    return int(min(cap // 2, 64 * 1024 * 1024))


def clip_layer(x, params, n_heads):
    B, S, D = x.shape
    assert D % n_heads == 0
    d_head = D // n_heads

    (ln1_g, ln1_b, w_in, b_in, w_out, b_out,
     ln2_g, ln2_b, w1, b1, w2, b2) = params
    # no-op if prepare_clip_params already produced bf16 weights
    w_in_b, w_out_b = w_in.astype(jnp.bfloat16), w_out.astype(jnp.bfloat16)
    w1_b, w2_b = w1.astype(jnp.bfloat16), w2.astype(jnp.bfloat16)

    # fuse batch pairs into the matmul M dimension when possible
    BB = 2 if B % 2 == 0 else 1
    head_group = 2 if n_heads % 2 == 0 else 1
    n_pairs = n_heads // head_group
    PW = head_group * d_head

    kernel = functools.partial(clip_layer_kernel, n_heads, head_group)

    args = (x, ln1_g, ln1_b, w_in_b, b_in, w_out_b, b_out,
            ln2_g, ln2_b, w1_b, b1, w2_b, b2)

    # advisory cost for XLA scheduling
    flops = B * (24 * S * D * D + 4 * S * S * D)
    transcendentals = B * (n_heads * S * S + S * 4 * D)
    bytes_accessed = (2 * B * S * D * 4        # x in/out (f32)
                      + 24 * D * D             # bf16 weight matrices
                      + 4 * 13 * D)            # f32 biases + LN params

    def build(weight_pipeline_mode):
        def wspec(shape):
            idx = lambda b: (0,) * len(shape)
            if weight_pipeline_mode is None:
                return pl.BlockSpec(shape, idx)
            return pl.BlockSpec(shape, idx, pipeline_mode=weight_pipeline_mode)

        in_specs = [
            pl.BlockSpec((BB, S, D), lambda b: (b, 0, 0)),   # x (batch block)
            wspec((1, D)), wspec((1, D)),                    # ln1 gamma, beta
            wspec((D, 3 * D)), wspec((1, 3 * D)),            # attn in_proj
            wspec((D, D)), wspec((1, D)),                    # attn out_proj
            wspec((1, D)), wspec((1, D)),                    # ln2 gamma, beta
            wspec((D, 4 * D)), wspec((1, 4 * D)),            # linear_1
            wspec((4 * D, D)), wspec((1, D)),                # linear_2
        ]
        return pl.pallas_call(
            kernel,
            out_shape=jax.ShapeDtypeStruct((B, S, D), x.dtype),
            grid_spec=pltpu.PrefetchScalarGridSpec(
                num_scalar_prefetch=0,
                grid=(B // BB,),
                in_specs=in_specs,
                out_specs=pl.BlockSpec((BB, S, D), lambda b: (b, 0, 0)),
                scratch_shapes=[
                    pltpu.VMEM((n_pairs, BB, S, 3 * PW), jnp.bfloat16),
                    pltpu.VMEM((BB * S, D), jnp.float32),
                ]),
            compiler_params=pltpu.CompilerParams(
                dimension_semantics=("parallel",),
                vmem_limit_bytes=_vmem_limit_bytes()),
            cost_estimate=pl.CostEstimate(
                flops=flops, transcendentals=transcendentals,
                bytes_accessed=bytes_accessed),
        )

    try:
        # single-buffer grid-constant weight blocks (halves weight VMEM)
        return build(pl.Buffered(1))(*args)
    except Exception:
        # fallback if this jax build rejects pipeline_mode=pl.Buffered(1)
        return build(None)(*args)


# ---------------- pure-JAX f32 reference (for correctness check) -----------
def clip_layer_ref(x, params, n_heads):
    (ln1_g, ln1_b, w_in, b_in, w_out, b_out,
     ln2_g, ln2_b, w1, b1, w2, b2) = params
    B, S, D = x.shape
    d_head = D // n_heads

    def ln(v, g, b):
        mu = jnp.mean(v, -1, keepdims=True)
        var = jnp.mean((v - mu) ** 2, -1, keepdims=True)
        return (v - mu) / jnp.sqrt(var + LN_EPS) * g + b

    res = x
    h = ln(x, ln1_g, ln1_b)
    qkv = h @ w_in + b_in
    q, k, v = jnp.split(qkv, 3, axis=-1)
    q = q.reshape(B, S, n_heads, d_head).transpose(0, 2, 1, 3)
    k = k.reshape(B, S, n_heads, d_head).transpose(0, 2, 1, 3)
    v = v.reshape(B, S, n_heads, d_head).transpose(0, 2, 1, 3)
    s = jnp.einsum("bhqd,bhkd->bhqk", q, k)
    mask = jnp.triu(jnp.ones((S, S), bool), k=1)
    s = jnp.where(mask, -jnp.inf, s) / jnp.sqrt(jnp.float32(d_head))
    p = jax.nn.softmax(s, axis=-1)
    o = jnp.einsum("bhqk,bhkd->bhqd", p, v).transpose(0, 2, 1, 3).reshape(B, S, D)
    x = o @ w_out + b_out + res
    res = x
    h = ln(x, ln2_g, ln2_b)
    h = h @ w1 + b1
    h = h * jax.nn.sigmoid(1.702 * h)
    h = h @ w2 + b2
    return h + res


if __name__ == "__main__":
    B, S, D, H = 2, 8, 32, 4

    key = jax.random.PRNGKey(0)
    keys = jax.random.split(key, 16)

    def nrm(k, shape, scale=0.02):
        return (scale * jax.random.normal(k, shape)).astype(jnp.float32)

    # deterministic synthetic parameters (shapes from CLIPLayer.__init__)
    ln1_g = 1.0 + nrm(keys[0], (1, D), 0.1)
    ln1_b = nrm(keys[1], (1, D), 0.1)
    w_in  = nrm(keys[2], (D, 3 * D))
    b_in  = nrm(keys[3], (1, 3 * D))
    w_out = nrm(keys[4], (D, D))
    b_out = nrm(keys[5], (1, D))
    ln2_g = 1.0 + nrm(keys[6], (1, D), 0.1)
    ln2_b = nrm(keys[7], (1, D), 0.1)
    w1    = nrm(keys[8], (D, 4 * D))
    b1    = nrm(keys[9], (1, 4 * D))
    w2    = nrm(keys[10], (4 * D, D))
    b2    = nrm(keys[11], (1, D))

    params = (ln1_g, ln1_b, w_in, b_in, w_out, b_out,
              ln2_g, ln2_b, w1, b1, w2, b2)
    params_bf16 = prepare_clip_params(params)   # bf16 weight cast hoisted here

    x = jax.random.normal(keys[12], (B, S, D), dtype=jnp.float32)

    out = clip_layer(x, params_bf16, n_heads=H)
    out = jax.block_until_ready(out)

    ref = clip_layer_ref(x, params, n_heads=H)
    assert out.shape == (B, S, D)
    max_err = float(jnp.max(jnp.abs(out - ref)))
    # bf16 matmul/GELU operands + approx reciprocal -> compare vs f32
    # reference with a correspondingly relaxed tolerance.
    assert jnp.allclose(out, ref, rtol=2e-2, atol=2e-2), \
        f"max abs err = {max_err}"

    print("KERNEL_OK")
</pallas_src>

<mosaic_0001>
module attributes {stable_mosaic.version = 11 : i64} {
  func.func @clip_layer_kernel(%arg0: i32, %arg1: memref<2x8x32xf32, #tpu.memory_space<vmem>>, %arg2: memref<1x32xf32, #tpu.memory_space<vmem>>, %arg3: memref<1x32xf32, #tpu.memory_space<vmem>>, %arg4: memref<32x96xbf16, #tpu.memory_space<vmem>>, %arg5: memref<1x96xf32, #tpu.memory_space<vmem>>, %arg6: memref<32x32xbf16, #tpu.memory_space<vmem>>, %arg7: memref<1x32xf32, #tpu.memory_space<vmem>>, %arg8: memref<1x32xf32, #tpu.memory_space<vmem>>, %arg9: memref<1x32xf32, #tpu.memory_space<vmem>>, %arg10: memref<32x128xbf16, #tpu.memory_space<vmem>>, %arg11: memref<1x128xf32, #tpu.memory_space<vmem>>, %arg12: memref<128x32xbf16, #tpu.memory_space<vmem>>, %arg13: memref<1x32xf32, #tpu.memory_space<vmem>>, %arg14: memref<2x8x32xf32, #tpu.memory_space<vmem>>, %arg15: memref<2x2x8x48xbf16, #tpu.memory_space<vmem>>, %arg16: memref<16x32xf32, #tpu.memory_space<vmem>>) attributes {dimension_semantics = [#tpu.dimension_semantics<parallel>], iteration_bounds = array<i64: 1>, scalar_prefetch = 0 : i64, scratch_operands = 2 : i64, tpu.core_type = #tpu.core_type<tc>, window_params = [{transform_indices = @transform_0, window_bounds = array<i64: 2, 8, 32>}, {pipeline_mode = #tpu.pipeline_mode<synchronous>, transform_indices = @transform_1, window_bounds = array<i64: 1, 32>}, {pipeline_mode = #tpu.pipeline_mode<synchronous>, transform_indices = @transform_2, window_bounds = array<i64: 1, 32>}, {pipeline_mode = #tpu.pipeline_mode<synchronous>, transform_indices = @transform_3, window_bounds = array<i64: 32, 96>}, {pipeline_mode = #tpu.pipeline_mode<synchronous>, transform_indices = @transform_4, window_bounds = array<i64: 1, 96>}, {pipeline_mode = #tpu.pipeline_mode<synchronous>, transform_indices = @transform_5, window_bounds = array<i64: 32, 32>}, {pipeline_mode = #tpu.pipeline_mode<synchronous>, transform_indices = @transform_6, window_bounds = array<i64: 1, 32>}, {pipeline_mode = #tpu.pipeline_mode<synchronous>, transform_indices = @transform_7, window_bounds = array<i64: 1, 32>}, {pipeline_mode = #tpu.pipeline_mode<synchronous>, transform_indices = @transform_8, window_bounds = array<i64: 1, 32>}, {pipeline_mode = #tpu.pipeline_mode<synchronous>, transform_indices = @transform_9, window_bounds = array<i64: 32, 128>}, {pipeline_mode = #tpu.pipeline_mode<synchronous>, transform_indices = @transform_10, window_bounds = array<i64: 1, 128>}, {pipeline_mode = #tpu.pipeline_mode<synchronous>, transform_indices = @transform_11, window_bounds = array<i64: 128, 32>}, {pipeline_mode = #tpu.pipeline_mode<synchronous>, transform_indices = @transform_12, window_bounds = array<i64: 1, 32>}, {transform_indices = @transform_13, window_bounds = array<i64: 2, 8, 32>}]} {
    %c0 = arith.constant 0 : index
    %c0_0 = arith.constant 0 : index
    %c0_1 = arith.constant 0 : index
    %0 = vector.load %arg1[%c0, %c0_0, %c0_1] : memref<2x8x32xf32, #tpu.memory_space<vmem>>, vector<2x8x32xf32>
    %1 = vector.shape_cast %0 : vector<2x8x32xf32> to vector<16x32xf32>
    %c0_2 = arith.constant 0 : index
    %c0_3 = arith.constant 0 : index
    %2 = vector.load %arg2[%c0_2, %c0_3] : memref<1x32xf32, #tpu.memory_space<vmem>>, vector<1x32xf32>
    %c0_4 = arith.constant 0 : index
    %c0_5 = arith.constant 0 : index
    %3 = vector.load %arg3[%c0_4, %c0_5] : memref<1x32xf32, #tpu.memory_space<vmem>>, vector<1x32xf32>
    %cst = arith.constant dense<0.000000e+00> : vector<16xf32>
    %4 = vector.multi_reduction <add>, %1, %cst [1] : vector<16x32xf32> to vector<16xf32>
    %5 = vector.shape_cast %4 : vector<16xf32> to vector<16x1xf32>
    %cst_6 = arith.constant 3.200000e+01 : f32
    %6 = vector.broadcast %cst_6 : f32 to vector<16x1xf32>
    %7 = arith.divf %5, %6 : vector<16x1xf32>
    %8 = vector.broadcast %7 : vector<16x1xf32> to vector<16x32xf32>
    %9 = arith.subf %1, %8 : vector<16x32xf32>
    %10 = arith.mulf %9, %9 : vector<16x32xf32>
    %cst_7 = arith.constant dense<0.000000e+00> : vector<16xf32>
    %11 = vector.multi_reduction <add>, %10, %cst_7 [1] : vector<16x32xf32> to vector<16xf32>
    %12 = vector.shape_cast %11 : vector<16xf32> to vector<16x1xf32>
    %cst_8 = arith.constant 3.200000e+01 : f32
    %13 = vector.broadcast %cst_8 : f32 to vector<16x1xf32>
    %14 = arith.divf %12, %13 : vector<16x1xf32>
    %15 = vector.broadcast %7 : vector<16x1xf32> to vector<16x32xf32>
    %16 = arith.subf %1, %15 : vector<16x32xf32>
    %cst_9 = arith.constant 9.99999974E-6 : f32
    %17 = vector.broadcast %cst_9 : f32 to vector<16x1xf32>
    %18 = arith.addf %14, %17 : vector<16x1xf32>
    %19 = math.rsqrt %18 : vector<16x1xf32>
    %20 = vector.broadcast %19 : vector<16x1xf32> to vector<16x32xf32>
    %21 = arith.mulf %16, %20 : vector<16x32xf32>
    %22 = vector.broadcast %2 : vector<1x32xf32> to vector<16x32xf32>
    %23 = arith.mulf %21, %22 : vector<16x32xf32>
    %24 = vector.broadcast %3 : vector<1x32xf32> to vector<16x32xf32>
    %25 = arith.addf %23, %24 : vector<16x32xf32>
    %26 = arith.truncf %25 : vector<16x32xf32> to vector<16x32xbf16>
    %c0_10 = arith.constant 0 : index
    %c0_11 = arith.constant 0 : index
    %27 = vector.load %arg4[%c0_10, %c0_11] : memref<32x96xbf16, #tpu.memory_space<vmem>>, vector<32x96xbf16>
    %cst_12 = arith.constant dense<0.000000e+00> : vector<16x96xf32>
    %28 = tpu.matmul %26, %27, %cst_12 {dimension_numbers = #tpu.dot_dimension_numbers<[1], [0], [0], [1], [0, 0, 1, 1], [], []>} : vector<16x32xbf16>, vector<32x96xbf16>, vector<16x96xf32> -> vector<16x96xf32>
    %c0_13 = arith.constant 0 : index
    %c0_14 = arith.constant 0 : index
    %29 = vector.load %arg5[%c0_13, %c0_14] : memref<1x96xf32, #tpu.memory_space<vmem>>, vector<1x96xf32>
    %30 = vector.broadcast %29 : vector<1x96xf32> to vector<16x96xf32>
    %31 = arith.addf %28, %30 : vector<16x96xf32>
    %32 = vector.extract_strided_slice %31 {offsets = [0, 0], sizes = [16, 32], strides = [1, 1]} : vector<16x96xf32> to vector<16x32xf32>
    %cst_15 = arith.constant 8.000000e+00 : f32
    %33 = math.sqrt %cst_15 : f32
    %cst_16 = arith.constant 1.000000e+00 : f32
    %34 = arith.divf %cst_16, %33 : f32
    %35 = vector.broadcast %34 : f32 to vector<16x32xf32>
    %36 = arith.mulf %32, %35 : vector<16x32xf32>
    %37 = vector.extract_strided_slice %36 {offsets = [0, 0], sizes = [8, 16], strides = [1, 1]} : vector<16x32xf32> to vector<8x16xf32>
    %38 = arith.truncf %37 : vector<8x16xf32> to vector<8x16xbf16>
    %c0_17 = arith.constant 0 : index
    %c0_18 = arith.constant 0 : index
    %c0_19 = arith.constant 0 : index
    %c0_20 = arith.constant 0 : index
    %39 = vector.load %arg15[%c0_17, %c0_18, %c0_19, %c0_20] : memref<2x2x8x48xbf16, #tpu.memory_space<vmem>>, vector<1x1x8x16xbf16>
    %40 = vector.shape_cast %39 : vector<1x1x8x16xbf16> to vector<8x16xbf16>
    %41 = vector.shape_cast %38 : vector<8x16xbf16> to vector<1x1x8x16xbf16>
    tpu.vector_store %arg15[%c0_17, %c0_18, %c0_19, %c0_20], %41 {strides = array<i32>} : memref<2x2x8x48xbf16, #tpu.memory_space<vmem>>, vector<1x1x8x16xbf16>,
    %42 = vector.extract_strided_slice %31 {offsets = [0, 32], sizes = [8, 16], strides = [1, 1]} : vector<16x96xf32> to vector<8x16xf32>
    %43 = arith.truncf %42 : vector<8x16xf32> to vector<8x16xbf16>
    %c0_21 = arith.constant 0 : index
    %c0_22 = arith.constant 0 : index
    %c0_23 = arith.constant 0 : index
    %c16 = arith.constant 16 : index
    %44 = vector.load %arg15[%c0_21, %c0_22, %c0_23, %c16] : memref<2x2x8x48xbf16, #tpu.memory_space<vmem>>, vector<1x1x8x16xbf16>
    %45 = vector.shape_cast %44 : vector<1x1x8x16xbf16> to vector<8x16xbf16>
    %46 = vector.shape_cast %43 : vector<8x16xbf16> to vector<1x1x8x16xbf16>
    tpu.vector_store %arg15[%c0_21, %c0_22, %c0_23, %c16], %46 {strides = array<i32>} : memref<2x2x8x48xbf16, #tpu.memory_space<vmem>>, vector<1x1x8x16xbf16>,
    %47 = vector.extract_strided_slice %31 {offsets = [0, 64], sizes = [8, 16], strides = [1, 1]} : vector<16x96xf32> to vector<8x16xf32>
    %48 = arith.truncf %47 : vector<8x16xf32> to vector<8x16xbf16>
    %c0_24 = arith.constant 0 : index
    %c0_25 = arith.constant 0 : index
    %c0_26 = arith.constant 0 : index
    %c32 = arith.constant 32 : index
    %49 = vector.load %arg15[%c0_24, %c0_25, %c0_26, %c32] : memref<2x2x8x48xbf16, #tpu.memory_space<vmem>>, vector<1x1x8x16xbf16>
    %50 = vector.shape_cast %49 : vector<1x1x8x16xbf16> to vector<8x16xbf16>
    %51 = vector.shape_cast %48 : vector<8x16xbf16> to vector<1x1x8x16xbf16>
    tpu.vector_store %arg15[%c0_24, %c0_25, %c0_26, %c32], %51 {strides = array<i32>} : memref<2x2x8x48xbf16, #tpu.memory_space<vmem>>, vector<1x1x8x16xbf16>,
    %52 = vector.extract_strided_slice %36 {offsets = [8, 0], sizes = [8, 16], strides = [1, 1]} : vector<16x32xf32> to vector<8x16xf32>
    %53 = arith.truncf %52 : vector<8x16xf32> to vector<8x16xbf16>
    %c0_27 = arith.constant 0 : index
    %c1 = arith.constant 1 : index
    %c0_28 = arith.constant 0 : index
    %c0_29 = arith.constant 0 : index
    %54 = vector.load %arg15[%c0_27, %c1, %c0_28, %c0_29] : memref<2x2x8x48xbf16, #tpu.memory_space<vmem>>, vector<1x1x8x16xbf16>
    %55 = vector.shape_cast %54 : vector<1x1x8x16xbf16> to vector<8x16xbf16>
    %56 = vector.shape_cast %53 : vector<8x16xbf16> to vector<1x1x8x16xbf16>
    tpu.vector_store %arg15[%c0_27, %c1, %c0_28, %c0_29], %56 {strides = array<i32>} : memref<2x2x8x48xbf16, #tpu.memory_space<vmem>>, vector<1x1x8x16xbf16>,
    %57 = vector.extract_strided_slice %31 {offsets = [8, 32], sizes = [8, 16], strides = [1, 1]} : vector<16x96xf32> to vector<8x16xf32>
    %58 = arith.truncf %57 : vector<8x16xf32> to vector<8x16xbf16>
    %c0_30 = arith.constant 0 : index
    %c1_31 = arith.constant 1 : index
    %c0_32 = arith.constant 0 : index
    %c16_33 = arith.constant 16 : index
    %59 = vector.load %arg15[%c0_30, %c1_31, %c0_32, %c16_33] : memref<2x2x8x48xbf16, #tpu.memory_space<vmem>>, vector<1x1x8x16xbf16>
    %60 = vector.shape_cast %59 : vector<1x1x8x16xbf16> to vector<8x16xbf16>
    %61 = vector.shape_cast %58 : vector<8x16xbf16> to vector<1x1x8x16xbf16>
    tpu.vector_store %arg15[%c0_30, %c1_31, %c0_32, %c16_33], %61 {strides = array<i32>} : memref<2x2x8x48xbf16, #tpu.memory_space<vmem>>, vector<1x1x8x16xbf16>,
    %62 = vector.extract_strided_slice %31 {offsets = [8, 64], sizes = [8, 16], strides = [1, 1]} : vector<16x96xf32> to vector<8x16xf32>
    %63 = arith.truncf %62 : vector<8x16xf32> to vector<8x16xbf16>
    %c0_34 = arith.constant 0 : index
    %c1_35 = arith.constant 1 : index
    %c0_36 = arith.constant 0 : index
    %c32_37 = arith.constant 32 : index
    %64 = vector.load %arg15[%c0_34, %c1_35, %c0_36, %c32_37] : memref<2x2x8x48xbf16, #tpu.memory_space<vmem>>, vector<1x1x8x16xbf16>
    %65 = vector.shape_cast %64 : vector<1x1x8x16xbf16> to vector<8x16xbf16>
    %66 = vector.shape_cast %63 : vector<8x16xbf16> to vector<1x1x8x16xbf16>
    tpu.vector_store %arg15[%c0_34, %c1_35, %c0_36, %c32_37], %66 {strides = array<i32>} : memref<2x2x8x48xbf16, #tpu.memory_space<vmem>>, vector<1x1x8x16xbf16>,
    %67 = vector.extract_strided_slice %36 {offsets = [0, 16], sizes = [8, 16], strides = [1, 1]} : vector<16x32xf32> to vector<8x16xf32>
    %68 = arith.truncf %67 : vector<8x16xf32> to vector<8x16xbf16>
    %c1_38 = arith.constant 1 : index
    %c0_39 = arith.constant 0 : index
    %c0_40 = arith.constant 0 : index
    %c0_41 = arith.constant 0 : index
    %69 = vector.load %arg15[%c1_38, %c0_39, %c0_40, %c0_41] : memref<2x2x8x48xbf16, #tpu.memory_space<vmem>>, vector<1x1x8x16xbf16>
    %70 = vector.shape_cast %69 : vector<1x1x8x16xbf16> to vector<8x16xbf16>
    %71 = vector.shape_cast %68 : vector<8x16xbf16> to vector<1x1x8x16xbf16>
    tpu.vector_store %arg15[%c1_38, %c0_39, %c0_40, %c0_41], %71 {strides = array<i32>} : memref<2x2x8x48xbf16, #tpu.memory_space<vmem>>, vector<1x1x8x16xbf16>,
    %72 = vector.extract_strided_slice %31 {offsets = [0, 48], sizes = [8, 16], strides = [1, 1]} : vector<16x96xf32> to vector<8x16xf32>
    %73 = arith.truncf %72 : vector<8x16xf32> to vector<8x16xbf16>
    %c1_42 = arith.constant 1 : index
    %c0_43 = arith.constant 0 : index
    %c0_44 = arith.constant 0 : index
    %c16_45 = arith.constant 16 : index
    %74 = vector.load %arg15[%c1_42, %c0_43, %c0_44, %c16_45] : memref<2x2x8x48xbf16, #tpu.memory_space<vmem>>, vector<1x1x8x16xbf16>
    %75 = vector.shape_cast %74 : vector<1x1x8x16xbf16> to vector<8x16xbf16>
    %76 = vector.shape_cast %73 : vector<8x16xbf16> to vector<1x1x8x16xbf16>
    tpu.vector_store %arg15[%c1_42, %c0_43, %c0_44, %c16_45], %76 {strides = array<i32>} : memref<2x2x8x48xbf16, #tpu.memory_space<vmem>>, vector<1x1x8x16xbf16>,
    %77 = vector.extract_strided_slice %31 {offsets = [0, 80], sizes = [8, 16], strides = [1, 1]} : vector<16x96xf32> to vector<8x16xf32>
    %78 = arith.truncf %77 : vector<8x16xf32> to vector<8x16xbf16>
    %c1_46 = arith.constant 1 : index
    %c0_47 = arith.constant 0 : index
    %c0_48 = arith.constant 0 : index
    %c32_49 = arith.constant 32 : index
    %79 = vector.load %arg15[%c1_46, %c0_47, %c0_48, %c32_49] : memref<2x2x8x48xbf16, #tpu.memory_space<vmem>>, vector<1x1x8x16xbf16>
    %80 = vector.shape_cast %79 : vector<1x1x8x16xbf16> to vector<8x16xbf16>
    %81 = vector.shape_cast %78 : vector<8x16xbf16> to vector<1x1x8x16xbf16>
    tpu.vector_store %arg15[%c1_46, %c0_47, %c0_48, %c32_49], %81 {strides = array<i32>} : memref<2x2x8x48xbf16, #tpu.memory_space<vmem>>, vector<1x1x8x16xbf16>,
    %82 = vector.extract_strided_slice %36 {offsets = [8, 16], sizes = [8, 16], strides = [1, 1]} : vector<16x32xf32> to vector<8x16xf32>
    %83 = arith.truncf %82 : vector<8x16xf32> to vector<8x16xbf16>
    %c1_50 = arith.constant 1 : index
    %c1_51 = arith.constant 1 : index
    %c0_52 = arith.constant 0 : index
    %c0_53 = arith.constant 0 : index
    %84 = vector.load %arg15[%c1_50, %c1_51, %c0_52, %c0_53] : memref<2x2x8x48xbf16, #tpu.memory_space<vmem>>, vector<1x1x8x16xbf16>
    %85 = vector.shape_cast %84 : vector<1x1x8x16xbf16> to vector<8x16xbf16>
    %86 = vector.shape_cast %83 : vector<8x16xbf16> to vector<1x1x8x16xbf16>
    tpu.vector_store %arg15[%c1_50, %c1_51, %c0_52, %c0_53], %86 {strides = array<i32>} : memref<2x2x8x48xbf16, #tpu.memory_space<vmem>>, vector<1x1x8x16xbf16>,
    %87 = vector.extract_strided_slice %31 {offsets = [8, 48], sizes = [8, 16], strides = [1, 1]} : vector<16x96xf32> to vector<8x16xf32>
    %88 = arith.truncf %87 : vector<8x16xf32> to vector<8x16xbf16>
    %c1_54 = arith.constant 1 : index
    %c1_55 = arith.constant 1 : index
    %c0_56 = arith.constant 0 : index
    %c16_57 = arith.constant 16 : index
    %89 = vector.load %arg15[%c1_54, %c1_55, %c0_56, %c16_57] : memref<2x2x8x48xbf16, #tpu.memory_space<vmem>>, vector<1x1x8x16xbf16>
    %90 = vector.shape_cast %89 : vector<1x1x8x16xbf16> to vector<8x16xbf16>
    %91 = vector.shape_cast %88 : vector<8x16xbf16> to vector<1x1x8x16xbf16>
    tpu.vector_store %arg15[%c1_54, %c1_55, %c0_56, %c16_57], %91 {strides = array<i32>} : memref<2x2x8x48xbf16, #tpu.memory_space<vmem>>, vector<1x1x8x16xbf16>,
    %92 = vector.extract_strided_slice %31 {offsets = [8, 80], sizes = [8, 16], strides = [1, 1]} : vector<16x96xf32> to vector<8x16xf32>
    %93 = arith.truncf %92 : vector<8x16xf32> to vector<8x16xbf16>
    %c1_58 = arith.constant 1 : index
    %c1_59 = arith.constant 1 : index
    %c0_60 = arith.constant 0 : index
    %c32_61 = arith.constant 32 : index
    %94 = vector.load %arg15[%c1_58, %c1_59, %c0_60, %c32_61] : memref<2x2x8x48xbf16, #tpu.memory_space<vmem>>, vector<1x1x8x16xbf16>
    %95 = vector.shape_cast %94 : vector<1x1x8x16xbf16> to vector<8x16xbf16>
    %96 = vector.shape_cast %93 : vector<8x16xbf16> to vector<1x1x8x16xbf16>
    tpu.vector_store %arg15[%c1_58, %c1_59, %c0_60, %c32_61], %96 {strides = array<i32>} : memref<2x2x8x48xbf16, #tpu.memory_space<vmem>>, vector<1x1x8x16xbf16>,
    %97 = tpu.iota {dimensions = array<i32: 0>} : vector<8x8xi32>
    %98 = tpu.iota {dimensions = array<i32: 1>} : vector<8x8xi32>
    %99 = arith.cmpi sgt, %98, %97 : vector<8x8xi32>
    %100 = vector.shape_cast %99 : vector<8x8xi1> to vector<1x8x8xi1>
    %cst_62 = arith.constant 0.000000e+00 : f32
    %101 = vector.broadcast %cst_62 : f32 to vector<16x32xf32>
    %c0_63 = arith.constant 0 : index
    %c0_64 = arith.constant 0 : index
    %102 = vector.load %arg16[%c0_63, %c0_64] : memref<16x32xf32, #tpu.memory_space<vmem>>, vector<16x32xf32>
    tpu.vector_store %arg16[%c0_63, %c0_64], %101 {strides = array<i32>} : memref<16x32xf32, #tpu.memory_space<vmem>>, vector<16x32xf32>,
    %c0_i32 = arith.constant 0 : i32
    %103 = arith.index_cast %c0_i32 : i32 to index
    %c0_65 = arith.constant 0 : index
    %c0_66 = arith.constant 0 : index
    %c0_67 = arith.constant 0 : index
    %104 = vector.load %arg15[%103, %c0_65, %c0_66, %c0_67] : memref<2x2x8x48xbf16, #tpu.memory_space<vmem>>, vector<1x2x8x48xbf16>
    %105 = vector.shape_cast %104 : vector<1x2x8x48xbf16> to vector<2x8x48xbf16>
    %106 = vector.extract_strided_slice %105 {offsets = [0, 0, 0], sizes = [2, 8, 16], strides = [1, 1, 1]} : vector<2x8x48xbf16> to vector<2x8x16xbf16>
    %107 = vector.extract_strided_slice %105 {offsets = [0, 0, 16], sizes = [2, 8, 16], strides = [1, 1, 1]} : vector<2x8x48xbf16> to vector<2x8x16xbf16>
    %108 = vector.extract_strided_slice %105 {offsets = [0, 0, 32], sizes = [2, 8, 16], strides = [1, 1, 1]} : vector<2x8x48xbf16> to vector<2x8x16xbf16>
    %109 = vector.extract_strided_slice %106 {offsets = [0, 0, 0], sizes = [2, 8, 8], strides = [1, 1, 1]} : vector<2x8x16xbf16> to vector<2x8x8xbf16>
    %110 = vector.extract_strided_slice %107 {offsets = [0, 0, 0], sizes = [2, 8, 8], strides = [1, 1, 1]} : vector<2x8x16xbf16> to vector<2x8x8xbf16>
    %111 = vector.extract_strided_slice %108 {offsets = [0, 0, 0], sizes = [2, 8, 8], strides = [1, 1, 1]} : vector<2x8x16xbf16> to vector<2x8x8xbf16>
    "tpu.trace_start"() <{level = 10 : i32, message = "bqd,bkd->bqk"}> : () -> ()
    %cst_68 = arith.constant dense<0.000000e+00> : vector<2x8x8xf32>
    %112 = tpu.matmul %109, %110, %cst_68 {dimension_numbers = #tpu.dot_dimension_numbers<[2], [2], [1], [1], [0, 0, 0, 1, 1, 1], [0], [0]>} : vector<2x8x8xbf16>, vector<2x8x8xbf16>, vector<2x8x8xf32> -> vector<2x8x8xf32>
    %cst_69 = arith.constant -1.000000e+30 : f32
    "tpu.trace_stop"() : () -> ()
    %113 = vector.shape_cast %100 : vector<1x8x8xi1> to vector<1x8x8xi1>
    %114 = vector.broadcast %113 : vector<1x8x8xi1> to vector<2x8x8xi1>
    %115 = vector.broadcast %cst_69 : f32 to vector<2x8x8xf32>
    %116 = arith.select %114, %115, %112 : vector<2x8x8xi1>, vector<2x8x8xf32>
    %cst_70 = arith.constant dense<0xFF800000> : vector<2x8xf32>
    %117 = vector.multi_reduction <maximumf>, %116, %cst_70 [2] : vector<2x8x8xf32> to vector<2x8xf32>
    %118 = vector.shape_cast %117 : vector<2x8xf32> to vector<2x8x1xf32>
    %119 = vector.broadcast %118 : vector<2x8x1xf32> to vector<2x8x8xf32>
    %120 = arith.subf %116, %119 : vector<2x8x8xf32>
    %121 = math.exp %120 : vector<2x8x8xf32>
    %cst_71 = arith.constant dense<0.000000e+00> : vector<2x8xf32>
    %122 = vector.multi_reduction <add>, %121, %cst_71 [2] : vector<2x8x8xf32> to vector<2x8xf32>
    %123 = vector.shape_cast %122 : vector<2x8xf32> to vector<2x8x1xf32>
    %124 = arith.truncf %121 : vector<2x8x8xf32> to vector<2x8x8xbf16>
    "tpu.trace_start"() <{level = 10 : i32, message = "bqk,bkd->bqd"}> : () -> ()
    %cst_72 = arith.constant dense<0.000000e+00> : vector<2x8x8xf32>
    %125 = tpu.matmul %124, %111, %cst_72 {dimension_numbers = #tpu.dot_dimension_numbers<[2], [1], [1], [2], [0, 0, 0, 1, 1, 2], [0], [0]>} : vector<2x8x8xbf16>, vector<2x8x8xbf16>, vector<2x8x8xf32> -> vector<2x8x8xf32>
    "tpu.trace_stop"() : () -> ()
    %126 = tpu.reciprocal %123 {approx = true} : vector<2x8x1xf32> -> vector<2x8x1xf32>
    %127 = vector.broadcast %126 : vector<2x8x1xf32> to vector<2x8x8xf32>
    %128 = arith.mulf %125, %127 : vector<2x8x8xf32>
    %129 = vector.extract_strided_slice %106 {offsets = [0, 0, 8], sizes = [2, 8, 8], strides = [1, 1, 1]} : vector<2x8x16xbf16> to vector<2x8x8xbf16>
    %130 = vector.extract_strided_slice %107 {offsets = [0, 0, 8], sizes = [2, 8, 8], strides = [1, 1, 1]} : vector<2x8x16xbf16> to vector<2x8x8xbf16>
    %131 = vector.extract_strided_slice %108 {offsets = [0, 0, 8], sizes = [2, 8, 8], strides = [1, 1, 1]} : vector<2x8x16xbf16> to vector<2x8x8xbf16>
    "tpu.trace_start"() <{level = 10 : i32, message = "bqd,bkd->bqk"}> : () -> ()
    %cst_73 = arith.constant dense<0.000000e+00> : vector<2x8x8xf32>
    %132 = tpu.matmul %129, %130, %cst_73 {dimension_numbers = #tpu.dot_dimension_numbers<[2], [2], [1], [1], [0, 0, 0, 1, 1, 1], [0], [0]>} : vector<2x8x8xbf16>, vector<2x8x8xbf16>, vector<2x8x8xf32> -> vector<2x8x8xf32>
    %cst_74 = arith.constant -1.000000e+30 : f32
    "tpu.trace_stop"() : () -> ()
    %133 = vector.shape_cast %100 : vector<1x8x8xi1> to vector<1x8x8xi1>
    %134 = vector.broadcast %133 : vector<1x8x8xi1> to vector<2x8x8xi1>
    %135 = vector.broadcast %cst_74 : f32 to vector<2x8x8xf32>
    %136 = arith.select %134, %135, %132 : vector<2x8x8xi1>, vector<2x8x8xf32>
    %cst_75 = arith.constant dense<0xFF800000> : vector<2x8xf32>
    %137 = vector.multi_reduction <maximumf>, %136, %cst_75 [2] : vector<2x8x8xf32> to vector<2x8xf32>
    %138 = vector.shape_cast %137 : vector<2x8xf32> to vector<2x8x1xf32>
    %139 = vector.broadcast %138 : vector<2x8x1xf32> to vector<2x8x8xf32>
    %140 = arith.subf %136, %139 : vector<2x8x8xf32>
    %141 = math.exp %140 : vector<2x8x8xf32>
    %cst_76 = arith.constant dense<0.000000e+00> : vector<2x8xf32>
    %142 = vector.multi_reduction <add>, %141, %cst_76 [2] : vector<2x8x8xf32> to vector<2x8xf32>
    %143 = vector.shape_cast %142 : vector<2x8xf32> to vector<2x8x1xf32>
    %144 = arith.truncf %141 : vector<2x8x8xf32> to vector<2x8x8xbf16>
    "tpu.trace_start"() <{level = 10 : i32, message = "bqk,bkd->bqd"}> : () -> ()
    %cst_77 = arith.constant dense<0.000000e+00> : vector<2x8x8xf32>
    %145 = tpu.matmul %144, %131, %cst_77 {dimension_numbers = #tpu.dot_dimension_numbers<[2], [1], [1], [2], [0, 0, 0, 1, 1, 2], [0], [0]>} : vector<2x8x8xbf16>, vector<2x8x8xbf16>, vector<2x8x8xf32> -> vector<2x8x8xf32>
    "tpu.trace_stop"() : () -> ()
    %146 = tpu.reciprocal %143 {approx = true} : vector<2x8x1xf32> -> vector<2x8x1xf32>
    %147 = vector.broadcast %146 : vector<2x8x1xf32> to vector<2x8x8xf32>
    %148 = arith.mulf %145, %147 : vector<2x8x8xf32>
    %149 = tpu.concatenate %128, %148 in 2 : vector<2x8x8xf32>, vector<2x8x8xf32> -> vector<2x8x16xf32>
    %150 = vector.shape_cast %149 : vector<2x8x16xf32> to vector<16x16xf32>
    %151 = arith.truncf %150 : vector<16x16xf32> to vector<16x16xbf16>
    %c16_i32 = arith.constant 16 : i32
    %152 = arith.muli %c0_i32, %c16_i32 : i32
    %153 = tpu.assume_multiple %152, 16 : i32
    %154 = arith.index_cast %153 : i32 to index
    %c0_78 = arith.constant 0 : index
    %155 = vector.load %arg6[%154, %c0_78] : memref<32x32xbf16, #tpu.memory_space<vmem>>, vector<16x32xbf16>
    %c0_79 = arith.constant 0 : index
    %c0_80 = arith.constant 0 : index
    %156 = vector.load %arg16[%c0_79, %c0_80] : memref<16x32xf32, #tpu.memory_space<vmem>>, vector<16x32xf32>
    %cst_81 = arith.constant dense<0.000000e+00> : vector<16x32xf32>
    %157 = tpu.matmul %151, %155, %cst_81 {dimension_numbers = #tpu.dot_dimension_numbers<[1], [0], [0], [1], [0, 0, 1, 1], [], []>} : vector<16x16xbf16>, vector<16x32xbf16>, vector<16x32xf32> -> vector<16x32xf32>
    %158 = arith.addf %156, %157 : vector<16x32xf32>
    %c0_82 = arith.constant 0 : index
    %c0_83 = arith.constant 0 : index
    %159 = vector.load %arg16[%c0_82, %c0_83] : memref<16x32xf32, #tpu.memory_space<vmem>>, vector<16x32xf32>
    tpu.vector_store %arg16[%c0_82, %c0_83], %158 {strides = array<i32>} : memref<16x32xf32, #tpu.memory_space<vmem>>, vector<16x32xf32>,
    %c1_i32 = arith.constant 1 : i32
    %160 = arith.index_cast %c1_i32 : i32 to index
    %c0_84 = arith.constant 0 : index
    %c0_85 = arith.constant 0 : index
    %c0_86 = arith.constant 0 : index
    %161 = vector.load %arg15[%160, %c0_84, %c0_85, %c0_86] : memref<2x2x8x48xbf16, #tpu.memory_space<vmem>>, vector<1x2x8x48xbf16>
    %162 = vector.shape_cast %161 : vector<1x2x8x48xbf16> to vector<2x8x48xbf16>
    %163 = vector.extract_strided_slice %162 {offsets = [0, 0, 0], sizes = [2, 8, 16], strides = [1, 1, 1]} : vector<2x8x48xbf16> to vector<2x8x16xbf16>
    %164 = vector.extract_strided_slice %162 {offsets = [0, 0, 16], sizes = [2, 8, 16], strides = [1, 1, 1]} : vector<2x8x48xbf16> to vector<2x8x16xbf16>
    %165 = vector.extract_strided_slice %162 {offsets = [0, 0, 32], sizes = [2, 8, 16], strides = [1, 1, 1]} : vector<2x8x48xbf16> to vector<2x8x16xbf16>
    %166 = vector.extract_strided_slice %163 {offsets = [0, 0, 0], sizes = [2, 8, 8], strides = [1, 1, 1]} : vector<2x8x16xbf16> to vector<2x8x8xbf16>
    %167 = vector.extract_strided_slice %164 {offsets = [0, 0, 0], sizes = [2, 8, 8], strides = [1, 1, 1]} : vector<2x8x16xbf16> to vector<2x8x8xbf16>
    %168 = vector.extract_strided_slice %165 {offsets = [0, 0, 0], sizes = [2, 8, 8], strides = [1, 1, 1]} : vector<2x8x16xbf16> to vector<2x8x8xbf16>
    "tpu.trace_start"() <{level = 10 : i32, message = "bqd,bkd->bqk"}> : () -> ()
    %cst_87 = arith.constant dense<0.000000e+00> : vector<2x8x8xf32>
    %169 = tpu.matmul %166, %167, %cst_87 {dimension_numbers = #tpu.dot_dimension_numbers<[2], [2], [1], [1], [0, 0, 0, 1, 1, 1], [0], [0]>} : vector<2x8x8xbf16>, vector<2x8x8xbf16>, vector<2x8x8xf32> -> vector<2x8x8xf32>
    %cst_88 = arith.constant -1.000000e+30 : f32
    "tpu.trace_stop"() : () -> ()
    %170 = vector.shape_cast %100 : vector<1x8x8xi1> to vector<1x8x8xi1>
    %171 = vector.broadcast %170 : vector<1x8x8xi1> to vector<2x8x8xi1>
    %172 = vector.broadcast %cst_88 : f32 to vector<2x8x8xf32>
    %173 = arith.select %171, %172, %169 : vector<2x8x8xi1>, vector<2x8x8xf32>
    %cst_89 = arith.constant dense<0xFF800000> : vector<2x8xf32>
    %174 = vector.multi_reduction <maximumf>, %173, %cst_89 [2] : vector<2x8x8xf32> to vector<2x8xf32>
    %175 = vector.shape_cast %174 : vector<2x8xf32> to vector<2x8x1xf32>
    %176 = vector.broadcast %175 : vector<2x8x1xf32> to vector<2x8x8xf32>
    %177 = arith.subf %173, %176 : vector<2x8x8xf32>
    %178 = math.exp %177 : vector<2x8x8xf32>
    %cst_90 = arith.constant dense<0.000000e+00> : vector<2x8xf32>
    %179 = vector.multi_reduction <add>, %178, %cst_90 [2] : vector<2x8x8xf32> to vector<2x8xf32>
    %180 = vector.shape_cast %179 : vector<2x8xf32> to vector<2x8x1xf32>
    %181 = arith.truncf %178 : vector<2x8x8xf32> to vector<2x8x8xbf16>
    "tpu.trace_start"() <{level = 10 : i32, message = "bqk,bkd->bqd"}> : () -> ()
    %cst_91 = arith.constant dense<0.000000e+00> : vector<2x8x8xf32>
    %182 = tpu.matmul %181, %168, %cst_91 {dimension_numbers = #tpu.dot_dimension_numbers<[2], [1], [1], [2], [0, 0, 0, 1, 1, 2], [0], [0]>} : vector<2x8x8xbf16>, vector<2x8x8xbf16>, vector<2x8x8xf32> -> vector<2x8x8xf32>
    "tpu.trace_stop"() : () -> ()
    %183 = tpu.reciprocal %180 {approx = true} : vector<2x8x1xf32> -> vector<2x8x1xf32>
    %184 = vector.broadcast %183 : vector<2x8x1xf32> to vector<2x8x8xf32>
    %185 = arith.mulf %182, %184 : vector<2x8x8xf32>
    %186 = vector.extract_strided_slice %163 {offsets = [0, 0, 8], sizes = [2, 8, 8], strides = [1, 1, 1]} : vector<2x8x16xbf16> to vector<2x8x8xbf16>
    %187 = vector.extract_strided_slice %164 {offsets = [0, 0, 8], sizes = [2, 8, 8], strides = [1, 1, 1]} : vector<2x8x16xbf16> to vector<2x8x8xbf16>
    %188 = vector.extract_strided_slice %165 {offsets = [0, 0, 8], sizes = [2, 8, 8], strides = [1, 1, 1]} : vector<2x8x16xbf16> to vector<2x8x8xbf16>
    "tpu.trace_start"() <{level = 10 : i32, message = "bqd,bkd->bqk"}> : () -> ()
    %cst_92 = arith.constant dense<0.000000e+00> : vector<2x8x8xf32>
    %189 = tpu.matmul %186, %187, %cst_92 {dimension_numbers = #tpu.dot_dimension_numbers<[2], [2], [1], [1], [0, 0, 0, 1, 1, 1], [0], [0]>} : vector<2x8x8xbf16>, vector<2x8x8xbf16>, vector<2x8x8xf32> -> vector<2x8x8xf32>
    %cst_93 = arith.constant -1.000000e+30 : f32
    "tpu.trace_stop"() : () -> ()
    %190 = vector.shape_cast %100 : vector<1x8x8xi1> to vector<1x8x8xi1>
    %191 = vector.broadcast %190 : vector<1x8x8xi1> to vector<2x8x8xi1>
    %192 = vector.broadcast %cst_93 : f32 to vector<2x8x8xf32>
    %193 = arith.select %191, %192, %189 : vector<2x8x8xi1>, vector<2x8x8xf32>
    %cst_94 = arith.constant dense<0xFF800000> : vector<2x8xf32>
    %194 = vector.multi_reduction <maximumf>, %193, %cst_94 [2] : vector<2x8x8xf32> to vector<2x8xf32>
    %195 = vector.shape_cast %194 : vector<2x8xf32> to vector<2x8x1xf32>
    %196 = vector.broadcast %195 : vector<2x8x1xf32> to vector<2x8x8xf32>
    %197 = arith.subf %193, %196 : vector<2x8x8xf32>
    %198 = math.exp %197 : vector<2x8x8xf32>
    %cst_95 = arith.constant dense<0.000000e+00> : vector<2x8xf32>
    %199 = vector.multi_reduction <add>, %198, %cst_95 [2] : vector<2x8x8xf32> to vector<2x8xf32>
    %200 = vector.shape_cast %199 : vector<2x8xf32> to vector<2x8x1xf32>
    %201 = arith.truncf %198 : vector<2x8x8xf32> to vector<2x8x8xbf16>
    "tpu.trace_start"() <{level = 10 : i32, message = "bqk,bkd->bqd"}> : () -> ()
    %cst_96 = arith.constant dense<0.000000e+00> : vector<2x8x8xf32>
    %202 = tpu.matmul %201, %188, %cst_96 {dimension_numbers = #tpu.dot_dimension_numbers<[2], [1], [1], [2], [0, 0, 0, 1, 1, 2], [0], [0]>} : vector<2x8x8xbf16>, vector<2x8x8xbf16>, vector<2x8x8xf32> -> vector<2x8x8xf32>
    "tpu.trace_stop"() : () -> ()
    %203 = tpu.reciprocal %200 {approx = true} : vector<2x8x1xf32> -> vector<2x8x1xf32>
    %204 = vector.broadcast %203 : vector<2x8x1xf32> to vector<2x8x8xf32>
    %205 = arith.mulf %202, %204 : vector<2x8x8xf32>
    %206 = tpu.concatenate %185, %205 in 2 : vector<2x8x8xf32>, vector<2x8x8xf32> -> vector<2x8x16xf32>
    %207 = vector.shape_cast %206 : vector<2x8x16xf32> to vector<16x16xf32>
    %208 = arith.truncf %207 : vector<16x16xf32> to vector<16x16xbf16>
    %c16_i32_97 = arith.constant 16 : i32
    %209 = arith.muli %c1_i32, %c16_i32_97 : i32
    %210 = tpu.assume_multiple %209, 16 : i32
    %211 = arith.index_cast %210 : i32 to index
    %c0_98 = arith.constant 0 : index
    %212 = vector.load %arg6[%211, %c0_98] : memref<32x32xbf16, #tpu.memory_space<vmem>>, vector<16x32xbf16>
    %c0_99 = arith.constant 0 : index
    %c0_100 = arith.constant 0 : index
    %213 = vector.load %arg16[%c0_99, %c0_100] : memref<16x32xf32, #tpu.memory_space<vmem>>, vector<16x32xf32>
    %cst_101 = arith.constant dense<0.000000e+00> : vector<16x32xf32>
    %214 = tpu.matmul %208, %212, %cst_101 {dimension_numbers = #tpu.dot_dimension_numbers<[1], [0], [0], [1], [0, 0, 1, 1], [], []>} : vector<16x16xbf16>, vector<16x32xbf16>, vector<16x32xf32> -> vector<16x32xf32>
    %215 = arith.addf %213, %214 : vector<16x32xf32>
    %c0_102 = arith.constant 0 : index
    %c0_103 = arith.constant 0 : index
    %216 = vector.load %arg16[%c0_102, %c0_103] : memref<16x32xf32, #tpu.memory_space<vmem>>, vector<16x32xf32>
    tpu.vector_store %arg16[%c0_102, %c0_103], %215 {strides = array<i32>} : memref<16x32xf32, #tpu.memory_space<vmem>>, vector<16x32xf32>,
    %c2_i32 = arith.constant 2 : i32
    %c0_104 = arith.constant 0 : index
    %c0_105 = arith.constant 0 : index
    %217 = vector.load %arg16[%c0_104, %c0_105] : memref<16x32xf32, #tpu.memory_space<vmem>>, vector<16x32xf32>
    %c0_106 = arith.constant 0 : index
    %c0_107 = arith.constant 0 : index
    %218 = vector.load %arg7[%c0_106, %c0_107] : memref<1x32xf32, #tpu.memory_space<vmem>>, vector<1x32xf32>
    %219 = vector.broadcast %218 : vector<1x32xf32> to vector<16x32xf32>
    %220 = arith.addf %217, %219 : vector<16x32xf32>
    %221 = arith.addf %220, %1 : vector<16x32xf32>
    %c0_108 = arith.constant 0 : index
    %c0_109 = arith.constant 0 : index
    %222 = vector.load %arg8[%c0_108, %c0_109] : memref<1x32xf32, #tpu.memory_space<vmem>>, vector<1x32xf32>
    %c0_110 = arith.constant 0 : index
    %c0_111 = arith.constant 0 : index
    %223 = vector.load %arg9[%c0_110, %c0_111] : memref<1x32xf32, #tpu.memory_space<vmem>>, vector<1x32xf32>
    %cst_112 = arith.constant dense<0.000000e+00> : vector<16xf32>
    %224 = vector.multi_reduction <add>, %221, %cst_112 [1] : vector<16x32xf32> to vector<16xf32>
    %225 = vector.shape_cast %224 : vector<16xf32> to vector<16x1xf32>
    %cst_113 = arith.constant 3.200000e+01 : f32
    %226 = vector.broadcast %cst_113 : f32 to vector<16x1xf32>
    %227 = arith.divf %225, %226 : vector<16x1xf32>
    %228 = vector.broadcast %227 : vector<16x1xf32> to vector<16x32xf32>
    %229 = arith.subf %221, %228 : vector<16x32xf32>
    %230 = arith.mulf %229, %229 : vector<16x32xf32>
    %cst_114 = arith.constant dense<0.000000e+00> : vector<16xf32>
    %231 = vector.multi_reduction <add>, %230, %cst_114 [1] : vector<16x32xf32> to vector<16xf32>
    %232 = vector.shape_cast %231 : vector<16xf32> to vector<16x1xf32>
    %cst_115 = arith.constant 3.200000e+01 : f32
    %233 = vector.broadcast %cst_115 : f32 to vector<16x1xf32>
    %234 = arith.divf %232, %233 : vector<16x1xf32>
    %235 = vector.broadcast %227 : vector<16x1xf32> to vector<16x32xf32>
    %236 = arith.subf %221, %235 : vector<16x32xf32>
    %cst_116 = arith.constant 9.99999974E-6 : f32
    %237 = vector.broadcast %cst_116 : f32 to vector<16x1xf32>
    %238 = arith.addf %234, %237 : vector<16x1xf32>
    %239 = math.rsqrt %238 : vector<16x1xf32>
    %240 = vector.broadcast %239 : vector<16x1xf32> to vector<16x32xf32>
    %241 = arith.mulf %236, %240 : vector<16x32xf32>
    %242 = vector.broadcast %222 : vector<1x32xf32> to vector<16x32xf32>
    %243 = arith.mulf %241, %242 : vector<16x32xf32>
    %244 = vector.broadcast %223 : vector<1x32xf32> to vector<16x32xf32>
    %245 = arith.addf %243, %244 : vector<16x32xf32>
    %246 = arith.truncf %245 : vector<16x32xf32> to vector<16x32xbf16>
    %c0_117 = arith.constant 0 : index
    %c0_118 = arith.constant 0 : index
    %247 = vector.load %arg10[%c0_117, %c0_118] : memref<32x128xbf16, #tpu.memory_space<vmem>>, vector<32x128xbf16>
    %cst_119 = arith.constant dense<0.000000e+00> : vector<16x128xf32>
    %248 = tpu.matmul %246, %247, %cst_119 {dimension_numbers = #tpu.dot_dimension_numbers<[1], [0], [0], [1], [0, 0, 1, 1], [], []>} : vector<16x32xbf16>, vector<32x128xbf16>, vector<16x128xf32> -> vector<16x128xf32>
    %c0_120 = arith.constant 0 : index
    %c0_121 = arith.constant 0 : index
    %249 = vector.load %arg11[%c0_120, %c0_121] : memref<1x128xf32, #tpu.memory_space<vmem>>, vector<1x128xf32>
    %250 = vector.broadcast %249 : vector<1x128xf32> to vector<16x128xf32>
    %251 = arith.addf %248, %250 : vector<16x128xf32>
    %252 = arith.truncf %251 : vector<16x128xf32> to vector<16x128xbf16>
    %cst_122 = arith.constant 1.703130e+00 : bf16
    %253 = vector.broadcast %cst_122 : bf16 to vector<16x128xbf16>
    %254 = arith.mulf %253, %252 : vector<16x128xbf16>
    %255 = arith.negf %254 : vector<16x128xbf16>
    %256 = math.exp %255 : vector<16x128xbf16>
    %cst_123 = arith.constant 1.000000e+00 : bf16
    %257 = vector.broadcast %cst_123 : bf16 to vector<16x128xbf16>
    %258 = arith.addf %257, %256 : vector<16x128xbf16>
    %259 = arith.divf %257, %258 : vector<16x128xbf16>
    %260 = arith.mulf %252, %259 : vector<16x128xbf16>
    %c0_124 = arith.constant 0 : index
    %c0_125 = arith.constant 0 : index
    %261 = vector.load %arg12[%c0_124, %c0_125] : memref<128x32xbf16, #tpu.memory_space<vmem>>, vector<128x32xbf16>
    %cst_126 = arith.constant dense<0.000000e+00> : vector<16x32xf32>
    %262 = tpu.matmul %260, %261, %cst_126 {dimension_numbers = #tpu.dot_dimension_numbers<[1], [0], [0], [1], [0, 0, 1, 1], [], []>} : vector<16x128xbf16>, vector<128x32xbf16>, vector<16x32xf32> -> vector<16x32xf32>
    %c0_127 = arith.constant 0 : index
    %c0_128 = arith.constant 0 : index
    %263 = vector.load %arg13[%c0_127, %c0_128] : memref<1x32xf32, #tpu.memory_space<vmem>>, vector<1x32xf32>
    %264 = vector.broadcast %263 : vector<1x32xf32> to vector<16x32xf32>
    %265 = arith.addf %262, %264 : vector<16x32xf32>
    %266 = arith.addf %265, %221 : vector<16x32xf32>
    %267 = vector.shape_cast %266 : vector<16x32xf32> to vector<2x8x32xf32>
    %c0_129 = arith.constant 0 : index
    %c0_130 = arith.constant 0 : index
    %c0_131 = arith.constant 0 : index
    %268 = vector.load %arg14[%c0_129, %c0_130, %c0_131] : memref<2x8x32xf32, #tpu.memory_space<vmem>>, vector<2x8x32xf32>
    tpu.vector_store %arg14[%c0_129, %c0_130, %c0_131], %267 {strides = array<i32>} : memref<2x8x32xf32, #tpu.memory_space<vmem>>, vector<2x8x32xf32>,
    return
  }
  func.func @transform_0(%arg0: i32) -> (i32, i32, i32) {
    %c0_i32 = arith.constant 0 : i32
    %c0_i32_0 = arith.constant 0 : i32
    %c0_i32_1 = arith.constant 0 : i32
    return %arg0, %c0_i32, %c0_i32_0 : i32, i32, i32
  }
  func.func @transform_1(%arg0: i32) -> (i32, i32) {
    %c0_i32 = arith.constant 0 : i32
    %c0_i32_0 = arith.constant 0 : i32
    %c0_i32_1 = arith.constant 0 : i32
    return %c0_i32, %c0_i32_0 : i32, i32
  }
  func.func @transform_2(%arg0: i32) -> (i32, i32) {
    %c0_i32 = arith.constant 0 : i32
    %c0_i32_0 = arith.constant 0 : i32
    %c0_i32_1 = arith.constant 0 : i32
    return %c0_i32, %c0_i32_0 : i32, i32
  }
  func.func @transform_3(%arg0: i32) -> (i32, i32) {
    %c0_i32 = arith.constant 0 : i32
    %c0_i32_0 = arith.constant 0 : i32
    %c0_i32_1 = arith.constant 0 : i32
    return %c0_i32, %c0_i32_0 : i32, i32
  }
  func.func @transform_4(%arg0: i32) -> (i32, i32) {
    %c0_i32 = arith.constant 0 : i32
    %c0_i32_0 = arith.constant 0 : i32
    %c0_i32_1 = arith.constant 0 : i32
    return %c0_i32, %c0_i32_0 : i32, i32
  }
  func.func @transform_5(%arg0: i32) -> (i32, i32) {
    %c0_i32 = arith.constant 0 : i32
    %c0_i32_0 = arith.constant 0 : i32
    %c0_i32_1 = arith.constant 0 : i32
    return %c0_i32, %c0_i32_0 : i32, i32
  }
  func.func @transform_6(%arg0: i32) -> (i32, i32) {
    %c0_i32 = arith.constant 0 : i32
    %c0_i32_0 = arith.constant 0 : i32
    %c0_i32_1 = arith.constant 0 : i32
    return %c0_i32, %c0_i32_0 : i32, i32
  }
  func.func @transform_7(%arg0: i32) -> (i32, i32) {
    %c0_i32 = arith.constant 0 : i32
    %c0_i32_0 = arith.constant 0 : i32
    %c0_i32_1 = arith.constant 0 : i32
    return %c0_i32, %c0_i32_0 : i32, i32
  }
  func.func @transform_8(%arg0: i32) -> (i32, i32) {
    %c0_i32 = arith.constant 0 : i32
    %c0_i32_0 = arith.constant 0 : i32
    %c0_i32_1 = arith.constant 0 : i32
    return %c0_i32, %c0_i32_0 : i32, i32
  }
  func.func @transform_9(%arg0: i32) -> (i32, i32) {
    %c0_i32 = arith.constant 0 : i32
    %c0_i32_0 = arith.constant 0 : i32
    %c0_i32_1 = arith.constant 0 : i32
    return %c0_i32, %c0_i32_0 : i32, i32
  }
  func.func @transform_10(%arg0: i32) -> (i32, i32) {
    %c0_i32 = arith.constant 0 : i32
    %c0_i32_0 = arith.constant 0 : i32
    %c0_i32_1 = arith.constant 0 : i32
    return %c0_i32, %c0_i32_0 : i32, i32
  }
  func.func @transform_11(%arg0: i32) -> (i32, i32) {
    %c0_i32 = arith.constant 0 : i32
    %c0_i32_0 = arith.constant 0 : i32
    %c0_i32_1 = arith.constant 0 : i32
    return %c0_i32, %c0_i32_0 : i32, i32
  }
  func.func @transform_12(%arg0: i32) -> (i32, i32) {
    %c0_i32 = arith.constant 0 : i32
    %c0_i32_0 = arith.constant 0 : i32
    %c0_i32_1 = arith.constant 0 : i32
    return %c0_i32, %c0_i32_0 : i32, i32
  }
  func.func @transform_13(%arg0: i32) -> (i32, i32, i32) {
    %c0_i32 = arith.constant 0 : i32
    %c0_i32_0 = arith.constant 0 : i32
    %c0_i32_1 = arith.constant 0 : i32
    return %arg0, %c0_i32, %c0_i32_0 : i32, i32, i32
  }
}

module attributes {stable_mosaic.version = 11 : i64} {
  func.func @clip_layer_kernel(%arg0: i32, %arg1: memref<2x8x32xf32, #tpu.memory_space<vmem>>, %arg2: memref<1x32xf32, #tpu.memory_space<vmem>>, %arg3: memref<1x32xf32, #tpu.memory_space<vmem>>, %arg4: memref<32x96xbf16, #tpu.memory_space<vmem>>, %arg5: memref<1x96xf32, #tpu.memory_space<vmem>>, %arg6: memref<32x32xbf16, #tpu.memory_space<vmem>>, %arg7: memref<1x32xf32, #tpu.memory_space<vmem>>, %arg8: memref<1x32xf32, #tpu.memory_space<vmem>>, %arg9: memref<1x32xf32, #tpu.memory_space<vmem>>, %arg10: memref<32x128xbf16, #tpu.memory_space<vmem>>, %arg11: memref<1x128xf32, #tpu.memory_space<vmem>>, %arg12: memref<128x32xbf16, #tpu.memory_space<vmem>>, %arg13: memref<1x32xf32, #tpu.memory_space<vmem>>, %arg14: memref<2x8x32xf32, #tpu.memory_space<vmem>>, %arg15: memref<2x2x8x48xbf16, #tpu.memory_space<vmem>>, %arg16: memref<16x32xf32, #tpu.memory_space<vmem>>) attributes {dimension_semantics = [#tpu.dimension_semantics<parallel>], iteration_bounds = array<i64: 1>, scalar_prefetch = 0 : i64, scratch_operands = 2 : i64, tpu.core_type = #tpu.core_type<tc>, window_params = [{transform_indices = @transform_0, window_bounds = array<i64: 2, 8, 32>}, {pipeline_mode = #tpu.pipeline_mode<synchronous>, transform_indices = @transform_1, window_bounds = array<i64: 1, 32>}, {pipeline_mode = #tpu.pipeline_mode<synchronous>, transform_indices = @transform_2, window_bounds = array<i64: 1, 32>}, {pipeline_mode = #tpu.pipeline_mode<synchronous>, transform_indices = @transform_3, window_bounds = array<i64: 32, 96>}, {pipeline_mode = #tpu.pipeline_mode<synchronous>, transform_indices = @transform_4, window_bounds = array<i64: 1, 96>}, {pipeline_mode = #tpu.pipeline_mode<synchronous>, transform_indices = @transform_5, window_bounds = array<i64: 32, 32>}, {pipeline_mode = #tpu.pipeline_mode<synchronous>, transform_indices = @transform_6, window_bounds = array<i64: 1, 32>}, {pipeline_mode = #tpu.pipeline_mode<synchronous>, transform_indices = @transform_7, window_bounds = array<i64: 1, 32>}, {pipeline_mode = #tpu.pipeline_mode<synchronous>, transform_indices = @transform_8, window_bounds = array<i64: 1, 32>}, {pipeline_mode = #tpu.pipeline_mode<synchronous>, transform_indices = @transform_9, window_bounds = array<i64: 32, 128>}, {pipeline_mode = #tpu.pipeline_mode<synchronous>, transform_indices = @transform_10, window_bounds = array<i64: 1, 128>}, {pipeline_mode = #tpu.pipeline_mode<synchronous>, transform_indices = @transform_11, window_bounds = array<i64: 128, 32>}, {pipeline_mode = #tpu.pipeline_mode<synchronous>, transform_indices = @transform_12, window_bounds = array<i64: 1, 32>}, {transform_indices = @transform_13, window_bounds = array<i64: 2, 8, 32>}]} {
    %c0 = arith.constant 0 : index
    %c0_0 = arith.constant 0 : index
    %c0_1 = arith.constant 0 : index
    %0 = vector.load %arg1[%c0, %c0_0, %c0_1] : memref<2x8x32xf32, #tpu.memory_space<vmem>>, vector<2x8x32xf32>
    %1 = vector.shape_cast %0 : vector<2x8x32xf32> to vector<16x32xf32>
    %c0_2 = arith.constant 0 : index
    %c0_3 = arith.constant 0 : index
    %2 = vector.load %arg2[%c0_2, %c0_3] : memref<1x32xf32, #tpu.memory_space<vmem>>, vector<1x32xf32>
    %c0_4 = arith.constant 0 : index
    %c0_5 = arith.constant 0 : index
    %3 = vector.load %arg3[%c0_4, %c0_5] : memref<1x32xf32, #tpu.memory_space<vmem>>, vector<1x32xf32>
    %cst = arith.constant dense<0.000000e+00> : vector<16xf32>
    %4 = vector.multi_reduction <add>, %1, %cst [1] : vector<16x32xf32> to vector<16xf32>
    %5 = vector.shape_cast %4 : vector<16xf32> to vector<16x1xf32>
    %cst_6 = arith.constant 3.200000e+01 : f32
    %6 = vector.broadcast %cst_6 : f32 to vector<16x1xf32>
    %7 = arith.divf %5, %6 : vector<16x1xf32>
    %8 = vector.broadcast %7 : vector<16x1xf32> to vector<16x32xf32>
    %9 = arith.subf %1, %8 : vector<16x32xf32>
    %10 = arith.mulf %9, %9 : vector<16x32xf32>
    %cst_7 = arith.constant dense<0.000000e+00> : vector<16xf32>
    %11 = vector.multi_reduction <add>, %10, %cst_7 [1] : vector<16x32xf32> to vector<16xf32>
    %12 = vector.shape_cast %11 : vector<16xf32> to vector<16x1xf32>
    %cst_8 = arith.constant 3.200000e+01 : f32
    %13 = vector.broadcast %cst_8 : f32 to vector<16x1xf32>
    %14 = arith.divf %12, %13 : vector<16x1xf32>
    %15 = vector.broadcast %7 : vector<16x1xf32> to vector<16x32xf32>
    %16 = arith.subf %1, %15 : vector<16x32xf32>
    %cst_9 = arith.constant 9.99999974E-6 : f32
    %17 = vector.broadcast %cst_9 : f32 to vector<16x1xf32>
    %18 = arith.addf %14, %17 : vector<16x1xf32>
    %19 = math.rsqrt %18 : vector<16x1xf32>
    %20 = vector.broadcast %19 : vector<16x1xf32> to vector<16x32xf32>
    %21 = arith.mulf %16, %20 : vector<16x32xf32>
    %22 = vector.broadcast %2 : vector<1x32xf32> to vector<16x32xf32>
    %23 = arith.mulf %21, %22 : vector<16x32xf32>
    %24 = vector.broadcast %3 : vector<1x32xf32> to vector<16x32xf32>
    %25 = arith.addf %23, %24 : vector<16x32xf32>
    %26 = arith.truncf %25 : vector<16x32xf32> to vector<16x32xbf16>
    %c0_10 = arith.constant 0 : index
    %c0_11 = arith.constant 0 : index
    %27 = vector.load %arg4[%c0_10, %c0_11] : memref<32x96xbf16, #tpu.memory_space<vmem>>, vector<32x96xbf16>
    %cst_12 = arith.constant dense<0.000000e+00> : vector<16x96xf32>
    %28 = tpu.matmul %26, %27, %cst_12 {dimension_numbers = #tpu.dot_dimension_numbers<[1], [0], [0], [1], [0, 0, 1, 1], [], []>} : vector<16x32xbf16>, vector<32x96xbf16>, vector<16x96xf32> -> vector<16x96xf32>
    %c0_13 = arith.constant 0 : index
    %c0_14 = arith.constant 0 : index
    %29 = vector.load %arg5[%c0_13, %c0_14] : memref<1x96xf32, #tpu.memory_space<vmem>>, vector<1x96xf32>
    %30 = vector.broadcast %29 : vector<1x96xf32> to vector<16x96xf32>
    %31 = arith.addf %28, %30 : vector<16x96xf32>
    %32 = vector.extract_strided_slice %31 {offsets = [0, 0], sizes = [16, 32], strides = [1, 1]} : vector<16x96xf32> to vector<16x32xf32>
    %cst_15 = arith.constant 8.000000e+00 : f32
    %33 = math.sqrt %cst_15 : f32
    %cst_16 = arith.constant 1.000000e+00 : f32
    %34 = arith.divf %cst_16, %33 : f32
    %35 = vector.broadcast %34 : f32 to vector<16x32xf32>
    %36 = arith.mulf %32, %35 : vector<16x32xf32>
    %37 = vector.extract_strided_slice %36 {offsets = [0, 0], sizes = [8, 16], strides = [1, 1]} : vector<16x32xf32> to vector<8x16xf32>
    %38 = arith.truncf %37 : vector<8x16xf32> to vector<8x16xbf16>
    %c0_17 = arith.constant 0 : index
    %c0_18 = arith.constant 0 : index
    %c0_19 = arith.constant 0 : index
    %c0_20 = arith.constant 0 : index
    %39 = vector.load %arg15[%c0_17, %c0_18, %c0_19, %c0_20] : memref<2x2x8x48xbf16, #tpu.memory_space<vmem>>, vector<1x1x8x16xbf16>
    %40 = vector.shape_cast %39 : vector<1x1x8x16xbf16> to vector<8x16xbf16>
    %41 = vector.shape_cast %38 : vector<8x16xbf16> to vector<1x1x8x16xbf16>
    tpu.vector_store %arg15[%c0_17, %c0_18, %c0_19, %c0_20], %41 {strides = array<i32>} : memref<2x2x8x48xbf16, #tpu.memory_space<vmem>>, vector<1x1x8x16xbf16>,
    %42 = vector.extract_strided_slice %31 {offsets = [0, 32], sizes = [8, 16], strides = [1, 1]} : vector<16x96xf32> to vector<8x16xf32>
    %43 = arith.truncf %42 : vector<8x16xf32> to vector<8x16xbf16>
    %c0_21 = arith.constant 0 : index
    %c0_22 = arith.constant 0 : index
    %c0_23 = arith.constant 0 : index
    %c16 = arith.constant 16 : index
    %44 = vector.load %arg15[%c0_21, %c0_22, %c0_23, %c16] : memref<2x2x8x48xbf16, #tpu.memory_space<vmem>>, vector<1x1x8x16xbf16>
    %45 = vector.shape_cast %44 : vector<1x1x8x16xbf16> to vector<8x16xbf16>
    %46 = vector.shape_cast %43 : vector<8x16xbf16> to vector<1x1x8x16xbf16>
    tpu.vector_store %arg15[%c0_21, %c0_22, %c0_23, %c16], %46 {strides = array<i32>} : memref<2x2x8x48xbf16, #tpu.memory_space<vmem>>, vector<1x1x8x16xbf16>,
    %47 = vector.extract_strided_slice %31 {offsets = [0, 64], sizes = [8, 16], strides = [1, 1]} : vector<16x96xf32> to vector<8x16xf32>
    %48 = arith.truncf %47 : vector<8x16xf32> to vector<8x16xbf16>
    %c0_24 = arith.constant 0 : index
    %c0_25 = arith.constant 0 : index
    %c0_26 = arith.constant 0 : index
    %c32 = arith.constant 32 : index
    %49 = vector.load %arg15[%c0_24, %c0_25, %c0_26, %c32] : memref<2x2x8x48xbf16, #tpu.memory_space<vmem>>, vector<1x1x8x16xbf16>
    %50 = vector.shape_cast %49 : vector<1x1x8x16xbf16> to vector<8x16xbf16>
    %51 = vector.shape_cast %48 : vector<8x16xbf16> to vector<1x1x8x16xbf16>
    tpu.vector_store %arg15[%c0_24, %c0_25, %c0_26, %c32], %51 {strides = array<i32>} : memref<2x2x8x48xbf16, #tpu.memory_space<vmem>>, vector<1x1x8x16xbf16>,
    %52 = vector.extract_strided_slice %36 {offsets = [8, 0], sizes = [8, 16], strides = [1, 1]} : vector<16x32xf32> to vector<8x16xf32>
    %53 = arith.truncf %52 : vector<8x16xf32> to vector<8x16xbf16>
    %c0_27 = arith.constant 0 : index
    %c1 = arith.constant 1 : index
    %c0_28 = arith.constant 0 : index
    %c0_29 = arith.constant 0 : index
    %54 = vector.load %arg15[%c0_27, %c1, %c0_28, %c0_29] : memref<2x2x8x48xbf16, #tpu.memory_space<vmem>>, vector<1x1x8x16xbf16>
    %55 = vector.shape_cast %54 : vector<1x1x8x16xbf16> to vector<8x16xbf16>
    %56 = vector.shape_cast %53 : vector<8x16xbf16> to vector<1x1x8x16xbf16>
    tpu.vector_store %arg15[%c0_27, %c1, %c0_28, %c0_29], %56 {strides = array<i32>} : memref<2x2x8x48xbf16, #tpu.memory_space<vmem>>, vector<1x1x8x16xbf16>,
    %57 = vector.extract_strided_slice %31 {offsets = [8, 32], sizes = [8, 16], strides = [1, 1]} : vector<16x96xf32> to vector<8x16xf32>
    %58 = arith.truncf %57 : vector<8x16xf32> to vector<8x16xbf16>
    %c0_30 = arith.constant 0 : index
    %c1_31 = arith.constant 1 : index
    %c0_32 = arith.constant 0 : index
    %c16_33 = arith.constant 16 : index
    %59 = vector.load %arg15[%c0_30, %c1_31, %c0_32, %c16_33] : memref<2x2x8x48xbf16, #tpu.memory_space<vmem>>, vector<1x1x8x16xbf16>
    %60 = vector.shape_cast %59 : vector<1x1x8x16xbf16> to vector<8x16xbf16>
    %61 = vector.shape_cast %58 : vector<8x16xbf16> to vector<1x1x8x16xbf16>
    tpu.vector_store %arg15[%c0_30, %c1_31, %c0_32, %c16_33], %61 {strides = array<i32>} : memref<2x2x8x48xbf16, #tpu.memory_space<vmem>>, vector<1x1x8x16xbf16>,
    %62 = vector.extract_strided_slice %31 {offsets = [8, 64], sizes = [8, 16], strides = [1, 1]} : vector<16x96xf32> to vector<8x16xf32>
    %63 = arith.truncf %62 : vector<8x16xf32> to vector<8x16xbf16>
    %c0_34 = arith.constant 0 : index
    %c1_35 = arith.constant 1 : index
    %c0_36 = arith.constant 0 : index
    %c32_37 = arith.constant 32 : index
    %64 = vector.load %arg15[%c0_34, %c1_35, %c0_36, %c32_37] : memref<2x2x8x48xbf16, #tpu.memory_space<vmem>>, vector<1x1x8x16xbf16>
    %65 = vector.shape_cast %64 : vector<1x1x8x16xbf16> to vector<8x16xbf16>
    %66 = vector.shape_cast %63 : vector<8x16xbf16> to vector<1x1x8x16xbf16>
    tpu.vector_store %arg15[%c0_34, %c1_35, %c0_36, %c32_37], %66 {strides = array<i32>} : memref<2x2x8x48xbf16, #tpu.memory_space<vmem>>, vector<1x1x8x16xbf16>,
    %67 = vector.extract_strided_slice %36 {offsets = [0, 16], sizes = [8, 16], strides = [1, 1]} : vector<16x32xf32> to vector<8x16xf32>
    %68 = arith.truncf %67 : vector<8x16xf32> to vector<8x16xbf16>
    %c1_38 = arith.constant 1 : index
    %c0_39 = arith.constant 0 : index
    %c0_40 = arith.constant 0 : index
    %c0_41 = arith.constant 0 : index
    %69 = vector.load %arg15[%c1_38, %c0_39, %c0_40, %c0_41] : memref<2x2x8x48xbf16, #tpu.memory_space<vmem>>, vector<1x1x8x16xbf16>
    %70 = vector.shape_cast %69 : vector<1x1x8x16xbf16> to vector<8x16xbf16>
    %71 = vector.shape_cast %68 : vector<8x16xbf16> to vector<1x1x8x16xbf16>
    tpu.vector_store %arg15[%c1_38, %c0_39, %c0_40, %c0_41], %71 {strides = array<i32>} : memref<2x2x8x48xbf16, #tpu.memory_space<vmem>>, vector<1x1x8x16xbf16>,
    %72 = vector.extract_strided_slice %31 {offsets = [0, 48], sizes = [8, 16], strides = [1, 1]} : vector<16x96xf32> to vector<8x16xf32>
    %73 = arith.truncf %72 : vector<8x16xf32> to vector<8x16xbf16>
    %c1_42 = arith.constant 1 : index
    %c0_43 = arith.constant 0 : index
    %c0_44 = arith.constant 0 : index
    %c16_45 = arith.constant 16 : index
    %74 = vector.load %arg15[%c1_42, %c0_43, %c0_44, %c16_45] : memref<2x2x8x48xbf16, #tpu.memory_space<vmem>>, vector<1x1x8x16xbf16>
    %75 = vector.shape_cast %74 : vector<1x1x8x16xbf16> to vector<8x16xbf16>
    %76 = vector.shape_cast %73 : vector<8x16xbf16> to vector<1x1x8x16xbf16>
    tpu.vector_store %arg15[%c1_42, %c0_43, %c0_44, %c16_45], %76 {strides = array<i32>} : memref<2x2x8x48xbf16, #tpu.memory_space<vmem>>, vector<1x1x8x16xbf16>,
    %77 = vector.extract_strided_slice %31 {offsets = [0, 80], sizes = [8, 16], strides = [1, 1]} : vector<16x96xf32> to vector<8x16xf32>
    %78 = arith.truncf %77 : vector<8x16xf32> to vector<8x16xbf16>
    %c1_46 = arith.constant 1 : index
    %c0_47 = arith.constant 0 : index
    %c0_48 = arith.constant 0 : index
    %c32_49 = arith.constant 32 : index
    %79 = vector.load %arg15[%c1_46, %c0_47, %c0_48, %c32_49] : memref<2x2x8x48xbf16, #tpu.memory_space<vmem>>, vector<1x1x8x16xbf16>
    %80 = vector.shape_cast %79 : vector<1x1x8x16xbf16> to vector<8x16xbf16>
    %81 = vector.shape_cast %78 : vector<8x16xbf16> to vector<1x1x8x16xbf16>
    tpu.vector_store %arg15[%c1_46, %c0_47, %c0_48, %c32_49], %81 {strides = array<i32>} : memref<2x2x8x48xbf16, #tpu.memory_space<vmem>>, vector<1x1x8x16xbf16>,
    %82 = vector.extract_strided_slice %36 {offsets = [8, 16], sizes = [8, 16], strides = [1, 1]} : vector<16x32xf32> to vector<8x16xf32>
    %83 = arith.truncf %82 : vector<8x16xf32> to vector<8x16xbf16>
    %c1_50 = arith.constant 1 : index
    %c1_51 = arith.constant 1 : index
    %c0_52 = arith.constant 0 : index
    %c0_53 = arith.constant 0 : index
    %84 = vector.load %arg15[%c1_50, %c1_51, %c0_52, %c0_53] : memref<2x2x8x48xbf16, #tpu.memory_space<vmem>>, vector<1x1x8x16xbf16>
    %85 = vector.shape_cast %84 : vector<1x1x8x16xbf16> to vector<8x16xbf16>
    %86 = vector.shape_cast %83 : vector<8x16xbf16> to vector<1x1x8x16xbf16>
    tpu.vector_store %arg15[%c1_50, %c1_51, %c0_52, %c0_53], %86 {strides = array<i32>} : memref<2x2x8x48xbf16, #tpu.memory_space<vmem>>, vector<1x1x8x16xbf16>,
    %87 = vector.extract_strided_slice %31 {offsets = [8, 48], sizes = [8, 16], strides = [1, 1]} : vector<16x96xf32> to vector<8x16xf32>
    %88 = arith.truncf %87 : vector<8x16xf32> to vector<8x16xbf16>
    %c1_54 = arith.constant 1 : index
    %c1_55 = arith.constant 1 : index
    %c0_56 = arith.constant 0 : index
    %c16_57 = arith.constant 16 : index
    %89 = vector.load %arg15[%c1_54, %c1_55, %c0_56, %c16_57] : memref<2x2x8x48xbf16, #tpu.memory_space<vmem>>, vector<1x1x8x16xbf16>
    %90 = vector.shape_cast %89 : vector<1x1x8x16xbf16> to vector<8x16xbf16>
    %91 = vector.shape_cast %88 : vector<8x16xbf16> to vector<1x1x8x16xbf16>
    tpu.vector_store %arg15[%c1_54, %c1_55, %c0_56, %c16_57], %91 {strides = array<i32>} : memref<2x2x8x48xbf16, #tpu.memory_space<vmem>>, vector<1x1x8x16xbf16>,
    %92 = vector.extract_strided_slice %31 {offsets = [8, 80], sizes = [8, 16], strides = [1, 1]} : vector<16x96xf32> to vector<8x16xf32>
    %93 = arith.truncf %92 : vector<8x16xf32> to vector<8x16xbf16>
    %c1_58 = arith.constant 1 : index
    %c1_59 = arith.constant 1 : index
    %c0_60 = arith.constant 0 : index
    %c32_61 = arith.constant 32 : index
    %94 = vector.load %arg15[%c1_58, %c1_59, %c0_60, %c32_61] : memref<2x2x8x48xbf16, #tpu.memory_space<vmem>>, vector<1x1x8x16xbf16>
    %95 = vector.shape_cast %94 : vector<1x1x8x16xbf16> to vector<8x16xbf16>
    %96 = vector.shape_cast %93 : vector<8x16xbf16> to vector<1x1x8x16xbf16>
    tpu.vector_store %arg15[%c1_58, %c1_59, %c0_60, %c32_61], %96 {strides = array<i32>} : memref<2x2x8x48xbf16, #tpu.memory_space<vmem>>, vector<1x1x8x16xbf16>,
    %97 = tpu.iota {dimensions = array<i32: 0>} : vector<8x8xi32>
    %98 = tpu.iota {dimensions = array<i32: 1>} : vector<8x8xi32>
    %99 = arith.cmpi sgt, %98, %97 : vector<8x8xi32>
    %100 = vector.shape_cast %99 : vector<8x8xi1> to vector<1x8x8xi1>
    %cst_62 = arith.constant 0.000000e+00 : f32
    %101 = vector.broadcast %cst_62 : f32 to vector<16x32xf32>
    %c0_63 = arith.constant 0 : index
    %c0_64 = arith.constant 0 : index
    %102 = vector.load %arg16[%c0_63, %c0_64] : memref<16x32xf32, #tpu.memory_space<vmem>>, vector<16x32xf32>
    tpu.vector_store %arg16[%c0_63, %c0_64], %101 {strides = array<i32>} : memref<16x32xf32, #tpu.memory_space<vmem>>, vector<16x32xf32>,
    %c0_i32 = arith.constant 0 : i32
    %103 = arith.index_cast %c0_i32 : i32 to index
    %c0_65 = arith.constant 0 : index
    %c0_66 = arith.constant 0 : index
    %c0_67 = arith.constant 0 : index
    %104 = vector.load %arg15[%103, %c0_65, %c0_66, %c0_67] : memref<2x2x8x48xbf16, #tpu.memory_space<vmem>>, vector<1x2x8x48xbf16>
    %105 = vector.shape_cast %104 : vector<1x2x8x48xbf16> to vector<2x8x48xbf16>
    %106 = vector.extract_strided_slice %105 {offsets = [0, 0, 0], sizes = [2, 8, 16], strides = [1, 1, 1]} : vector<2x8x48xbf16> to vector<2x8x16xbf16>
    %107 = vector.extract_strided_slice %105 {offsets = [0, 0, 16], sizes = [2, 8, 16], strides = [1, 1, 1]} : vector<2x8x48xbf16> to vector<2x8x16xbf16>
    %108 = vector.extract_strided_slice %105 {offsets = [0, 0, 32], sizes = [2, 8, 16], strides = [1, 1, 1]} : vector<2x8x48xbf16> to vector<2x8x16xbf16>
    %109 = vector.extract_strided_slice %106 {offsets = [0, 0, 0], sizes = [2, 8, 8], strides = [1, 1, 1]} : vector<2x8x16xbf16> to vector<2x8x8xbf16>
    %110 = vector.extract_strided_slice %107 {offsets = [0, 0, 0], sizes = [2, 8, 8], strides = [1, 1, 1]} : vector<2x8x16xbf16> to vector<2x8x8xbf16>
    %111 = vector.extract_strided_slice %108 {offsets = [0, 0, 0], sizes = [2, 8, 8], strides = [1, 1, 1]} : vector<2x8x16xbf16> to vector<2x8x8xbf16>
    "tpu.trace_start"() <{level = 10 : i32, message = "bqd,bkd->bqk"}> : () -> ()
    %cst_68 = arith.constant dense<0.000000e+00> : vector<2x8x8xf32>
    %112 = tpu.matmul %109, %110, %cst_68 {dimension_numbers = #tpu.dot_dimension_numbers<[2], [2], [1], [1], [0, 0, 0, 1, 1, 1], [0], [0]>} : vector<2x8x8xbf16>, vector<2x8x8xbf16>, vector<2x8x8xf32> -> vector<2x8x8xf32>
    %cst_69 = arith.constant -1.000000e+30 : f32
    "tpu.trace_stop"() : () -> ()
    %113 = vector.shape_cast %100 : vector<1x8x8xi1> to vector<1x8x8xi1>
    %114 = vector.broadcast %113 : vector<1x8x8xi1> to vector<2x8x8xi1>
    %115 = vector.broadcast %cst_69 : f32 to vector<2x8x8xf32>
    %116 = arith.select %114, %115, %112 : vector<2x8x8xi1>, vector<2x8x8xf32>
    %cst_70 = arith.constant dense<0xFF800000> : vector<2x8xf32>
    %117 = vector.multi_reduction <maximumf>, %116, %cst_70 [2] : vector<2x8x8xf32> to vector<2x8xf32>
    %118 = vector.shape_cast %117 : vector<2x8xf32> to vector<2x8x1xf32>
    %119 = vector.broadcast %118 : vector<2x8x1xf32> to vector<2x8x8xf32>
    %120 = arith.subf %116, %119 : vector<2x8x8xf32>
    %121 = math.exp %120 : vector<2x8x8xf32>
    %cst_71 = arith.constant dense<0.000000e+00> : vector<2x8xf32>
    %122 = vector.multi_reduction <add>, %121, %cst_71 [2] : vector<2x8x8xf32> to vector<2x8xf32>
    %123 = vector.shape_cast %122 : vector<2x8xf32> to vector<2x8x1xf32>
    %124 = arith.truncf %121 : vector<2x8x8xf32> to vector<2x8x8xbf16>
    "tpu.trace_start"() <{level = 10 : i32, message = "bqk,bkd->bqd"}> : () -> ()
    %cst_72 = arith.constant dense<0.000000e+00> : vector<2x8x8xf32>
    %125 = tpu.matmul %124, %111, %cst_72 {dimension_numbers = #tpu.dot_dimension_numbers<[2], [1], [1], [2], [0, 0, 0, 1, 1, 2], [0], [0]>} : vector<2x8x8xbf16>, vector<2x8x8xbf16>, vector<2x8x8xf32> -> vector<2x8x8xf32>
    "tpu.trace_stop"() : () -> ()
    %126 = tpu.reciprocal %123 {approx = true} : vector<2x8x1xf32> -> vector<2x8x1xf32>
    %127 = vector.broadcast %126 : vector<2x8x1xf32> to vector<2x8x8xf32>
    %128 = arith.mulf %125, %127 : vector<2x8x8xf32>
    %129 = vector.extract_strided_slice %106 {offsets = [0, 0, 8], sizes = [2, 8, 8], strides = [1, 1, 1]} : vector<2x8x16xbf16> to vector<2x8x8xbf16>
    %130 = vector.extract_strided_slice %107 {offsets = [0, 0, 8], sizes = [2, 8, 8], strides = [1, 1, 1]} : vector<2x8x16xbf16> to vector<2x8x8xbf16>
    %131 = vector.extract_strided_slice %108 {offsets = [0, 0, 8], sizes = [2, 8, 8], strides = [1, 1, 1]} : vector<2x8x16xbf16> to vector<2x8x8xbf16>
    "tpu.trace_start"() <{level = 10 : i32, message = "bqd,bkd->bqk"}> : () -> ()
    %cst_73 = arith.constant dense<0.000000e+00> : vector<2x8x8xf32>
    %132 = tpu.matmul %129, %130, %cst_73 {dimension_numbers = #tpu.dot_dimension_numbers<[2], [2], [1], [1], [0, 0, 0, 1, 1, 1], [0], [0]>} : vector<2x8x8xbf16>, vector<2x8x8xbf16>, vector<2x8x8xf32> -> vector<2x8x8xf32>
    %cst_74 = arith.constant -1.000000e+30 : f32
    "tpu.trace_stop"() : () -> ()
    %133 = vector.shape_cast %100 : vector<1x8x8xi1> to vector<1x8x8xi1>
    %134 = vector.broadcast %133 : vector<1x8x8xi1> to vector<2x8x8xi1>
    %135 = vector.broadcast %cst_74 : f32 to vector<2x8x8xf32>
    %136 = arith.select %134, %135, %132 : vector<2x8x8xi1>, vector<2x8x8xf32>
    %cst_75 = arith.constant dense<0xFF800000> : vector<2x8xf32>
    %137 = vector.multi_reduction <maximumf>, %136, %cst_75 [2] : vector<2x8x8xf32> to vector<2x8xf32>
    %138 = vector.shape_cast %137 : vector<2x8xf32> to vector<2x8x1xf32>
    %139 = vector.broadcast %138 : vector<2x8x1xf32> to vector<2x8x8xf32>
    %140 = arith.subf %136, %139 : vector<2x8x8xf32>
    %141 = math.exp %140 : vector<2x8x8xf32>
    %cst_76 = arith.constant dense<0.000000e+00> : vector<2x8xf32>
    %142 = vector.multi_reduction <add>, %141, %cst_76 [2] : vector<2x8x8xf32> to vector<2x8xf32>
    %143 = vector.shape_cast %142 : vector<2x8xf32> to vector<2x8x1xf32>
    %144 = arith.truncf %141 : vector<2x8x8xf32> to vector<2x8x8xbf16>
    "tpu.trace_start"() <{level = 10 : i32, message = "bqk,bkd->bqd"}> : () -> ()
    %cst_77 = arith.constant dense<0.000000e+00> : vector<2x8x8xf32>
    %145 = tpu.matmul %144, %131, %cst_77 {dimension_numbers = #tpu.dot_dimension_numbers<[2], [1], [1], [2], [0, 0, 0, 1, 1, 2], [0], [0]>} : vector<2x8x8xbf16>, vector<2x8x8xbf16>, vector<2x8x8xf32> -> vector<2x8x8xf32>
    "tpu.trace_stop"() : () -> ()
    %146 = tpu.reciprocal %143 {approx = true} : vector<2x8x1xf32> -> vector<2x8x1xf32>
    %147 = vector.broadcast %146 : vector<2x8x1xf32> to vector<2x8x8xf32>
    %148 = arith.mulf %145, %147 : vector<2x8x8xf32>
    %149 = tpu.concatenate %128, %148 in 2 : vector<2x8x8xf32>, vector<2x8x8xf32> -> vector<2x8x16xf32>
    %150 = vector.shape_cast %149 : vector<2x8x16xf32> to vector<16x16xf32>
    %151 = arith.truncf %150 : vector<16x16xf32> to vector<16x16xbf16>
    %c16_i32 = arith.constant 16 : i32
    %152 = arith.muli %c0_i32, %c16_i32 : i32
    %153 = tpu.assume_multiple %152, 16 : i32
    %154 = arith.index_cast %153 : i32 to index
    %c0_78 = arith.constant 0 : index
    %155 = vector.load %arg6[%154, %c0_78] : memref<32x32xbf16, #tpu.memory_space<vmem>>, vector<16x32xbf16>
    %c0_79 = arith.constant 0 : index
    %c0_80 = arith.constant 0 : index
    %156 = vector.load %arg16[%c0_79, %c0_80] : memref<16x32xf32, #tpu.memory_space<vmem>>, vector<16x32xf32>
    %cst_81 = arith.constant dense<0.000000e+00> : vector<16x32xf32>
    %157 = tpu.matmul %151, %155, %cst_81 {dimension_numbers = #tpu.dot_dimension_numbers<[1], [0], [0], [1], [0, 0, 1, 1], [], []>} : vector<16x16xbf16>, vector<16x32xbf16>, vector<16x32xf32> -> vector<16x32xf32>
    %158 = arith.addf %156, %157 : vector<16x32xf32>
    %c0_82 = arith.constant 0 : index
    %c0_83 = arith.constant 0 : index
    %159 = vector.load %arg16[%c0_82, %c0_83] : memref<16x32xf32, #tpu.memory_space<vmem>>, vector<16x32xf32>
    tpu.vector_store %arg16[%c0_82, %c0_83], %158 {strides = array<i32>} : memref<16x32xf32, #tpu.memory_space<vmem>>, vector<16x32xf32>,
    %c1_i32 = arith.constant 1 : i32
    %160 = arith.index_cast %c1_i32 : i32 to index
    %c0_84 = arith.constant 0 : index
    %c0_85 = arith.constant 0 : index
    %c0_86 = arith.constant 0 : index
    %161 = vector.load %arg15[%160, %c0_84, %c0_85, %c0_86] : memref<2x2x8x48xbf16, #tpu.memory_space<vmem>>, vector<1x2x8x48xbf16>
    %162 = vector.shape_cast %161 : vector<1x2x8x48xbf16> to vector<2x8x48xbf16>
    %163 = vector.extract_strided_slice %162 {offsets = [0, 0, 0], sizes = [2, 8, 16], strides = [1, 1, 1]} : vector<2x8x48xbf16> to vector<2x8x16xbf16>
    %164 = vector.extract_strided_slice %162 {offsets = [0, 0, 16], sizes = [2, 8, 16], strides = [1, 1, 1]} : vector<2x8x48xbf16> to vector<2x8x16xbf16>
    %165 = vector.extract_strided_slice %162 {offsets = [0, 0, 32], sizes = [2, 8, 16], strides = [1, 1, 1]} : vector<2x8x48xbf16> to vector<2x8x16xbf16>
    %166 = vector.extract_strided_slice %163 {offsets = [0, 0, 0], sizes = [2, 8, 8], strides = [1, 1, 1]} : vector<2x8x16xbf16> to vector<2x8x8xbf16>
    %167 = vector.extract_strided_slice %164 {offsets = [0, 0, 0], sizes = [2, 8, 8], strides = [1, 1, 1]} : vector<2x8x16xbf16> to vector<2x8x8xbf16>
    %168 = vector.extract_strided_slice %165 {offsets = [0, 0, 0], sizes = [2, 8, 8], strides = [1, 1, 1]} : vector<2x8x16xbf16> to vector<2x8x8xbf16>
    "tpu.trace_start"() <{level = 10 : i32, message = "bqd,bkd->bqk"}> : () -> ()
    %cst_87 = arith.constant dense<0.000000e+00> : vector<2x8x8xf32>
    %169 = tpu.matmul %166, %167, %cst_87 {dimension_numbers = #tpu.dot_dimension_numbers<[2], [2], [1], [1], [0, 0, 0, 1, 1, 1], [0], [0]>} : vector<2x8x8xbf16>, vector<2x8x8xbf16>, vector<2x8x8xf32> -> vector<2x8x8xf32>
    %cst_88 = arith.constant -1.000000e+30 : f32
    "tpu.trace_stop"() : () -> ()
    %170 = vector.shape_cast %100 : vector<1x8x8xi1> to vector<1x8x8xi1>
    %171 = vector.broadcast %170 : vector<1x8x8xi1> to vector<2x8x8xi1>
    %172 = vector.broadcast %cst_88 : f32 to vector<2x8x8xf32>
    %173 = arith.select %171, %172, %169 : vector<2x8x8xi1>, vector<2x8x8xf32>
    %cst_89 = arith.constant dense<0xFF800000> : vector<2x8xf32>
    %174 = vector.multi_reduction <maximumf>, %173, %cst_89 [2] : vector<2x8x8xf32> to vector<2x8xf32>
    %175 = vector.shape_cast %174 : vector<2x8xf32> to vector<2x8x1xf32>
    %176 = vector.broadcast %175 : vector<2x8x1xf32> to vector<2x8x8xf32>
    %177 = arith.subf %173, %176 : vector<2x8x8xf32>
    %178 = math.exp %177 : vector<2x8x8xf32>
    %cst_90 = arith.constant dense<0.000000e+00> : vector<2x8xf32>
    %179 = vector.multi_reduction <add>, %178, %cst_90 [2] : vector<2x8x8xf32> to vector<2x8xf32>
    %180 = vector.shape_cast %179 : vector<2x8xf32> to vector<2x8x1xf32>
    %181 = arith.truncf %178 : vector<2x8x8xf32> to vector<2x8x8xbf16>
    "tpu.trace_start"() <{level = 10 : i32, message = "bqk,bkd->bqd"}> : () -> ()
    %cst_91 = arith.constant dense<0.000000e+00> : vector<2x8x8xf32>
    %182 = tpu.matmul %181, %168, %cst_91 {dimension_numbers = #tpu.dot_dimension_numbers<[2], [1], [1], [2], [0, 0, 0, 1, 1, 2], [0], [0]>} : vector<2x8x8xbf16>, vector<2x8x8xbf16>, vector<2x8x8xf32> -> vector<2x8x8xf32>
    "tpu.trace_stop"() : () -> ()
    %183 = tpu.reciprocal %180 {approx = true} : vector<2x8x1xf32> -> vector<2x8x1xf32>
    %184 = vector.broadcast %183 : vector<2x8x1xf32> to vector<2x8x8xf32>
    %185 = arith.mulf %182, %184 : vector<2x8x8xf32>
    %186 = vector.extract_strided_slice %163 {offsets = [0, 0, 8], sizes = [2, 8, 8], strides = [1, 1, 1]} : vector<2x8x16xbf16> to vector<2x8x8xbf16>
    %187 = vector.extract_strided_slice %164 {offsets = [0, 0, 8], sizes = [2, 8, 8], strides = [1, 1, 1]} : vector<2x8x16xbf16> to vector<2x8x8xbf16>
    %188 = vector.extract_strided_slice %165 {offsets = [0, 0, 8], sizes = [2, 8, 8], strides = [1, 1, 1]} : vector<2x8x16xbf16> to vector<2x8x8xbf16>
    "tpu.trace_start"() <{level = 10 : i32, message = "bqd,bkd->bqk"}> : () -> ()
    %cst_92 = arith.constant dense<0.000000e+00> : vector<2x8x8xf32>
    %189 = tpu.matmul %186, %187, %cst_92 {dimension_numbers = #tpu.dot_dimension_numbers<[2], [2], [1], [1], [0, 0, 0, 1, 1, 1], [0], [0]>} : vector<2x8x8xbf16>, vector<2x8x8xbf16>, vector<2x8x8xf32> -> vector<2x8x8xf32>
    %cst_93 = arith.constant -1.000000e+30 : f32
    "tpu.trace_stop"() : () -> ()
    %190 = vector.shape_cast %100 : vector<1x8x8xi1> to vector<1x8x8xi1>
    %191 = vector.broadcast %190 : vector<1x8x8xi1> to vector<2x8x8xi1>
    %192 = vector.broadcast %cst_93 : f32 to vector<2x8x8xf32>
    %193 = arith.select %191, %192, %189 : vector<2x8x8xi1>, vector<2x8x8xf32>
    %cst_94 = arith.constant dense<0xFF800000> : vector<2x8xf32>
    %194 = vector.multi_reduction <maximumf>, %193, %cst_94 [2] : vector<2x8x8xf32> to vector<2x8xf32>
    %195 = vector.shape_cast %194 : vector<2x8xf32> to vector<2x8x1xf32>
    %196 = vector.broadcast %195 : vector<2x8x1xf32> to vector<2x8x8xf32>
    %197 = arith.subf %193, %196 : vector<2x8x8xf32>
    %198 = math.exp %197 : vector<2x8x8xf32>
    %cst_95 = arith.constant dense<0.000000e+00> : vector<2x8xf32>
    %199 = vector.multi_reduction <add>, %198, %cst_95 [2] : vector<2x8x8xf32> to vector<2x8xf32>
    %200 = vector.shape_cast %199 : vector<2x8xf32> to vector<2x8x1xf32>
    %201 = arith.truncf %198 : vector<2x8x8xf32> to vector<2x8x8xbf16>
    "tpu.trace_start"() <{level = 10 : i32, message = "bqk,bkd->bqd"}> : () -> ()
    %cst_96 = arith.constant dense<0.000000e+00> : vector<2x8x8xf32>
    %202 = tpu.matmul %201, %188, %cst_96 {dimension_numbers = #tpu.dot_dimension_numbers<[2], [1], [1], [2], [0, 0, 0, 1, 1, 2], [0], [0]>} : vector<2x8x8xbf16>, vector<2x8x8xbf16>, vector<2x8x8xf32> -> vector<2x8x8xf32>
    "tpu.trace_stop"() : () -> ()
    %203 = tpu.reciprocal %200 {approx = true} : vector<2x8x1xf32> -> vector<2x8x1xf32>
    %204 = vector.broadcast %203 : vector<2x8x1xf32> to vector<2x8x8xf32>
    %205 = arith.mulf %202, %204 : vector<2x8x8xf32>
    %206 = tpu.concatenate %185, %205 in 2 : vector<2x8x8xf32>, vector<2x8x8xf32> -> vector<2x8x16xf32>
    %207 = vector.shape_cast %206 : vector<2x8x16xf32> to vector<16x16xf32>
    %208 = arith.truncf %207 : vector<16x16xf32> to vector<16x16xbf16>
    %c16_i32_97 = arith.constant 16 : i32
    %209 = arith.muli %c1_i32, %c16_i32_97 : i32
    %210 = tpu.assume_multiple %209, 16 : i32
    %211 = arith.index_cast %210 : i32 to index
    %c0_98 = arith.constant 0 : index
    %212 = vector.load %arg6[%211, %c0_98] : memref<32x32xbf16, #tpu.memory_space<vmem>>, vector<16x32xbf16>
    %c0_99 = arith.constant 0 : index
    %c0_100 = arith.constant 0 : index
    %213 = vector.load %arg16[%c0_99, %c0_100] : memref<16x32xf32, #tpu.memory_space<vmem>>, vector<16x32xf32>
    %cst_101 = arith.constant dense<0.000000e+00> : vector<16x32xf32>
    %214 = tpu.matmul %208, %212, %cst_101 {dimension_numbers = #tpu.dot_dimension_numbers<[1], [0], [0], [1], [0, 0, 1, 1], [], []>} : vector<16x16xbf16>, vector<16x32xbf16>, vector<16x32xf32> -> vector<16x32xf32>
    %215 = arith.addf %213, %214 : vector<16x32xf32>
    %c0_102 = arith.constant 0 : index
    %c0_103 = arith.constant 0 : index
    %216 = vector.load %arg16[%c0_102, %c0_103] : memref<16x32xf32, #tpu.memory_space<vmem>>, vector<16x32xf32>
    tpu.vector_store %arg16[%c0_102, %c0_103], %215 {strides = array<i32>} : memref<16x32xf32, #tpu.memory_space<vmem>>, vector<16x32xf32>,
    %c2_i32 = arith.constant 2 : i32
    %c0_104 = arith.constant 0 : index
    %c0_105 = arith.constant 0 : index
    %217 = vector.load %arg16[%c0_104, %c0_105] : memref<16x32xf32, #tpu.memory_space<vmem>>, vector<16x32xf32>
    %c0_106 = arith.constant 0 : index
    %c0_107 = arith.constant 0 : index
    %218 = vector.load %arg7[%c0_106, %c0_107] : memref<1x32xf32, #tpu.memory_space<vmem>>, vector<1x32xf32>
    %219 = vector.broadcast %218 : vector<1x32xf32> to vector<16x32xf32>
    %220 = arith.addf %217, %219 : vector<16x32xf32>
    %221 = arith.addf %220, %1 : vector<16x32xf32>
    %c0_108 = arith.constant 0 : index
    %c0_109 = arith.constant 0 : index
    %222 = vector.load %arg8[%c0_108, %c0_109] : memref<1x32xf32, #tpu.memory_space<vmem>>, vector<1x32xf32>
    %c0_110 = arith.constant 0 : index
    %c0_111 = arith.constant 0 : index
    %223 = vector.load %arg9[%c0_110, %c0_111] : memref<1x32xf32, #tpu.memory_space<vmem>>, vector<1x32xf32>
    %cst_112 = arith.constant dense<0.000000e+00> : vector<16xf32>
    %224 = vector.multi_reduction <add>, %221, %cst_112 [1] : vector<16x32xf32> to vector<16xf32>
    %225 = vector.shape_cast %224 : vector<16xf32> to vector<16x1xf32>
    %cst_113 = arith.constant 3.200000e+01 : f32
    %226 = vector.broadcast %cst_113 : f32 to vector<16x1xf32>
    %227 = arith.divf %225, %226 : vector<16x1xf32>
    %228 = vector.broadcast %227 : vector<16x1xf32> to vector<16x32xf32>
    %229 = arith.subf %221, %228 : vector<16x32xf32>
    %230 = arith.mulf %229, %229 : vector<16x32xf32>
    %cst_114 = arith.constant dense<0.000000e+00> : vector<16xf32>
    %231 = vector.multi_reduction <add>, %230, %cst_114 [1] : vector<16x32xf32> to vector<16xf32>
    %232 = vector.shape_cast %231 : vector<16xf32> to vector<16x1xf32>
    %cst_115 = arith.constant 3.200000e+01 : f32
    %233 = vector.broadcast %cst_115 : f32 to vector<16x1xf32>
    %234 = arith.divf %232, %233 : vector<16x1xf32>
    %235 = vector.broadcast %227 : vector<16x1xf32> to vector<16x32xf32>
    %236 = arith.subf %221, %235 : vector<16x32xf32>
    %cst_116 = arith.constant 9.99999974E-6 : f32
    %237 = vector.broadcast %cst_116 : f32 to vector<16x1xf32>
    %238 = arith.addf %234, %237 : vector<16x1xf32>
    %239 = math.rsqrt %238 : vector<16x1xf32>
    %240 = vector.broadcast %239 : vector<16x1xf32> to vector<16x32xf32>
    %241 = arith.mulf %236, %240 : vector<16x32xf32>
    %242 = vector.broadcast %222 : vector<1x32xf32> to vector<16x32xf32>
    %243 = arith.mulf %241, %242 : vector<16x32xf32>
    %244 = vector.broadcast %223 : vector<1x32xf32> to vector<16x32xf32>
    %245 = arith.addf %243, %244 : vector<16x32xf32>
    %246 = arith.truncf %245 : vector<16x32xf32> to vector<16x32xbf16>
    %c0_117 = arith.constant 0 : index
    %c0_118 = arith.constant 0 : index
    %247 = vector.load %arg10[%c0_117, %c0_118] : memref<32x128xbf16, #tpu.memory_space<vmem>>, vector<32x128xbf16>
    %cst_119 = arith.constant dense<0.000000e+00> : vector<16x128xf32>
    %248 = tpu.matmul %246, %247, %cst_119 {dimension_numbers = #tpu.dot_dimension_numbers<[1], [0], [0], [1], [0, 0, 1, 1], [], []>} : vector<16x32xbf16>, vector<32x128xbf16>, vector<16x128xf32> -> vector<16x128xf32>
    %c0_120 = arith.constant 0 : index
    %c0_121 = arith.constant 0 : index
    %249 = vector.load %arg11[%c0_120, %c0_121] : memref<1x128xf32, #tpu.memory_space<vmem>>, vector<1x128xf32>
    %250 = vector.broadcast %249 : vector<1x128xf32> to vector<16x128xf32>
    %251 = arith.addf %248, %250 : vector<16x128xf32>
    %252 = arith.truncf %251 : vector<16x128xf32> to vector<16x128xbf16>
    %cst_122 = arith.constant 1.703130e+00 : bf16
    %253 = vector.broadcast %cst_122 : bf16 to vector<16x128xbf16>
    %254 = arith.mulf %253, %252 : vector<16x128xbf16>
    %255 = arith.negf %254 : vector<16x128xbf16>
    %256 = math.exp %255 : vector<16x128xbf16>
    %cst_123 = arith.constant 1.000000e+00 : bf16
    %257 = vector.broadcast %cst_123 : bf16 to vector<16x128xbf16>
    %258 = arith.addf %257, %256 : vector<16x128xbf16>
    %259 = arith.divf %257, %258 : vector<16x128xbf16>
    %260 = arith.mulf %252, %259 : vector<16x128xbf16>
    %c0_124 = arith.constant 0 : index
    %c0_125 = arith.constant 0 : index
    %261 = vector.load %arg12[%c0_124, %c0_125] : memref<128x32xbf16, #tpu.memory_space<vmem>>, vector<128x32xbf16>
    %cst_126 = arith.constant dense<0.000000e+00> : vector<16x32xf32>
    %262 = tpu.matmul %260, %261, %cst_126 {dimension_numbers = #tpu.dot_dimension_numbers<[1], [0], [0], [1], [0, 0, 1, 1], [], []>} : vector<16x128xbf16>, vector<128x32xbf16>, vector<16x32xf32> -> vector<16x32xf32>
    %c0_127 = arith.constant 0 : index
    %c0_128 = arith.constant 0 : index
    %263 = vector.load %arg13[%c0_127, %c0_128] : memref<1x32xf32, #tpu.memory_space<vmem>>, vector<1x32xf32>
    %264 = vector.broadcast %263 : vector<1x32xf32> to vector<16x32xf32>
    %265 = arith.addf %262, %264 : vector<16x32xf32>
    %266 = arith.addf %265, %221 : vector<16x32xf32>
    %267 = vector.shape_cast %266 : vector<16x32xf32> to vector<2x8x32xf32>
    %c0_129 = arith.constant 0 : index
    %c0_130 = arith.constant 0 : index
    %c0_131 = arith.constant 0 : index
    %268 = vector.load %arg14[%c0_129, %c0_130, %c0_131] : memref<2x8x32xf32, #tpu.memory_space<vmem>>, vector<2x8x32xf32>
    tpu.vector_store %arg14[%c0_129, %c0_130, %c0_131], %267 {strides = array<i32>} : memref<2x8x32xf32, #tpu.memory_space<vmem>>, vector<2x8x32xf32>,
    return
  }
  func.func @transform_0(%arg0: i32) -> (i32, i32, i32) {
    %c0_i32 = arith.constant 0 : i32
    %c0_i32_0 = arith.constant 0 : i32
    %c0_i32_1 = arith.constant 0 : i32
    return %arg0, %c0_i32, %c0_i32_0 : i32, i32, i32
  }
  func.func @transform_1(%arg0: i32) -> (i32, i32) {
    %c0_i32 = arith.constant 0 : i32
    %c0_i32_0 = arith.constant 0 : i32
    %c0_i32_1 = arith.constant 0 : i32
    return %c0_i32, %c0_i32_0 : i32, i32
  }
  func.func @transform_2(%arg0: i32) -> (i32, i32) {
    %c0_i32 = arith.constant 0 : i32
    %c0_i32_0 = arith.constant 0 : i32
    %c0_i32_1 = arith.constant 0 : i32
    return %c0_i32, %c0_i32_0 : i32, i32
  }
  func.func @transform_3(%arg0: i32) -> (i32, i32) {
    %c0_i32 = arith.constant 0 : i32
    %c0_i32_0 = arith.constant 0 : i32
    %c0_i32_1 = arith.constant 0 : i32
    return %c0_i32, %c0_i32_0 : i32, i32
  }
  func.func @transform_4(%arg0: i32) -> (i32, i32) {
    %c0_i32 = arith.constant 0 : i32
    %c0_i32_0 = arith.constant 0 : i32
    %c0_i32_1 = arith.constant 0 : i32
    return %c0_i32, %c0_i32_0 : i32, i32
  }
  func.func @transform_5(%arg0: i32) -> (i32, i32) {
    %c0_i32 = arith.constant 0 : i32
    %c0_i32_0 = arith.constant 0 : i32
    %c0_i32_1 = arith.constant 0 : i32
    return %c0_i32, %c0_i32_0 : i32, i32
  }
  func.func @transform_6(%arg0: i32) -> (i32, i32) {
    %c0_i32 = arith.constant 0 : i32
    %c0_i32_0 = arith.constant 0 : i32
    %c0_i32_1 = arith.constant 0 : i32
    return %c0_i32, %c0_i32_0 : i32, i32
  }
  func.func @transform_7(%arg0: i32) -> (i32, i32) {
    %c0_i32 = arith.constant 0 : i32
    %c0_i32_0 = arith.constant 0 : i32
    %c0_i32_1 = arith.constant 0 : i32
    return %c0_i32, %c0_i32_0 : i32, i32
  }
  func.func @transform_8(%arg0: i32) -> (i32, i32) {
    %c0_i32 = arith.constant 0 : i32
    %c0_i32_0 = arith.constant 0 : i32
    %c0_i32_1 = arith.constant 0 : i32
    return %c0_i32, %c0_i32_0 : i32, i32
  }
  func.func @transform_9(%arg0: i32) -> (i32, i32) {
    %c0_i32 = arith.constant 0 : i32
    %c0_i32_0 = arith.constant 0 : i32
    %c0_i32_1 = arith.constant 0 : i32
    return %c0_i32, %c0_i32_0 : i32, i32
  }
  func.func @transform_10(%arg0: i32) -> (i32, i32) {
    %c0_i32 = arith.constant 0 : i32
    %c0_i32_0 = arith.constant 0 : i32
    %c0_i32_1 = arith.constant 0 : i32
    return %c0_i32, %c0_i32_0 : i32, i32
  }
  func.func @transform_11(%arg0: i32) -> (i32, i32) {
    %c0_i32 = arith.constant 0 : i32
    %c0_i32_0 = arith.constant 0 : i32
    %c0_i32_1 = arith.constant 0 : i32
    return %c0_i32, %c0_i32_0 : i32, i32
  }
  func.func @transform_12(%arg0: i32) -> (i32, i32) {
    %c0_i32 = arith.constant 0 : i32
    %c0_i32_0 = arith.constant 0 : i32
    %c0_i32_1 = arith.constant 0 : i32
    return %c0_i32, %c0_i32_0 : i32, i32
  }
  func.func @transform_13(%arg0: i32) -> (i32, i32, i32) {
    %c0_i32 = arith.constant 0 : i32
    %c0_i32_0 = arith.constant 0 : i32
    %c0_i32_1 = arith.constant 0 : i32
    return %arg0, %c0_i32, %c0_i32_0 : i32, i32, i32
  }
}

</mosaic_0001>

<llo_original>
// kernel: tpu_custom_call.1
$region0: #{tpu_custom_call.1}
  #allocation0 [shape = 'u32[]', space=smem, size = 0x4, offset = 0x4, fixed_abs, tag = 'smem constant byte address 0x4 - core index']
  #allocation1 [shape = 'u32[144,128]{1,0:T(1,128)}', space=vmem, size = 0x12000, scoped, tag = 'internal scratch']
  #allocation2 [shape = 'bf16[2,2,8,48]{3,2,1,0:T(8,128)(2,1)}', space=vmem, size = 0x2000, scoped, tag = 'scratch operand']
  #allocation3 [shape = 'f32[16,32]{1,0:T(8,128)}', space=vmem, size = 0x2000, scoped, tag = 'scratch operand']
  %s0 = inlined_call_operand.vmem [shape: f32[2,8,32], index: 0, kind: input, shape index: {}]
  %s1 = inlined_call_operand.vmem [shape: f32[1,32], index: 1, kind: input, shape index: {}]
  %s2 = inlined_call_operand.vmem [shape: f32[1,32], index: 2, kind: input, shape index: {}]
  %s3 = inlined_call_operand.vmem [shape: bf16[32,96], index: 3, kind: input, shape index: {}]
  %s4 = inlined_call_operand.vmem [shape: f32[1,96], index: 4, kind: input, shape index: {}]
  %s5 = inlined_call_operand.vmem [shape: bf16[32,32], index: 5, kind: input, shape index: {}]
  %s6 = inlined_call_operand.vmem [shape: f32[1,32], index: 6, kind: input, shape index: {}]
  %s7 = inlined_call_operand.vmem [shape: f32[1,32], index: 7, kind: input, shape index: {}]
  %s8 = inlined_call_operand.vmem [shape: f32[1,32], index: 8, kind: input, shape index: {}]
  %s9 = inlined_call_operand.vmem [shape: bf16[32,128], index: 9, kind: input, shape index: {}]
  %s10 = inlined_call_operand.vmem [shape: f32[1,128], index: 10, kind: input, shape index: {}]
  %s11 = inlined_call_operand.vmem [shape: bf16[128,32], index: 11, kind: input, shape index: {}]
  %s12 = inlined_call_operand.vmem [shape: f32[1,32], index: 12, kind: input, shape index: {}]
  %s13 = inlined_call_operand.hbm [shape: f32[2,8,32], index: 13, kind: output, shape index: {}]
  %s14 = sld [smem:[#allocation0]]
  $region62: #{tpu_custom_call.1} parent=0
    _
  %s16 = ssub.s32 1, %s14
  %s17 = scalar_select 0, %s16, %s14
  $region1: #{tpu_custom_call.1} parent=0
    #allocation4 [shape = 'u8[8192]{0}', space=vmem, size = 0x2000, scoped, tag = 'output window, operand 0, single buffered']
    #allocation5 [shape = 's32[1]{0}', space=sflag, size = 0x4, scoped, tag = 'scoped memory for tpu_custom_call.1']
    %18 = vsyncpa [#allocation5], 0
    // Predicated region
    $region2: #{tpu_custom_call.1} parent=1 // pred_check
      _
    $region3: #{tpu_custom_call.1} parent=1 // pred_check_branch
      %20 = sbr.rel (0) target = $region5
    $region4: #{tpu_custom_call.1} parent=1 // pred_region
      _
    $region5: #{tpu_custom_call.1} parent=1 // pred_fallthru
      _
    // Predicated region
    $region6: #{tpu_custom_call.1} parent=1 // pred_check
      _
    $region7: #{tpu_custom_call.1} parent=1 // pred_check_branch
      %22 = sbr.rel (0) target = $region9
    $region8: #{tpu_custom_call.1} parent=1 // pred_region
      _
    $region9: #{tpu_custom_call.1} parent=1 // pred_fallthru
      _
    // Predicated region
    $region10: #{tpu_custom_call.1} parent=1 // pred_check
      _
    $region11: #{tpu_custom_call.1} parent=1 // pred_check_branch
      %24 = sbr.rel (0) target = $region13
    $region12: #{tpu_custom_call.1} parent=1 // pred_region
      _
    $region13: #{tpu_custom_call.1} parent=1 // pred_fallthru
      _
    // Predicated region
    $region14: #{tpu_custom_call.1} parent=1 // pred_check
      _
    $region15: #{tpu_custom_call.1} parent=1 // pred_check_branch
      %26 = sbr.rel (0) target = $region17
    $region16: #{tpu_custom_call.1} parent=1 // pred_region
      _
    $region17: #{tpu_custom_call.1} parent=1 // pred_fallthru
      _
    // Predicated region
    $region18: #{tpu_custom_call.1} parent=1 // pred_check
      _
    $region19: #{tpu_custom_call.1} parent=1 // pred_check_branch
      %28 = sbr.rel (0) target = $region21
    $region20: #{tpu_custom_call.1} parent=1 // pred_region
      _
    $region21: #{tpu_custom_call.1} parent=1 // pred_fallthru
      _
    // Predicated region
    $region22: #{tpu_custom_call.1} parent=1 // pred_check
      _
    $region23: #{tpu_custom_call.1} parent=1 // pred_check_branch
      %30 = sbr.rel (0) target = $region25
    $region24: #{tpu_custom_call.1} parent=1 // pred_region
      _
    $region25: #{tpu_custom_call.1} parent=1 // pred_fallthru
      _
    // Predicated region
    $region26: #{tpu_custom_call.1} parent=1 // pred_check
      _
    $region27: #{tpu_custom_call.1} parent=1 // pred_check_branch
      %32 = sbr.rel (0) target = $region29
    $region28: #{tpu_custom_call.1} parent=1 // pred_region
      _
    $region29: #{tpu_custom_call.1} parent=1 // pred_fallthru
      _
    // Predicated region
    $region30: #{tpu_custom_call.1} parent=1 // pred_check
      _
    $region31: #{tpu_custom_call.1} parent=1 // pred_check_branch
      %34 = sbr.rel (0) target = $region33
    $region32: #{tpu_custom_call.1} parent=1 // pred_region
      _
    $region33: #{tpu_custom_call.1} parent=1 // pred_fallthru
      _
    // Predicated region
    $region34: #{tpu_custom_call.1} parent=1 // pred_check
      _
    $region35: #{tpu_custom_call.1} parent=1 // pred_check_branch
      %36 = sbr.rel (0) target = $region37
    $region36: #{tpu_custom_call.1} parent=1 // pred_region
      _
    $region37: #{tpu_custom_call.1} parent=1 // pred_fallthru
      _
    // Predicated region
    $region38: #{tpu_custom_call.1} parent=1 // pred_check
      _
    $region39: #{tpu_custom_call.1} parent=1 // pred_check_branch
      %38 = sbr.rel (0) target = $region41
    $region40: #{tpu_custom_call.1} parent=1 // pred_region
      _
    $region41: #{tpu_custom_call.1} parent=1 // pred_fallthru
      _
    // Predicated region
    $region42: #{tpu_custom_call.1} parent=1 // pred_check
      _
    $region43: #{tpu_custom_call.1} parent=1 // pred_check_branch
      %40 = sbr.rel (0) target = $region45
    $region44: #{tpu_custom_call.1} parent=1 // pred_region
      _
    $region45: #{tpu_custom_call.1} parent=1 // pred_fallthru
      _
    // Predicated region
    $region46: #{tpu_custom_call.1} parent=1 // pred_check
      _
    $region47: #{tpu_custom_call.1} parent=1 // pred_check_branch
      %42 = sbr.rel (0) target = $region49
    $region48: #{tpu_custom_call.1} parent=1 // pred_region
      _
    $region49: #{tpu_custom_call.1} parent=1 // pred_fallthru
      _
    // Predicated region
    $region50: #{tpu_custom_call.1} parent=1 // pred_check
      _
    $region51: #{tpu_custom_call.1} parent=1 // pred_check_branch
      %44 = sbr.rel (0) target = $region53
    $region52: #{tpu_custom_call.1} parent=1 // pred_region
      _
    $region53: #{tpu_custom_call.1} parent=1 // pred_fallthru
      _
    %v48 = vld [vmem:[%s0] sm:$0xff]
    %v49 = vld [vmem:[%s0 + $0x8] sm:$0xff]
    %v50 = vld [vmem:[%s1] sm:$0x1]
    %v51 = vld [vmem:[%s2] sm:$0x1]
    %vm52 = vcmask 261120
    %v53 = vsel %vm52, %v48, 0.0
    %54 = vadd.xlane.f32.xlu0 %v53
    %v55 = vpop.xlane.xlu0 %54
    %v56 = vsel %vm52, %v49, 0.0
    %57 = vadd.xlane.f32.xlu0 %v56
    %v58 = vpop.xlane.xlu0 %57
    %v59 = vrcp.pop 32.0
    %v60 = vmul.f32 %v55, %v59
    %v61 = vmul.f32 %v58, %v59
    %v62 = vsub.f32 %v48, %v60
    %v63 = vsub.f32 %v49, %v61
    %v64 = vmul.f32 %v62, %v62
    %v65 = vmul.f32 %v63, %v63
    %v66 = vsel %vm52, %v64, 0.0
    %67 = vadd.xlane.f32.xlu0 %v66
    %v68 = vpop.xlane.xlu0 %67
    %v69 = vsel %vm52, %v65, 0.0
    %70 = vadd.xlane.f32.xlu0 %v69
    %v71 = vpop.xlane.xlu0 %70
    %v72 = vmul.f32 %v68, %v59
    %v73 = vmul.f32 %v71, %v59
    %v74 = vadd.f32 %v72, 1e-05
    %v75 = vadd.f32 %v73, 1e-05
    %v76 = vrsqrt.pop %v74
    %v77 = vrsqrt.pop %v75
    %v78 = vmul.f32 %v62, %v76
    %v79 = vmul.f32 %v63, %v77
    %v81 = vlaneseq
    %v82 = vshrl.u32 %v81, 7
    %v83 = vsub.s32 0, %v82
    %v84 = vrot.slane %v50, %v83
    %v86 = vmul.f32 %v78, %v84
    %v87 = vmul.f32 %v79, %v84
    %v89 = vlaneseq
    %v90 = vshrl.u32 %v89, 7
    %v91 = vsub.s32 0, %v90
    %v92 = vrot.slane %v51, %v91
    %v94 = vadd.f32 %v86, %v92
    %v95 = vadd.f32 %v87, %v92
    %v96 = vpack.c.bf16 %v95, %v94
    %v97 = vld [vmem:[%s3] sm:$0xf]
    %v98 = vld [vmem:[%s3 + $0x4] sm:$0xf]
    %v99 = vld [vmem:[%s3 + $0x8] sm:$0xf]
    %v100 = vld [vmem:[%s3 + $0xc] sm:$0xf]
    %v101 = vld [vmem:[%s4] sm:$0x1]
    %v103 = vlaneseq
    %v104 = vshrl.u32 %v103, 7
    %v105 = vsub.s32 0, %v104
    %v106 = vrot.slane %v101, %v105
    %v112 = vunpack.c.l.b16 %v97
    %v113 = vunpack.c.l.b16 %v98
    %v114 = vunpack.c.l.b16 %v99
    %v115 = vunpack.c.l.b16 %v100
    %v116 = vpack.c.b16 %v113, %v112
    %v117 = vpack.c.b16 %v115, %v114
    %v121 = vsel %vm52, %v96, 0
    %123 = vmatprep.subr.bf16.mxu0 0
    %124 = vmatpush1.bf16.msra.mxu0 %v116
    %125 = vmatprep.subr.bf16.mxu0 0
    %126 = vmatpush1.bf16.msra.mxu0 %v117
    %127 = vmatprep.subr.bf16.mxu0 0
    %128 = vmatpush1.bf16.msra.mxu0 0
    %129 = vmatprep.subr.bf16.mxu0 0
    %130 = vmatpush1.bf16.msra.mxu0 0
    %131 = vmatprep.subr.bf16.mxu0 0
    %132 = vmatpush1.bf16.msra.mxu0 0
    %133 = vmatprep.subr.bf16.mxu0 0
    %134 = vmatpush1.bf16.msra.mxu0 0
    %135 = vmatprep.subr.bf16.mxu0 0
    %136 = vmatpush1.bf16.msra.mxu0 0
    %137 = vmatprep.subr.bf16.mxu0 0
    %138 = vmatpush1.bf16.msra.mxu0 0
    %139 = vmatprep.subr.bf16.mxu0 0
    %140 = vmatpush1.bf16.msra.mxu0 0
    %141 = vmatprep.subr.bf16.mxu0 0
    %142 = vmatpush1.bf16.msra.mxu0 0
    %143 = vmatprep.subr.bf16.mxu0 0
    %144 = vmatpush1.bf16.msra.mxu0 0
    %145 = vmatprep.subr.bf16.mxu0 0
    %146 = vmatpush1.bf16.msra.mxu0 0
    %147 = vmatprep.subr.bf16.mxu0 0
    %148 = vmatpush1.bf16.msra.mxu0 0
    %149 = vmatprep.subr.bf16.mxu0 0
    %150 = vmatpush1.bf16.msra.mxu0 0
    %151 = vmatprep.subr.bf16.mxu0 0
    %152 = vmatpush1.bf16.msra.mxu0 0
    %153 = vmatprep.subr.bf16.mxu0 0
    %154 = vmatpush1.bf16.msra.mxu0 0
    %155 = vmatprep.mubr.bf16.mxu0 0
    %156 = vmatmul.mubr.bf16.gmra.mrb[0].mxu0 %v121
    %v157 = vpop.f32.mrb[0].mxu0
    %v158 = vadd.f32 %v106, %v157
    %v159 = vpop.f32.mrb[0].mxu0
    %v160 = vpop.f32.mrb[0].mxu0
    %v161 = vadd.f32 %v106, %v160
    %v162 = vpop.f32.mrb[0].mxu0
    %163 = vdwg.mxu0
    %v164 = vmul.f32 %v158, 0.35355338
    %v165 = vmul.f32 %v161, 0.35355338
    %v166 = vpack.c.bf16 %v164, %v164
    %vm167 = vcmask 125952
    %168 = vst.msk [vmem:[#allocation2] sm:$0xf] %vm167, %v166
    %v169 = vpack.c.bf16 %v158, %v158
    %v171 = vunpack.c.l.b16 %v169
    %v172 = vpack.c.b16 %v171, %v171
    %173 = vrot.lane.b32.xlu0 %v172, 112
    %v174 = vpop.permute.xlu0 %173
    %vm176 = vcmask 257152
    %177 = vst.msk [vmem:[#allocation2] sm:$0xf] %vm176, %v174
    %178 = vrot.lane.b32.xlu0 %v172, 96
    %v179 = vpop.permute.xlu0 %178
    %vm181 = vcmask 388352
    %182 = vst.msk [vmem:[#allocation2] sm:$0xf] %vm181, %v179
    %v183 = vpack.c.bf16 %v165, %v165
    %s184 = scalar_lea.vmem [#allocation2], 4
    %185 = vst.msk [vmem:[%s184] sm:$0xf] %vm167, %v183
    %v186 = vpack.c.bf16 %v161, %v161
    %v188 = vunpack.c.l.b16 %v186
    %v189 = vpack.c.b16 %v188, %v188
    %190 = vrot.lane.b32.xlu0 %v189, 112
    %v191 = vpop.permute.xlu0 %190
    %193 = vst.msk [vmem:[%s184] sm:$0xf] %vm176, %v191
    %194 = vrot.lane.b32.xlu0 %v189, 96
    %v195 = vpop.permute.xlu0 %194
    %197 = vst.msk [vmem:[%s184] sm:$0xf] %vm181, %v195
    %v199 = vunpack.c.l.b16 %v166
    %v200 = vpack.c.b16 %v199, %v199
    %201 = vrot.lane.b32.xlu0 %v200, 112
    %v202 = vpop.permute.xlu0 %201
    %s204 = scalar_lea.vmem [#allocation2], 8
    %205 = vst.msk [vmem:[%s204] sm:$0xf] %vm167, %v202
    %206 = vst.msk [vmem:[%s204] sm:$0xf] %vm176, %v179
    %207 = vrot.lane.b32.xlu0 %v172, 80
    %v208 = vpop.permute.xlu0 %207
    %210 = vst.msk [vmem:[%s204] sm:$0xf] %vm181, %v208
    %v212 = vunpack.c.l.b16 %v183
    %v213 = vpack.c.b16 %v212, %v212
    %214 = vrot.lane.b32.xlu0 %v213, 112
    %v215 = vpop.permute.xlu0 %214
    %s217 = scalar_lea.vmem [#allocation2], 12
    %218 = vst.msk [vmem:[%s217] sm:$0xf] %vm167, %v215
    %219 = vst.msk [vmem:[%s217] sm:$0xf] %vm176, %v195
    %220 = vrot.lane.b32.xlu0 %v189, 80
    %v221 = vpop.permute.xlu0 %220
    %223 = vst.msk [vmem:[%s217] sm:$0xf] %vm181, %v221
    %v224 = vlaneseq
    %v225 = vshrl.u32 %v224, 7
    %v226 = vlaneseq
    %v227 = vand.u32 %v226, 127
    %vm228 = vcmp.gt.s32.totalorder %v227, %v225
    %229 = vst.msk [vmem:[#allocation3] sm:$0xff] %vm52, 0.0
    %230 = vst.msk [vmem:[#allocation3 + $0x8] sm:$0xff] %vm52, 0.0
    %v231 = vld [vmem:[#allocation2] sm:$0xf]
    %v232 = vld [vmem:[#allocation2 + $0x4] sm:$0xf]
    %v234 = vunpack.c.l.b16 %v231
    %v235 = vpack.c.b16 %v234, %v234
    %236 = vrot.lane.b32.xlu0 %v235, 112
    %v237 = vpop.permute.xlu0 %236
    %vm238 = vcmask 64512
    %v240 = vsel %vm238, %v231, 0
    %v243 = vsel %vm238, %v237, 0
    %245 = vmatprep.subr.bf16.mxu0 0
    %246 = vmatpush1.bf16.xpose.msra.mxu0 %v243
    %247 = vmatprep.subr.bf16.mxu0 0
    %248 = vmatpush1.bf16.xpose.msra.mxu0 0
    %249 = vmatprep.subr.bf16.mxu0 0
    %250 = vmatpush1.bf16.xpose.msra.mxu0 0
    %251 = vmatprep.subr.bf16.mxu0 0
    %252 = vmatpush1.bf16.xpose.msra.mxu0 0
    %253 = vmatprep.subr.bf16.mxu0 0
    %254 = vmatpush1.bf16.xpose.msra.mxu0 0
    %255 = vmatprep.subr.bf16.mxu0 0
    %256 = vmatpush1.bf16.xpose.msra.mxu0 0
    %257 = vmatprep.subr.bf16.mxu0 0
    %258 = vmatpush1.bf16.xpose.msra.mxu0 0
    %259 = vmatprep.subr.bf16.mxu0 0
    %260 = vmatpush1.bf16.xpose.msra.mxu0 0
    %261 = vmatprep.subr.bf16.mxu0 0
    %262 = vmatpush1.bf16.xpose.msra.mxu0 0
    %263 = vmatprep.subr.bf16.mxu0 0
    %264 = vmatpush1.bf16.xpose.msra.mxu0 0
    %265 = vmatprep.subr.bf16.mxu0 0
    %266 = vmatpush1.bf16.xpose.msra.mxu0 0
    %267 = vmatprep.subr.bf16.mxu0 0
    %268 = vmatpush1.bf16.xpose.msra.mxu0 0
    %269 = vmatprep.subr.bf16.mxu0 0
    %270 = vmatpush1.bf16.xpose.msra.mxu0 0
    %271 = vmatprep.subr.bf16.mxu0 0
    %272 = vmatpush1.bf16.xpose.msra.mxu0 0
    %273 = vmatprep.subr.bf16.mxu0 0
    %274 = vmatpush1.bf16.xpose.msra.mxu0 0
    %275 = vmatprep.subr.bf16.mxu0 0
    %276 = vmatpush1.bf16.xpose.msra.mxu0 0
    %277 = vmatprep.mubr.bf16.mxu0 0
    %278 = vmatmul.mubr.bf16.gmra.mrb[0].mxu0 %v240
    %v279 = vpop.f32.mrb[0].mxu0
    %v280 = vadd.f32 0.0, %v279
    %v281 = vpop.f32.mrb[0].mxu0
    %v282 = vpop.f32.mrb[0].mxu0
    %v283 = vpop.f32.mrb[0].mxu0
    %284 = vdwg.mxu0
    %v286 = vunpack.c.l.b16 %v232
    %v287 = vpack.c.b16 %v286, %v286
    %288 = vrot.lane.b32.xlu0 %v287, 112
    %v289 = vpop.permute.xlu0 %288
    %v291 = vsel %vm238, %v232, 0
    %v294 = vsel %vm238, %v289, 0
    %296 = vmatprep.subr.bf16.mxu0 0
    %297 = vmatpush1.bf16.xpose.msra.mxu0 %v294
    %298 = vmatprep.subr.bf16.mxu0 0
    %299 = vmatpush1.bf16.xpose.msra.mxu0 0
    %300 = vmatprep.subr.bf16.mxu0 0
    %301 = vmatpush1.bf16.xpose.msra.mxu0 0
    %302 = vmatprep.subr.bf16.mxu0 0
    %303 = vmatpush1.bf16.xpose.msra.mxu0 0
    %304 = vmatprep.subr.bf16.mxu0 0
    %305 = vmatpush1.bf16.xpose.msra.mxu0 0
    %306 = vmatprep.subr.bf16.mxu0 0
    %307 = vmatpush1.bf16.xpose.msra.mxu0 0
    %308 = vmatprep.subr.bf16.mxu0 0
    %309 = vmatpush1.bf16.xpose.msra.mxu0 0
    %310 = vmatprep.subr.bf16.mxu0 0
    %311 = vmatpush1.bf16.xpose.msra.mxu0 0
    %312 = vmatprep.subr.bf16.mxu0 0
    %313 = vmatpush1.bf16.xpose.msra.mxu0 0
    %314 = vmatprep.subr.bf16.mxu0 0
    %315 = vmatpush1.bf16.xpose.msra.mxu0 0
    %316 = vmatprep.subr.bf16.mxu0 0
    %317 = vmatpush1.bf16.xpose.msra.mxu0 0
    %318 = vmatprep.subr.bf16.mxu0 0
    %319 = vmatpush1.bf16.xpose.msra.mxu0 0
    %320 = vmatprep.subr.bf16.mxu0 0
    %321 = vmatpush1.bf16.xpose.msra.mxu0 0
    %322 = vmatprep.subr.bf16.mxu0 0
    %323 = vmatpush1.bf16.xpose.msra.mxu0 0
    %324 = vmatprep.subr.bf16.mxu0 0
    %325 = vmatpush1.bf16.xpose.msra.mxu0 0
    %326 = vmatprep.subr.bf16.mxu0 0
    %327 = vmatpush1.bf16.xpose.msra.mxu0 0
    %328 = vmatprep.mubr.bf16.mxu0 0
    %329 = vmatmul.mubr.bf16.gmra.mrb[0].mxu0 %v291
    %v330 = vpop.f32.mrb[0].mxu0
    %v331 = vadd.f32 0.0, %v330
    %v332 = vpop.f32.mrb[0].mxu0
    %v333 = vpop.f32.mrb[0].mxu0
    %v334 = vpop.f32.mrb[0].mxu0
    %335 = vdwg.mxu0
    %v336 = vsel %vm228, 1, 0
    %vm337 = vcmp.eq.s32.totalorder %v336, 1
    %v338 = vsel %vm337, -1e+30, %v280
    %v339 = vsel %vm337, -1e+30, %v331
    %v340 = vsel %vm238, %v338, -inf
    %341 = vmax.xlane.f32.xlu0 %v340
    %v342 = vpop.xlane.xlu0 %341
    %v343 = vsel %vm238, %v339, -inf
    %344 = vmax.xlane.f32.xlu0 %v343
    %v345 = vpop.xlane.xlu0 %344
    %v346 = vsub.f32 %v338, %v342
    %v347 = vsub.f32 %v339, %v345
    %v348 = vmul.f32 %v346, 1.442695
    %v349 = vpow.pop %v348
    %v350 = vmul.f32 %v347, 1.442695
    %v351 = vpow.pop %v350
    %v352 = vsel %vm238, %v349, 0.0
    %353 = vadd.xlane.f32.xlu0 %v352
    %v354 = vpop.xlane.xlu0 %353
    %v355 = vsel %vm238, %v351, 0.0
    %356 = vadd.xlane.f32.xlu0 %v355
    %v357 = vpop.xlane.xlu0 %356
    %v358 = vpack.c.bf16 %v349, %v349
    %v359 = vpack.c.bf16 %v351, %v351
    %360 = vrot.lane.b32.xlu0 %v235, 96
    %v361 = vpop.permute.xlu0 %360
    %v363 = vsel %vm238, %v358, 0
    %vm365 = vcmask 1043456
    %v367 = vsel %vm365, %v361, 0
    %369 = vmatprep.subr.bf16.mxu0 0
    %370 = vmatpush1.bf16.msra.mxu0 %v367
    %371 = vmatprep.subr.bf16.mxu0 0
    %372 = vmatpush1.bf16.msra.mxu0 0
    %373 = vmatprep.subr.bf16.mxu0 0
    %374 = vmatpush1.bf16.msra.mxu0 0
    %375 = vmatprep.subr.bf16.mxu0 0
    %376 = vmatpush1.bf16.msra.mxu0 0
    %377 = vmatprep.subr.bf16.mxu0 0
    %378 = vmatpush1.bf16.msra.mxu0 0
    %379 = vmatprep.subr.bf16.mxu0 0
    %380 = vmatpush1.bf16.msra.mxu0 0
    %381 = vmatprep.subr.bf16.mxu0 0
    %382 = vmatpush1.bf16.msra.mxu0 0
    %383 = vmatprep.subr.bf16.mxu0 0
    %384 = vmatpush1.bf16.msra.mxu0 0
    %385 = vmatprep.subr.bf16.mxu0 0
    %386 = vmatpush1.bf16.msra.mxu0 0
    %387 = vmatprep.subr.bf16.mxu0 0
    %388 = vmatpush1.bf16.msra.mxu0 0
    %389 = vmatprep.subr.bf16.mxu0 0
    %390 = vmatpush1.bf16.msra.mxu0 0
    %391 = vmatprep.subr.bf16.mxu0 0
    %392 = vmatpush1.bf16.msra.mxu0 0
    %393 = vmatprep.subr.bf16.mxu0 0
    %394 = vmatpush1.bf16.msra.mxu0 0
    %395 = vmatprep.subr.bf16.mxu0 0
    %396 = vmatpush1.bf16.msra.mxu0 0
    %397 = vmatprep.subr.bf16.mxu0 0
    %398 = vmatpush1.bf16.msra.mxu0 0
    %399 = vmatprep.subr.bf16.mxu0 0
    %400 = vmatpush1.bf16.msra.mxu0 0
    %401 = vmatprep.mubr.bf16.mxu0 0
    %402 = vmatmul.mubr.bf16.gmra.mrb[0].mxu0 %v363
    %v403 = vpop.f32.mrb[0].mxu0
    %v404 = vadd.f32 0.0, %v403
    %v405 = vpop.f32.mrb[0].mxu0
    %v406 = vpop.f32.mrb[0].mxu0
    %v407 = vpop.f32.mrb[0].mxu0
    %408 = vdwg.mxu0
    %409 = vrot.lane.b32.xlu0 %v287, 96
    %v410 = vpop.permute.xlu0 %409
    %v412 = vsel %vm238, %v359, 0
    %v415 = vsel %vm365, %v410, 0
    %417 = vmatprep.subr.bf16.mxu0 0
    %418 = vmatpush1.bf16.msra.mxu0 %v415
    %419 = vmatprep.subr.bf16.mxu0 0
    %420 = vmatpush1.bf16.msra.mxu0 0
    %421 = vmatprep.subr.bf16.mxu0 0
    %422 = vmatpush1.bf16.msra.mxu0 0
    %423 = vmatprep.subr.bf16.mxu0 0
    %424 = vmatpush1.bf16.msra.mxu0 0
    %425 = vmatprep.subr.bf16.mxu0 0
    %426 = vmatpush1.bf16.msra.mxu0 0
    %427 = vmatprep.subr.bf16.mxu0 0
    %428 = vmatpush1.bf16.msra.mxu0 0
    %429 = vmatprep.subr.bf16.mxu0 0
    %430 = vmatpush1.bf16.msra.mxu0 0
    %431 = vmatprep.subr.bf16.mxu0 0
    %432 = vmatpush1.bf16.msra.mxu0 0
    %433 = vmatprep.subr.bf16.mxu0 0
    %434 = vmatpush1.bf16.msra.mxu0 0
    %435 = vmatprep.subr.bf16.mxu0 0
    %436 = vmatpush1.bf16.msra.mxu0 0
    %437 = vmatprep.subr.bf16.mxu0 0
    %438 = vmatpush1.bf16.msra.mxu0 0
    %439 = vmatprep.subr.bf16.mxu0 0
    %440 = vmatpush1.bf16.msra.mxu0 0
    %441 = vmatprep.subr.bf16.mxu0 0
    %442 = vmatpush1.bf16.msra.mxu0 0
    %443 = vmatprep.subr.bf16.mxu0 0
    %444 = vmatpush1.bf16.msra.mxu0 0
    %445 = vmatprep.subr.bf16.mxu0 0
    %446 = vmatpush1.bf16.msra.mxu0 0
    %447 = vmatprep.subr.bf16.mxu0 0
    %448 = vmatpush1.bf16.msra.mxu0 0
    %449 = vmatprep.mubr.bf16.mxu0 0
    %450 = vmatmul.mubr.bf16.gmra.mrb[0].mxu0 %v412
    %v451 = vpop.f32.mrb[0].mxu0
    %v452 = vadd.f32 0.0, %v451
    %v453 = vpop.f32.mrb[0].mxu0
    %v454 = vpop.f32.mrb[0].mxu0
    %v455 = vpop.f32.mrb[0].mxu0
    %456 = vdwg.mxu0
    %v457 = vrcp.pop %v354
    %v458 = vrcp.pop %v357
    %v459 = vmul.f32 %v404, %v457
    %v460 = vmul.f32 %v452, %v458
    %461 = vrot.lane.b32.xlu0 %v235, 120
    %v462 = vpop.permute.xlu0 %461
    %463 = vrot.lane.b32.xlu0 %v235, 104
    %v464 = vpop.permute.xlu0 %463
    %v466 = vsel %vm238, %v462, 0
    %v469 = vsel %vm238, %v464, 0
    %471 = vmatprep.subr.bf16.mxu0 0
    %472 = vmatpush1.bf16.xpose.msra.mxu0 %v469
    %473 = vmatprep.subr.bf16.mxu0 0
    %474 = vmatpush1.bf16.xpose.msra.mxu0 0
    %475 = vmatprep.subr.bf16.mxu0 0
    %476 = vmatpush1.bf16.xpose.msra.mxu0 0
    %477 = vmatprep.subr.bf16.mxu0 0
    %478 = vmatpush1.bf16.xpose.msra.mxu0 0
    %479 = vmatprep.subr.bf16.mxu0 0
    %480 = vmatpush1.bf16.xpose.msra.mxu0 0
    %481 = vmatprep.subr.bf16.mxu0 0
    %482 = vmatpush1.bf16.xpose.msra.mxu0 0
    %483 = vmatprep.subr.bf16.mxu0 0
    %484 = vmatpush1.bf16.xpose.msra.mxu0 0
    %485 = vmatprep.subr.bf16.mxu0 0
    %486 = vmatpush1.bf16.xpose.msra.mxu0 0
    %487 = vmatprep.subr.bf16.mxu0 0
    %488 = vmatpush1.bf16.xpose.msra.mxu0 0
    %489 = vmatprep.subr.bf16.mxu0 0
    %490 = vmatpush1.bf16.xpose.msra.mxu0 0
    %491 = vmatprep.subr.bf16.mxu0 0
    %492 = vmatpush1.bf16.xpose.msra.mxu0 0
    %493 = vmatprep.subr.bf16.mxu0 0
    %494 = vmatpush1.bf16.xpose.msra.mxu0 0
    %495 = vmatprep.subr.bf16.mxu0 0
    %496 = vmatpush1.bf16.xpose.msra.mxu0 0
    %497 = vmatprep.subr.bf16.mxu0 0
    %498 = vmatpush1.bf16.xpose.msra.mxu0 0
    %499 = vmatprep.subr.bf16.mxu0 0
    %500 = vmatpush1.bf16.xpose.msra.mxu0 0
    %501 = vmatprep.subr.bf16.mxu0 0
    %502 = vmatpush1.bf16.xpose.msra.mxu0 0
    %503 = vmatprep.mubr.bf16.mxu0 0
    %504 = vmatmul.mubr.bf16.gmra.mrb[0].mxu0 %v466
    %v505 = vpop.f32.mrb[0].mxu0
    %v506 = vadd.f32 0.0, %v505
    %v507 = vpop.f32.mrb[0].mxu0
    %v508 = vpop.f32.mrb[0].mxu0
    %v509 = vpop.f32.mrb[0].mxu0
    %510 = vdwg.mxu0
    %511 = vrot.lane.b32.xlu0 %v287, 120
    %v512 = vpop.permute.xlu0 %511
    %513 = vrot.lane.b32.xlu0 %v287, 104
    %v514 = vpop.permute.xlu0 %513
    %v516 = vsel %vm238, %v512, 0
    %v519 = vsel %vm238, %v514, 0
    %521 = vmatprep.subr.bf16.mxu0 0
    %522 = vmatpush1.bf16.xpose.msra.mxu0 %v519
    %523 = vmatprep.subr.bf16.mxu0 0
    %524 = vmatpush1.bf16.xpose.msra.mxu0 0
    %525 = vmatprep.subr.bf16.mxu0 0
    %526 = vmatpush1.bf16.xpose.msra.mxu0 0
    %527 = vmatprep.subr.bf16.mxu0 0
    %528 = vmatpush1.bf16.xpose.msra.mxu0 0
    %529 = vmatprep.subr.bf16.mxu0 0
    %530 = vmatpush1.bf16.xpose.msra.mxu0 0
    %531 = vmatprep.subr.bf16.mxu0 0
    %532 = vmatpush1.bf16.xpose.msra.mxu0 0
    %533 = vmatprep.subr.bf16.mxu0 0
    %534 = vmatpush1.bf16.xpose.msra.mxu0 0
    %535 = vmatprep.subr.bf16.mxu0 0
    %536 = vmatpush1.bf16.xpose.msra.mxu0 0
    %537 = vmatprep.subr.bf16.mxu0 0
    %538 = vmatpush1.bf16.xpose.msra.mxu0 0
    %539 = vmatprep.subr.bf16.mxu0 0
    %540 = vmatpush1.bf16.xpose.msra.mxu0 0
    %541 = vmatprep.subr.bf16.mxu0 0
    %542 = vmatpush1.bf16.xpose.msra.mxu0 0
    %543 = vmatprep.subr.bf16.mxu0 0
    %544 = vmatpush1.bf16.xpose.msra.mxu0 0
    %545 = vmatprep.subr.bf16.mxu0 0
    %546 = vmatpush1.bf16.xpose.msra.mxu0 0
    %547 = vmatprep.subr.bf16.mxu0 0
    %548 = vmatpush1.bf16.xpose.msra.mxu0 0
    %549 = vmatprep.subr.bf16.mxu0 0
    %550 = vmatpush1.bf16.xpose.msra.mxu0 0
    %551 = vmatprep.subr.bf16.mxu0 0
    %552 = vmatpush1.bf16.xpose.msra.mxu0 0
    %553 = vmatprep.mubr.bf16.mxu0 0
    %554 = vmatmul.mubr.bf16.gmra.mrb[0].mxu0 %v516
    %v555 = vpop.f32.mrb[0].mxu0
    %v556 = vadd.f32 0.0, %v555
    %v557 = vpop.f32.mrb[0].mxu0
    %v558 = vpop.f32.mrb[0].mxu0
    %v559 = vpop.f32.mrb[0].mxu0
    %560 = vdwg.mxu0
    %v561 = vsel %vm337, -1e+30, %v506
    %v562 = vsel %vm337, -1e+30, %v556
    %v563 = vsel %vm238, %v561, -inf
    %564 = vmax.xlane.f32.xlu0 %v563
    %v565 = vpop.xlane.xlu0 %564
    %v566 = vsel %vm238, %v562, -inf
    %567 = vmax.xlane.f32.xlu0 %v566
    %v568 = vpop.xlane.xlu0 %567
    %v569 = vsub.f32 %v561, %v565
    %v570 = vsub.f32 %v562, %v568
    %v571 = vmul.f32 %v569, 1.442695
    %v572 = vpow.pop %v571
    %v573 = vmul.f32 %v570, 1.442695
    %v574 = vpow.pop %v573
    %v575 = vsel %vm238, %v572, 0.0
    %576 = vadd.xlane.f32.xlu0 %v575
    %v577 = vpop.xlane.xlu0 %576
    %v578 = vsel %vm238, %v574, 0.0
    %579 = vadd.xlane.f32.xlu0 %v578
    %v580 = vpop.xlane.xlu0 %579
    %v581 = vpack.c.bf16 %v572, %v572
    %v582 = vpack.c.bf16 %v574, %v574
    %583 = vrot.lane.b32.xlu0 %v235, 88
    %v584 = vpop.permute.xlu0 %583
    %v586 = vsel %vm238, %v581, 0
    %v589 = vsel %vm365, %v584, 0
    %591 = vmatprep.subr.bf16.mxu0 0
    %592 = vmatpush1.bf16.msra.mxu0 %v589
    %593 = vmatprep.subr.bf16.mxu0 0
    %594 = vmatpush1.bf16.msra.mxu0 0
    %595 = vmatprep.subr.bf16.mxu0 0
    %596 = vmatpush1.bf16.msra.mxu0 0
    %597 = vmatprep.subr.bf16.mxu0 0
    %598 = vmatpush1.bf16.msra.mxu0 0
    %599 = vmatprep.subr.bf16.mxu0 0
    %600 = vmatpush1.bf16.msra.mxu0 0
    %601 = vmatprep.subr.bf16.mxu0 0
    %602 = vmatpush1.bf16.msra.mxu0 0
    %603 = vmatprep.subr.bf16.mxu0 0
    %604 = vmatpush1.bf16.msra.mxu0 0
    %605 = vmatprep.subr.bf16.mxu0 0
    %606 = vmatpush1.bf16.msra.mxu0 0
    %607 = vmatprep.subr.bf16.mxu0 0
    %608 = vmatpush1.bf16.msra.mxu0 0
    %609 = vmatprep.subr.bf16.mxu0 0
    %610 = vmatpush1.bf16.msra.mxu0 0
    %611 = vmatprep.subr.bf16.mxu0 0
    %612 = vmatpush1.bf16.msra.mxu0 0
    %613 = vmatprep.subr.bf16.mxu0 0
    %614 = vmatpush1.bf16.msra.mxu0 0
    %615 = vmatprep.subr.bf16.mxu0 0
    %616 = vmatpush1.bf16.msra.mxu0 0
    %617 = vmatprep.subr.bf16.mxu0 0
    %618 = vmatpush1.bf16.msra.mxu0 0
    %619 = vmatprep.subr.bf16.mxu0 0
    %620 = vmatpush1.bf16.msra.mxu0 0
    %621 = vmatprep.subr.bf16.mxu0 0
    %622 = vmatpush1.bf16.msra.mxu0 0
    %623 = vmatprep.mubr.bf16.mxu0 0
    %624 = vmatmul.mubr.bf16.gmra.mrb[0].mxu0 %v586
    %v625 = vpop.f32.mrb[0].mxu0
    %v626 = vadd.f32 0.0, %v625
    %v627 = vpop.f32.mrb[0].mxu0
    %v628 = vpop.f32.mrb[0].mxu0
    %v629 = vpop.f32.mrb[0].mxu0
    %630 = vdwg.mxu0
    %631 = vrot.lane.b32.xlu0 %v287, 88
    %v632 = vpop.permute.xlu0 %631
    %v634 = vsel %vm238, %v582, 0
    %v637 = vsel %vm365, %v632, 0
    %639 = vmatprep.subr.bf16.mxu0 0
    %640 = vmatpush1.bf16.msra.mxu0 %v637
    %641 = vmatprep.subr.bf16.mxu0 0
    %642 = vmatpush1.bf16.msra.mxu0 0
    %643 = vmatprep.subr.bf16.mxu0 0
    %644 = vmatpush1.bf16.msra.mxu0 0
    %645 = vmatprep.subr.bf16.mxu0 0
    %646 = vmatpush1.bf16.msra.mxu0 0
    %647 = vmatprep.subr.bf16.mxu0 0
    %648 = vmatpush1.bf16.msra.mxu0 0
    %649 = vmatprep.subr.bf16.mxu0 0
    %650 = vmatpush1.bf16.msra.mxu0 0
    %651 = vmatprep.subr.bf16.mxu0 0
    %652 = vmatpush1.bf16.msra.mxu0 0
    %653 = vmatprep.subr.bf16.mxu0 0
    %654 = vmatpush1.bf16.msra.mxu0 0
    %655 = vmatprep.subr.bf16.mxu0 0
    %656 = vmatpush1.bf16.msra.mxu0 0
    %657 = vmatprep.subr.bf16.mxu0 0
    %658 = vmatpush1.bf16.msra.mxu0 0
    %659 = vmatprep.subr.bf16.mxu0 0
    %660 = vmatpush1.bf16.msra.mxu0 0
    %661 = vmatprep.subr.bf16.mxu0 0
    %662 = vmatpush1.bf16.msra.mxu0 0
    %663 = vmatprep.subr.bf16.mxu0 0
    %664 = vmatpush1.bf16.msra.mxu0 0
    %665 = vmatprep.subr.bf16.mxu0 0
    %666 = vmatpush1.bf16.msra.mxu0 0
    %667 = vmatprep.subr.bf16.mxu0 0
    %668 = vmatpush1.bf16.msra.mxu0 0
    %669 = vmatprep.subr.bf16.mxu0 0
    %670 = vmatpush1.bf16.msra.mxu0 0
    %671 = vmatprep.mubr.bf16.mxu0 0
    %672 = vmatmul.mubr.bf16.gmra.mrb[0].mxu0 %v634
    %v673 = vpop.f32.mrb[0].mxu0
    %v674 = vadd.f32 0.0, %v673
    %v675 = vpop.f32.mrb[0].mxu0
    %v676 = vpop.f32.mrb[0].mxu0
    %v677 = vpop.f32.mrb[0].mxu0
    %678 = vdwg.mxu0
    %v679 = vrcp.pop %v577
    %v680 = vrcp.pop %v580
    %v681 = vmul.f32 %v626, %v679
    %v682 = vmul.f32 %v674, %v680
    %685 = vrot.lane.b32.xlu0 %v681, 8
    %v686 = vpop.permute.xlu0 %685
    %687 = vrot.lane.b32.xlu0 %v682, 8
    %v688 = vpop.permute.xlu0 %687
    %v691 = vsel %vm238, %v459, %v686
    %v692 = vsel %vm238, %v460, %v688
    %v693 = vpack.c.bf16 %v692, %v691
    %v694 = vld [vmem:[%s5] sm:$0xf]
    %v695 = vld [vmem:[%s5 + $0x4] sm:$0xf]
    %v696 = vld [vmem:[#allocation3] sm:$0xff]
    %v697 = vld [vmem:[#allocation3 + $0x8] sm:$0xff]
    %v700 = vunpack.c.l.b16 %v694
    %v701 = vunpack.c.l.b16 %v695
    %v702 = vpack.c.b16 %v701, %v700
    %vm704 = vcmask 130048
    %v706 = vsel %vm704, %v693, 0
    %708 = vmatprep.subr.bf16.mxu0 0
    %709 = vmatpush1.bf16.msra.mxu0 %v702
    %710 = vmatprep.subr.bf16.mxu0 0
    %711 = vmatpush1.bf16.msra.mxu0 0
    %712 = vmatprep.subr.bf16.mxu0 0
    %713 = vmatpush1.bf16.msra.mxu0 0
    %714 = vmatprep.subr.bf16.mxu0 0
    %715 = vmatpush1.bf16.msra.mxu0 0
    %716 = vmatprep.subr.bf16.mxu0 0
    %717 = vmatpush1.bf16.msra.mxu0 0
    %718 = vmatprep.subr.bf16.mxu0 0
    %719 = vmatpush1.bf16.msra.mxu0 0
    %720 = vmatprep.subr.bf16.mxu0 0
    %721 = vmatpush1.bf16.msra.mxu0 0
    %722 = vmatprep.subr.bf16.mxu0 0
    %723 = vmatpush1.bf16.msra.mxu0 0
    %724 = vmatprep.subr.bf16.mxu0 0
    %725 = vmatpush1.bf16.msra.mxu0 0
    %726 = vmatprep.subr.bf16.mxu0 0
    %727 = vmatpush1.bf16.msra.mxu0 0
    %728 = vmatprep.subr.bf16.mxu0 0
    %729 = vmatpush1.bf16.msra.mxu0 0
    %730 = vmatprep.subr.bf16.mxu0 0
    %731 = vmatpush1.bf16.msra.mxu0 0
    %732 = vmatprep.subr.bf16.mxu0 0
    %733 = vmatpush1.bf16.msra.mxu0 0
    %734 = vmatprep.subr.bf16.mxu0 0
    %735 = vmatpush1.bf16.msra.mxu0 0
    %736 = vmatprep.subr.bf16.mxu0 0
    %737 = vmatpush1.bf16.msra.mxu0 0
    %738 = vmatprep.subr.bf16.mxu0 0
    %739 = vmatpush1.bf16.msra.mxu0 0
    %740 = vmatprep.mubr.bf16.mxu0 0
    %741 = vmatmul.mubr.bf16.gmra.mrb[0].mxu0 %v706
    %v742 = vpop.f32.mrb[0].mxu0
    %v743 = vadd.f32 0.0, %v742
    %v744 = vpop.f32.mrb[0].mxu0
    %v745 = vpop.f32.mrb[0].mxu0
    %v746 = vadd.f32 0.0, %v745
    %v747 = vpop.f32.mrb[0].mxu0
    %748 = vdwg.mxu0
    %v749 = vadd.f32 %v696, %v743
    %v750 = vadd.f32 %v697, %v746
    %751 = vst.msk [vmem:[#allocation3] sm:$0xff] %vm52, %v749
    %752 = vst.msk [vmem:[#allocation3 + $0x8] sm:$0xff] %vm52, %v750
    %v753 = vld [vmem:[%s204] sm:$0xf]
    %v754 = vld [vmem:[%s204 + $0x4] sm:$0xf]
    %v756 = vunpack.c.l.b16 %v753
    %v757 = vpack.c.b16 %v756, %v756
    %758 = vrot.lane.b32.xlu0 %v757, 112
    %v759 = vpop.permute.xlu0 %758
    %v761 = vsel %vm238, %v753, 0
    %v764 = vsel %vm238, %v759, 0
    %766 = vmatprep.subr.bf16.mxu0 0
    %767 = vmatpush1.bf16.xpose.msra.mxu0 %v764
    %768 = vmatprep.subr.bf16.mxu0 0
    %769 = vmatpush1.bf16.xpose.msra.mxu0 0
    %770 = vmatprep.subr.bf16.mxu0 0
    %771 = vmatpush1.bf16.xpose.msra.mxu0 0
    %772 = vmatprep.subr.bf16.mxu0 0
    %773 = vmatpush1.bf16.xpose.msra.mxu0 0
    %774 = vmatprep.subr.bf16.mxu0 0
    %775 = vmatpush1.bf16.xpose.msra.mxu0 0
    %776 = vmatprep.subr.bf16.mxu0 0
    %777 = vmatpush1.bf16.xpose.msra.mxu0 0
    %778 = vmatprep.subr.bf16.mxu0 0
    %779 = vmatpush1.bf16.xpose.msra.mxu0 0
    %780 = vmatprep.subr.bf16.mxu0 0
    %781 = vmatpush1.bf16.xpose.msra.mxu0 0
    %782 = vmatprep.subr.bf16.mxu0 0
    %783 = vmatpush1.bf16.xpose.msra.mxu0 0
    %784 = vmatprep.subr.bf16.mxu0 0
    %785 = vmatpush1.bf16.xpose.msra.mxu0 0
    %786 = vmatprep.subr.bf16.mxu0 0
    %787 = vmatpush1.bf16.xpose.msra.mxu0 0
    %788 = vmatprep.subr.bf16.mxu0 0
    %789 = vmatpush1.bf16.xpose.msra.mxu0 0
    %790 = vmatprep.subr.bf16.mxu0 0
    %791 = vmatpush1.bf16.xpose.msra.mxu0 0
    %792 = vmatprep.subr.bf16.mxu0 0
    %793 = vmatpush1.bf16.xpose.msra.mxu0 0
    %794 = vmatprep.subr.bf16.mxu0 0
    %795 = vmatpush1.bf16.xpose.msra.mxu0 0
    %796 = vmatprep.subr.bf16.mxu0 0
    %797 = vmatpush1.bf16.xpose.msra.mxu0 0
    %798 = vmatprep.mubr.bf16.mxu0 0
    %799 = vmatmul.mubr.bf16.gmra.mrb[0].mxu0 %v761
    %v800 = vpop.f32.mrb[0].mxu0
    %v801 = vadd.f32 0.0, %v800
    %v802 = vpop.f32.mrb[0].mxu0
    %v803 = vpop.f32.mrb[0].mxu0
    %v804 = vpop.f32.mrb[0].mxu0
    %805 = vdwg.mxu0
    %v807 = vunpack.c.l.b16 %v754
    %v808 = vpack.c.b16 %v807, %v807
    %809 = vrot.lane.b32.xlu0 %v808, 112
    %v810 = vpop.permute.xlu0 %809
    %v812 = vsel %vm238, %v754, 0
    %v815 = vsel %vm238, %v810, 0
    %817 = vmatprep.subr.bf16.mxu0 0
    %818 = vmatpush1.bf16.xpose.msra.mxu0 %v815
    %819 = vmatprep.subr.bf16.mxu0 0
    %820 = vmatpush1.bf16.xpose.msra.mxu0 0
    %821 = vmatprep.subr.bf16.mxu0 0
    %822 = vmatpush1.bf16.xpose.msra.mxu0 0
    %823 = vmatprep.subr.bf16.mxu0 0
    %824 = vmatpush1.bf16.xpose.msra.mxu0 0
    %825 = vmatprep.subr.bf16.mxu0 0
    %826 = vmatpush1.bf16.xpose.msra.mxu0 0
    %827 = vmatprep.subr.bf16.mxu0 0
    %828 = vmatpush1.bf16.xpose.msra.mxu0 0
    %829 = vmatprep.subr.bf16.mxu0 0
    %830 = vmatpush1.bf16.xpose.msra.mxu0 0
    %831 = vmatprep.subr.bf16.mxu0 0
    %832 = vmatpush1.bf16.xpose.msra.mxu0 0
    %833 = vmatprep.subr.bf16.mxu0 0
    %834 = vmatpush1.bf16.xpose.msra.mxu0 0
    %835 = vmatprep.subr.bf16.mxu0 0
    %836 = vmatpush1.bf16.xpose.msra.mxu0 0
    %837 = vmatprep.subr.bf16.mxu0 0
    %838 = vmatpush1.bf16.xpose.msra.mxu0 0
    %839 = vmatprep.subr.bf16.mxu0 0
    %840 = vmatpush1.bf16.xpose.msra.mxu0 0
    %841 = vmatprep.subr.bf16.mxu0 0
    %842 = vmatpush1.bf16.xpose.msra.mxu0 0
    %843 = vmatprep.subr.bf16.mxu0 0
    %844 = vmatpush1.bf16.xpose.msra.mxu0 0
    %845 = vmatprep.subr.bf16.mxu0 0
    %846 = vmatpush1.bf16.xpose.msra.mxu0 0
    %847 = vmatprep.subr.bf16.mxu0 0
    %848 = vmatpush1.bf16.xpose.msra.mxu0 0
    %849 = vmatprep.mubr.bf16.mxu0 0
    %850 = vmatmul.mubr.bf16.gmra.mrb[0].mxu0 %v812
    %v851 = vpop.f32.mrb[0].mxu0
    %v852 = vadd.f32 0.0, %v851
    %v853 = vpop.f32.mrb[0].mxu0
    %v854 = vpop.f32.mrb[0].mxu0
    %v855 = vpop.f32.mrb[0].mxu0
    %856 = vdwg.mxu0
    %v857 = vsel %vm337, -1e+30, %v801
    %v858 = vsel %vm337, -1e+30, %v852
    %v859 = vsel %vm238, %v857, -inf
    %860 = vmax.xlane.f32.xlu0 %v859
    %v861 = vpop.xlane.xlu0 %860
    %v862 = vsel %vm238, %v858, -inf
    %863 = vmax.xlane.f32.xlu0 %v862
    %v864 = vpop.xlane.xlu0 %863
    %v865 = vsub.f32 %v857, %v861
    %v866 = vsub.f32 %v858, %v864
    %v867 = vmul.f32 %v865, 1.442695
    %v868 = vpow.pop %v867
    %v869 = vmul.f32 %v866, 1.442695
    %v870 = vpow.pop %v869
    %v871 = vsel %vm238, %v868, 0.0
    %872 = vadd.xlane.f32.xlu0 %v871
    %v873 = vpop.xlane.xlu0 %872
    %v874 = vsel %vm238, %v870, 0.0
    %875 = vadd.xlane.f32.xlu0 %v874
    %v876 = vpop.xlane.xlu0 %875
    %v877 = vpack.c.bf16 %v868, %v868
    %v878 = vpack.c.bf16 %v870, %v870
    %879 = vrot.lane.b32.xlu0 %v757, 96
    %v880 = vpop.permute.xlu0 %879
    %v882 = vsel %vm238, %v877, 0
    %v885 = vsel %vm365, %v880, 0
    %887 = vmatprep.subr.bf16.mxu0 0
    %888 = vmatpush1.bf16.msra.mxu0 %v885
    %889 = vmatprep.subr.bf16.mxu0 0
    %890 = vmatpush1.bf16.msra.mxu0 0
    %891 = vmatprep.subr.bf16.mxu0 0
    %892 = vmatpush1.bf16.msra.mxu0 0
    %893 = vmatprep.subr.bf16.mxu0 0
    %894 = vmatpush1.bf16.msra.mxu0 0
    %895 = vmatprep.subr.bf16.mxu0 0
    %896 = vmatpush1.bf16.msra.mxu0 0
    %897 = vmatprep.subr.bf16.mxu0 0
    %898 = vmatpush1.bf16.msra.mxu0 0
    %899 = vmatprep.subr.bf16.mxu0 0
    %900 = vmatpush1.bf16.msra.mxu0 0
    %901 = vmatprep.subr.bf16.mxu0 0
    %902 = vmatpush1.bf16.msra.mxu0 0
    %903 = vmatprep.subr.bf16.mxu0 0
    %904 = vmatpush1.bf16.msra.mxu0 0
    %905 = vmatprep.subr.bf16.mxu0 0
    %906 = vmatpush1.bf16.msra.mxu0 0
    %907 = vmatprep.subr.bf16.mxu0 0
    %908 = vmatpush1.bf16.msra.mxu0 0
    %909 = vmatprep.subr.bf16.mxu0 0
    %910 = vmatpush1.bf16.msra.mxu0 0
    %911 = vmatprep.subr.bf16.mxu0 0
    %912 = vmatpush1.bf16.msra.mxu0 0
    %913 = vmatprep.subr.bf16.mxu0 0
    %914 = vmatpush1.bf16.msra.mxu0 0
    %915 = vmatprep.subr.bf16.mxu0 0
    %916 = vmatpush1.bf16.msra.mxu0 0
    %917 = vmatprep.subr.bf16.mxu0 0
    %918 = vmatpush1.bf16.msra.mxu0 0
    %919 = vmatprep.mubr.bf16.mxu0 0
    %920 = vmatmul.mubr.bf16.gmra.mrb[0].mxu0 %v882
    %v921 = vpop.f32.mrb[0].mxu0
    %v922 = vadd.f32 0.0, %v921
    %v923 = vpop.f32.mrb[0].mxu0
    %v924 = vpop.f32.mrb[0].mxu0
    %v925 = vpop.f32.mrb[0].mxu0
    %926 = vdwg.mxu0
    %927 = vrot.lane.b32.xlu0 %v808, 96
    %v928 = vpop.permute.xlu0 %927
    %v930 = vsel %vm238, %v878, 0
    %v933 = vsel %vm365, %v928, 0
    %935 = vmatprep.subr.bf16.mxu0 0
    %936 = vmatpush1.bf16.msra.mxu0 %v933
    %937 = vmatprep.subr.bf16.mxu0 0
    %938 = vmatpush1.bf16.msra.mxu0 0
    %939 = vmatprep.subr.bf16.mxu0 0
    %940 = vmatpush1.bf16.msra.mxu0 0
    %941 = vmatprep.subr.bf16.mxu0 0
    %942 = vmatpush1.bf16.msra.mxu0 0
    %943 = vmatprep.subr.bf16.mxu0 0
    %944 = vmatpush1.bf16.msra.mxu0 0
    %945 = vmatprep.subr.bf16.mxu0 0
    %946 = vmatpush1.bf16.msra.mxu0 0
    %947 = vmatprep.subr.bf16.mxu0 0
    %948 = vmatpush1.bf16.msra.mxu0 0
    %949 = vmatprep.subr.bf16.mxu0 0
    %950 = vmatpush1.bf16.msra.mxu0 0
    %951 = vmatprep.subr.bf16.mxu0 0
    %952 = vmatpush1.bf16.msra.mxu0 0
    %953 = vmatprep.subr.bf16.mxu0 0
    %954 = vmatpush1.bf16.msra.mxu0 0
    %955 = vmatprep.subr.bf16.mxu0 0
    %956 = vmatpush1.bf16.msra.mxu0 0
    %957 = vmatprep.subr.bf16.mxu0 0
    %958 = vmatpush1.bf16.msra.mxu0 0
    %959 = vmatprep.subr.bf16.mxu0 0
    %960 = vmatpush1.bf16.msra.mxu0 0
    %961 = vmatprep.subr.bf16.mxu0 0
    %962 = vmatpush1.bf16.msra.mxu0 0
    %963 = vmatprep.subr.bf16.mxu0 0
    %964 = vmatpush1.bf16.msra.mxu0 0
    %965 = vmatprep.subr.bf16.mxu0 0
    %966 = vmatpush1.bf16.msra.mxu0 0
    %967 = vmatprep.mubr.bf16.mxu0 0
    %968 = vmatmul.mubr.bf16.gmra.mrb[0].mxu0 %v930
    %v969 = vpop.f32.mrb[0].mxu0
    %v970 = vadd.f32 0.0, %v969
    %v971 = vpop.f32.mrb[0].mxu0
    %v972 = vpop.f32.mrb[0].mxu0
    %v973 = vpop.f32.mrb[0].mxu0
    %974 = vdwg.mxu0
    %v975 = vrcp.pop %v873
    %v976 = vrcp.pop %v876
    %v977 = vmul.f32 %v922, %v975
    %v978 = vmul.f32 %v970, %v976
    %979 = vrot.lane.b32.xlu0 %v757, 120
    %v980 = vpop.permute.xlu0 %979
    %981 = vrot.lane.b32.xlu0 %v757, 104
    %v982 = vpop.permute.xlu0 %981
    %v984 = vsel %vm238, %v980, 0
    %v987 = vsel %vm238, %v982, 0
    %989 = vmatprep.subr.bf16.mxu0 0
    %990 = vmatpush1.bf16.xpose.msra.mxu0 %v987
    %991 = vmatprep.subr.bf16.mxu0 0
    %992 = vmatpush1.bf16.xpose.msra.mxu0 0
    %993 = vmatprep.subr.bf16.mxu0 0
    %994 = vmatpush1.bf16.xpose.msra.mxu0 0
    %995 = vmatprep.subr.bf16.mxu0 0
    %996 = vmatpush1.bf16.xpose.msra.mxu0 0
    %997 = vmatprep.subr.bf16.mxu0 0
    %998 = vmatpush1.bf16.xpose.msra.mxu0 0
    %999 = vmatprep.subr.bf16.mxu0 0
    %1000 = vmatpush1.bf16.xpose.msra.mxu0 0
    %1001 = vmatprep.subr.bf16.mxu0 0
    %1002 = vmatpush1.bf16.xpose.msra.mxu0 0
    %1003 = vmatprep.subr.bf16.mxu0 0
    %1004 = vmatpush1.bf16.xpose.msra.mxu0 0
    %1005 = vmatprep.subr.bf16.mxu0 0
    %1006 = vmatpush1.bf16.xpose.msra.mxu0 0
    %1007 = vmatprep.subr.bf16.mxu0 0
    %1008 = vmatpush1.bf16.xpose.msra.mxu0 0
    %1009 = vmatprep.subr.bf16.mxu0 0
    %1010 = vmatpush1.bf16.xpose.msra.mxu0 0
    %1011 = vmatprep.subr.bf16.mxu0 0
    %1012 = vmatpush1.bf16.xpose.msra.mxu0 0
    %1013 = vmatprep.subr.bf16.mxu0 0
    %1014 = vmatpush1.bf16.xpose.msra.mxu0 0
    %1015 = vmatprep.subr.bf16.mxu0 0
    %1016 = vmatpush1.bf16.xpose.msra.mxu0 0
    %1017 = vmatprep.subr.bf16.mxu0 0
    %1018 = vmatpush1.bf16.xpose.msra.mxu0 0
    %1019 = vmatprep.subr.bf16.mxu0 0
    %1020 = vmatpush1.bf16.xpose.msra.mxu0 0
    %1021 = vmatprep.mubr.bf16.mxu0 0
    %1022 = vmatmul.mubr.bf16.gmra.mrb[0].mxu0 %v984
    %v1023 = vpop.f32.mrb[0].mxu0
    %v1024 = vadd.f32 0.0, %v1023
    %v1025 = vpop.f32.mrb[0].mxu0
    %v1026 = vpop.f32.mrb[0].mxu0
    %v1027 = vpop.f32.mrb[0].mxu0
    %1028 = vdwg.mxu0
    %1029 = vrot.lane.b32.xlu0 %v808, 120
    %v1030 = vpop.permute.xlu0 %1029
    %1031 = vrot.lane.b32.xlu0 %v808, 104
    %v1032 = vpop.permute.xlu0 %1031
    %v1034 = vsel %vm238, %v1030, 0
    %v1037 = vsel %vm238, %v1032, 0
    %1039 = vmatprep.subr.bf16.mxu0 0
    %1040 = vmatpush1.bf16.xpose.msra.mxu0 %v1037
    %1041 = vmatprep.subr.bf16.mxu0 0
    %1042 = vmatpush1.bf16.xpose.msra.mxu0 0
    %1043 = vmatprep.subr.bf16.mxu0 0
    %1044 = vmatpush1.bf16.xpose.msra.mxu0 0
    %1045 = vmatprep.subr.bf16.mxu0 0
    %1046 = vmatpush1.bf16.xpose.msra.mxu0 0
    %1047 = vmatprep.subr.bf16.mxu0 0
    %1048 = vmatpush1.bf16.xpose.msra.mxu0 0
    %1049 = vmatprep.subr.bf16.mxu0 0
    %1050 = vmatpush1.bf16.xpose.msra.mxu0 0
    %1051 = vmatprep.subr.bf16.mxu0 0
    %1052 = vmatpush1.bf16.xpose.msra.mxu0 0
    %1053 = vmatprep.subr.bf16.mxu0 0
    %1054 = vmatpush1.bf16.xpose.msra.mxu0 0
    %1055 = vmatprep.subr.bf16.mxu0 0
    %1056 = vmatpush1.bf16.xpose.msra.mxu0 0
    %1057 = vmatprep.subr.bf16.mxu0 0
    %1058 = vmatpush1.bf16.xpose.msra.mxu0 0
    %1059 = vmatprep.subr.bf16.mxu0 0
    %1060 = vmatpush1.bf16.xpose.msra.mxu0 0
    %1061 = vmatprep.subr.bf16.mxu0 0
    %1062 = vmatpush1.bf16.xpose.msra.mxu0 0
    %1063 = vmatprep.subr.bf16.mxu0 0
    %1064 = vmatpush1.bf16.xpose.msra.mxu0 0
    %1065 = vmatprep.subr.bf16.mxu0 0
    %1066 = vmatpush1.bf16.xpose.msra.mxu0 0
    %1067 = vmatprep.subr.bf16.mxu0 0
    %1068 = vmatpush1.bf16.xpose.msra.mxu0 0
    %1069 = vmatprep.subr.bf16.mxu0 0
    %1070 = vmatpush1.bf16.xpose.msra.mxu0 0
    %1071 = vmatprep.mubr.bf16.mxu0 0
    %1072 = vmatmul.mubr.bf16.gmra.mrb[0].mxu0 %v1034
    %v1073 = vpop.f32.mrb[0].mxu0
    %v1074 = vadd.f32 0.0, %v1073
    %v1075 = vpop.f32.mrb[0].mxu0
    %v1076 = vpop.f32.mrb[0].mxu0
    %v1077 = vpop.f32.mrb[0].mxu0
    %1078 = vdwg.mxu0
    %v1079 = vsel %vm337, -1e+30, %v1024
    %v1080 = vsel %vm337, -1e+30, %v1074
    %v1081 = vsel %vm238, %v1079, -inf
    %1082 = vmax.xlane.f32.xlu0 %v1081
    %v1083 = vpop.xlane.xlu0 %1082
    %v1084 = vsel %vm238, %v1080, -inf
    %1085 = vmax.xlane.f32.xlu0 %v1084
    %v1086 = vpop.xlane.xlu0 %1085
    %v1087 = vsub.f32 %v1079, %v1083
    %v1088 = vsub.f32 %v1080, %v1086
    %v1089 = vmul.f32 %v1087, 1.442695
    %v1090 = vpow.pop %v1089
    %v1091 = vmul.f32 %v1088, 1.442695
    %v1092 = vpow.pop %v1091
    %v1093 = vsel %vm238, %v1090, 0.0
    %1094 = vadd.xlane.f32.xlu0 %v1093
    %v1095 = vpop.xlane.xlu0 %1094
    %v1096 = vsel %vm238, %v1092, 0.0
    %1097 = vadd.xlane.f32.xlu0 %v1096
    %v1098 = vpop.xlane.xlu0 %1097
    %v1099 = vpack.c.bf16 %v1090, %v1090
    %v1100 = vpack.c.bf16 %v1092, %v1092
    %1101 = vrot.lane.b32.xlu0 %v757, 88
    %v1102 = vpop.permute.xlu0 %1101
    %v1104 = vsel %vm238, %v1099, 0
    %v1107 = vsel %vm365, %v1102, 0
    %1109 = vmatprep.subr.bf16.mxu0 0
    %1110 = vmatpush1.bf16.msra.mxu0 %v1107
    %1111 = vmatprep.subr.bf16.mxu0 0
    %1112 = vmatpush1.bf16.msra.mxu0 0
    %1113 = vmatprep.subr.bf16.mxu0 0
    %1114 = vmatpush1.bf16.msra.mxu0 0
    %1115 = vmatprep.subr.bf16.mxu0 0
    %1116 = vmatpush1.bf16.msra.mxu0 0
    %1117 = vmatprep.subr.bf16.mxu0 0
    %1118 = vmatpush1.bf16.msra.mxu0 0
    %1119 = vmatprep.subr.bf16.mxu0 0
    %1120 = vmatpush1.bf16.msra.mxu0 0
    %1121 = vmatprep.subr.bf16.mxu0 0
    %1122 = vmatpush1.bf16.msra.mxu0 0
    %1123 = vmatprep.subr.bf16.mxu0 0
    %1124 = vmatpush1.bf16.msra.mxu0 0
    %1125 = vmatprep.subr.bf16.mxu0 0
    %1126 = vmatpush1.bf16.msra.mxu0 0
    %1127 = vmatprep.subr.bf16.mxu0 0
    %1128 = vmatpush1.bf16.msra.mxu0 0
    %1129 = vmatprep.subr.bf16.mxu0 0
    %1130 = vmatpush1.bf16.msra.mxu0 0
    %1131 = vmatprep.subr.bf16.mxu0 0
    %1132 = vmatpush1.bf16.msra.mxu0 0
    %1133 = vmatprep.subr.bf16.mxu0 0
    %1134 = vmatpush1.bf16.msra.mxu0 0
    %1135 = vmatprep.subr.bf16.mxu0 0
    %1136 = vmatpush1.bf16.msra.mxu0 0
    %1137 = vmatprep.subr.bf16.mxu0 0
    %1138 = vmatpush1.bf16.msra.mxu0 0
    %1139 = vmatprep.subr.bf16.mxu0 0
    %1140 = vmatpush1.bf16.msra.mxu0 0
    %1141 = vmatprep.mubr.bf16.mxu0 0
    %1142 = vmatmul.mubr.bf16.gmra.mrb[0].mxu0 %v1104
    %v1143 = vpop.f32.mrb[0].mxu0
    %v1144 = vadd.f32 0.0, %v1143
    %v1145 = vpop.f32.mrb[0].mxu0
    %v1146 = vpop.f32.mrb[0].mxu0
    %v1147 = vpop.f32.mrb[0].mxu0
    %1148 = vdwg.mxu0
    %1149 = vrot.lane.b32.xlu0 %v808, 88
    %v1150 = vpop.permute.xlu0 %1149
    %v1152 = vsel %vm238, %v1100, 0
    %v1155 = vsel %vm365, %v1150, 0
    %1157 = vmatprep.subr.bf16.mxu0 0
    %1158 = vmatpush1.bf16.msra.mxu0 %v1155
    %1159 = vmatprep.subr.bf16.mxu0 0
    %1160 = vmatpush1.bf16.msra.mxu0 0
    %1161 = vmatprep.subr.bf16.mxu0 0
    %1162 = vmatpush1.bf16.msra.mxu0 0
    %1163 = vmatprep.subr.bf16.mxu0 0
    %1164 = vmatpush1.bf16.msra.mxu0 0
    %1165 = vmatprep.subr.bf16.mxu0 0
    %1166 = vmatpush1.bf16.msra.mxu0 0
    %1167 = vmatprep.subr.bf16.mxu0 0
    %1168 = vmatpush1.bf16.msra.mxu0 0
    %1169 = vmatprep.subr.bf16.mxu0 0
    %1170 = vmatpush1.bf16.msra.mxu0 0
    %1171 = vmatprep.subr.bf16.mxu0 0
    %1172 = vmatpush1.bf16.msra.mxu0 0
    %1173 = vmatprep.subr.bf16.mxu0 0
    %1174 = vmatpush1.bf16.msra.mxu0 0
    %1175 = vmatprep.subr.bf16.mxu0 0
    %1176 = vmatpush1.bf16.msra.mxu0 0
    %1177 = vmatprep.subr.bf16.mxu0 0
    %1178 = vmatpush1.bf16.msra.mxu0 0
    %1179 = vmatprep.subr.bf16.mxu0 0
    %1180 = vmatpush1.bf16.msra.mxu0 0
    %1181 = vmatprep.subr.bf16.mxu0 0
    %1182 = vmatpush1.bf16.msra.mxu0 0
    %1183 = vmatprep.subr.bf16.mxu0 0
    %1184 = vmatpush1.bf16.msra.mxu0 0
    %1185 = vmatprep.subr.bf16.mxu0 0
    %1186 = vmatpush1.bf16.msra.mxu0 0
    %1187 = vmatprep.subr.bf16.mxu0 0
    %1188 = vmatpush1.bf16.msra.mxu0 0
    %1189 = vmatprep.mubr.bf16.mxu0 0
    %1190 = vmatmul.mubr.bf16.gmra.mrb[0].mxu0 %v1152
    %v1191 = vpop.f32.mrb[0].mxu0
    %v1192 = vadd.f32 0.0, %v1191
    %v1193 = vpop.f32.mrb[0].mxu0
    %v1194 = vpop.f32.mrb[0].mxu0
    %v1195 = vpop.f32.mrb[0].mxu0
    %1196 = vdwg.mxu0
    %v1197 = vrcp.pop %v1095
    %v1198 = vrcp.pop %v1098
    %v1199 = vmul.f32 %v1144, %v1197
    %v1200 = vmul.f32 %v1192, %v1198
    %1203 = vrot.lane.b32.xlu0 %v1199, 8
    %v1204 = vpop.permute.xlu0 %1203
    %1205 = vrot.lane.b32.xlu0 %v1200, 8
    %v1206 = vpop.permute.xlu0 %1205
    %v1209 = vsel %vm238, %v977, %v1204
    %v1210 = vsel %vm238, %v978, %v1206
    %v1211 = vpack.c.bf16 %v1210, %v1209
    %s1212 = scalar_lea.vmem %s5, 8
    %v1213 = vld [vmem:[%s1212] sm:$0xf]
    %v1214 = vld [vmem:[%s1212 + $0x4] sm:$0xf]
    %v1215 = vld [vmem:[#allocation3] sm:$0xff]
    %v1216 = vld [vmem:[#allocation3 + $0x8] sm:$0xff]
    %v1219 = vunpack.c.l.b16 %v1213
    %v1220 = vunpack.c.l.b16 %v1214
    %v1221 = vpack.c.b16 %v1220, %v1219
    %v1224 = vsel %vm704, %v1211, 0
    %1226 = vmatprep.subr.bf16.mxu0 0
    %1227 = vmatpush1.bf16.msra.mxu0 %v1221
    %1228 = vmatprep.subr.bf16.mxu0 0
    %1229 = vmatpush1.bf16.msra.mxu0 0
    %1230 = vmatprep.subr.bf16.mxu0 0
    %1231 = vmatpush1.bf16.msra.mxu0 0
    %1232 = vmatprep.subr.bf16.mxu0 0
    %1233 = vmatpush1.bf16.msra.mxu0 0
    %1234 = vmatprep.subr.bf16.mxu0 0
    %1235 = vmatpush1.bf16.msra.mxu0 0
    %1236 = vmatprep.subr.bf16.mxu0 0
    %1237 = vmatpush1.bf16.msra.mxu0 0
    %1238 = vmatprep.subr.bf16.mxu0 0
    %1239 = vmatpush1.bf16.msra.mxu0 0
    %1240 = vmatprep.subr.bf16.mxu0 0
    %1241 = vmatpush1.bf16.msra.mxu0 0
    %1242 = vmatprep.subr.bf16.mxu0 0
    %1243 = vmatpush1.bf16.msra.mxu0 0
    %1244 = vmatprep.subr.bf16.mxu0 0
    %1245 = vmatpush1.bf16.msra.mxu0 0
    %1246 = vmatprep.subr.bf16.mxu0 0
    %1247 = vmatpush1.bf16.msra.mxu0 0
    %1248 = vmatprep.subr.bf16.mxu0 0
    %1249 = vmatpush1.bf16.msra.mxu0 0
    %1250 = vmatprep.subr.bf16.mxu0 0
    %1251 = vmatpush1.bf16.msra.mxu0 0
    %1252 = vmatprep.subr.bf16.mxu0 0
    %1253 = vmatpush1.bf16.msra.mxu0 0
    %1254 = vmatprep.subr.bf16.mxu0 0
    %1255 = vmatpush1.bf16.msra.mxu0 0
    %1256 = vmatprep.subr.bf16.mxu0 0
    %1257 = vmatpush1.bf16.msra.mxu0 0
    %1258 = vmatprep.mubr.bf16.mxu0 0
    %1259 = vmatmul.mubr.bf16.gmra.mrb[0].mxu0 %v1224
    %v1260 = vpop.f32.mrb[0].mxu0
    %v1261 = vadd.f32 0.0, %v1260
    %v1262 = vpop.f32.mrb[0].mxu0
    %v1263 = vpop.f32.mrb[0].mxu0
    %v1264 = vadd.f32 0.0, %v1263
    %v1265 = vpop.f32.mrb[0].mxu0
    %1266 = vdwg.mxu0
    %v1267 = vadd.f32 %v1215, %v1261
    %v1268 = vadd.f32 %v1216, %v1264
    %1269 = vst.msk [vmem:[#allocation3] sm:$0xff] %vm52, %v1267
    %1270 = vst.msk [vmem:[#allocation3 + $0x8] sm:$0xff] %vm52, %v1268
    %v1271 = vld [vmem:[#allocation3] sm:$0xff]
    %v1272 = vld [vmem:[#allocation3 + $0x8] sm:$0xff]
    %v1273 = vld [vmem:[%s6] sm:$0x1]
    %v1275 = vlaneseq
    %v1276 = vshrl.u32 %v1275, 7
    %v1277 = vsub.s32 0, %v1276
    %v1278 = vrot.slane %v1273, %v1277
    %v1280 = vadd.f32 %v1271, %v1278
    %v1281 = vadd.f32 %v1272, %v1278
    %v1282 = vadd.f32 %v1280, %v48
    %v1283 = vadd.f32 %v1281, %v49
    %v1284 = vld [vmem:[%s7] sm:$0x1]
    %v1285 = vld [vmem:[%s8] sm:$0x1]
    %v1286 = vsel %vm52, %v1282, 0.0
    %1287 = vadd.xlane.f32.xlu0 %v1286
    %v1288 = vpop.xlane.xlu0 %1287
    %v1289 = vsel %vm52, %v1283, 0.0
    %1290 = vadd.xlane.f32.xlu0 %v1289
    %v1291 = vpop.xlane.xlu0 %1290
    %v1292 = vmul.f32 %v1288, %v59
    %v1293 = vmul.f32 %v1291, %v59
    %v1294 = vsub.f32 %v1282, %v1292
    %v1295 = vsub.f32 %v1283, %v1293
    %v1296 = vmul.f32 %v1294, %v1294
    %v1297 = vmul.f32 %v1295, %v1295
    %v1298 = vsel %vm52, %v1296, 0.0
    %1299 = vadd.xlane.f32.xlu0 %v1298
    %v1300 = vpop.xlane.xlu0 %1299
    %v1301 = vsel %vm52, %v1297, 0.0
    %1302 = vadd.xlane.f32.xlu0 %v1301
    %v1303 = vpop.xlane.xlu0 %1302
    %v1304 = vmul.f32 %v1300, %v59
    %v1305 = vmul.f32 %v1303, %v59
    %v1306 = vadd.f32 %v1304, 1e-05
    %v1307 = vadd.f32 %v1305, 1e-05
    %v1308 = vrsqrt.pop %v1306
    %v1309 = vrsqrt.pop %v1307
    %v1310 = vmul.f32 %v1294, %v1308
    %v1311 = vmul.f32 %v1295, %v1309
    %v1313 = vlaneseq
    %v1314 = vshrl.u32 %v1313, 7
    %v1315 = vsub.s32 0, %v1314
    %v1316 = vrot.slane %v1284, %v1315
    %v1318 = vmul.f32 %v1310, %v1316
    %v1319 = vmul.f32 %v1311, %v1316
    %v1321 = vlaneseq
    %v1322 = vshrl.u32 %v1321, 7
    %v1323 = vsub.s32 0, %v1322
    %v1324 = vrot.slane %v1285, %v1323
    %v1326 = vadd.f32 %v1318, %v1324
    %v1327 = vadd.f32 %v1319, %v1324
    %v1328 = vpack.c.bf16 %v1327, %v1326
    %v1329 = vld [vmem:[%s9] sm:$0xf]
    %v1330 = vld [vmem:[%s9 + $0x4] sm:$0xf]
    %v1331 = vld [vmem:[%s9 + $0x8] sm:$0xf]
    %v1332 = vld [vmem:[%s9 + $0xc] sm:$0xf]
    %v1333 = vld [vmem:[%s10] sm:$0x1]
    %v1335 = vlaneseq
    %v1336 = vshrl.u32 %v1335, 7
    %v1337 = vsub.s32 0, %v1336
    %v1338 = vrot.slane %v1333, %v1337
    %v1344 = vunpack.c.l.b16 %v1329
    %v1345 = vunpack.c.l.b16 %v1330
    %v1346 = vunpack.c.l.b16 %v1331
    %v1347 = vunpack.c.l.b16 %v1332
    %v1348 = vpack.c.b16 %v1345, %v1344
    %v1349 = vpack.c.b16 %v1347, %v1346
    %v1353 = vsel %vm52, %v1328, 0
    %1355 = vmatprep.subr.bf16.mxu0 0
    %1356 = vmatpush1.bf16.msra.mxu0 %v1348
    %1357 = vmatprep.subr.bf16.mxu0 0
    %1358 = vmatpush1.bf16.msra.mxu0 %v1349
    %1359 = vmatprep.subr.bf16.mxu0 0
    %1360 = vmatpush1.bf16.msra.mxu0 0
    %1361 = vmatprep.subr.bf16.mxu0 0
    %1362 = vmatpush1.bf16.msra.mxu0 0
    %1363 = vmatprep.subr.bf16.mxu0 0
    %1364 = vmatpush1.bf16.msra.mxu0 0
    %1365 = vmatprep.subr.bf16.mxu0 0
    %1366 = vmatpush1.bf16.msra.mxu0 0
    %1367 = vmatprep.subr.bf16.mxu0 0
    %1368 = vmatpush1.bf16.msra.mxu0 0
    %1369 = vmatprep.subr.bf16.mxu0 0
    %1370 = vmatpush1.bf16.msra.mxu0 0
    %1371 = vmatprep.subr.bf16.mxu0 0
    %1372 = vmatpush1.bf16.msra.mxu0 0
    %1373 = vmatprep.subr.bf16.mxu0 0
    %1374 = vmatpush1.bf16.msra.mxu0 0
    %1375 = vmatprep.subr.bf16.mxu0 0
    %1376 = vmatpush1.bf16.msra.mxu0 0
    %1377 = vmatprep.subr.bf16.mxu0 0
    %1378 = vmatpush1.bf16.msra.mxu0 0
    %1379 = vmatprep.subr.bf16.mxu0 0
    %1380 = vmatpush1.bf16.msra.mxu0 0
    %1381 = vmatprep.subr.bf16.mxu0 0
    %1382 = vmatpush1.bf16.msra.mxu0 0
    %1383 = vmatprep.subr.bf16.mxu0 0
    %1384 = vmatpush1.bf16.msra.mxu0 0
    %1385 = vmatprep.subr.bf16.mxu0 0
    %1386 = vmatpush1.bf16.msra.mxu0 0
    %1387 = vmatprep.mubr.bf16.mxu0 0
    %1388 = vmatmul.mubr.bf16.gmra.mrb[0].mxu0 %v1353
    %v1389 = vpop.f32.mrb[0].mxu0
    %v1390 = vadd.f32 %v1338, %v1389
    %v1391 = vpop.f32.mrb[0].mxu0
    %v1392 = vpop.f32.mrb[0].mxu0
    %v1393 = vadd.f32 %v1338, %v1392
    %v1394 = vpop.f32.mrb[0].mxu0
    %1395 = vdwg.mxu0
    %v1396 = vpack.c.bf16 %v1393, %v1390
    %v1397 = vmul.bf16 %v1396, 1071267802
    %v1398 = vxor.u32 %v1397, 2147516416
    %v1400 = vmul.bf16 %v1398, 1069105081
    %v1401 = vpow.bf16.pop %v1400
    %v1402 = vadd.bf16 %v1401, 1065369472
    %v1403 = vrcp.bf16.pop %v1402
    %v1404 = vmul.bf16 1065369472, %v1403
    %v1405 = vmul.bf16 %v1396, %v1404
    %v1406 = vld [vmem:[%s11] sm:$0xf]
    %v1407 = vld [vmem:[%s11 + $0x4] sm:$0xf]
    %v1408 = vld [vmem:[%s11 + $0x8] sm:$0xf]
    %v1409 = vld [vmem:[%s11 + $0xc] sm:$0xf]
    %v1410 = vld [vmem:[%s11 + $0x10] sm:$0xf]
    %v1411 = vld [vmem:[%s11 + $0x14] sm:$0xf]
    %v1412 = vld [vmem:[%s11 + $0x18] sm:$0xf]
    %v1413 = vld [vmem:[%s11 + $0x1c] sm:$0xf]
    %v1414 = vld [vmem:[%s11 + $0x20] sm:$0xf]
    %v1415 = vld [vmem:[%s11 + $0x24] sm:$0xf]
    %v1416 = vld [vmem:[%s11 + $0x28] sm:$0xf]
    %v1417 = vld [vmem:[%s11 + $0x2c] sm:$0xf]
    %v1418 = vld [vmem:[%s11 + $0x30] sm:$0xf]
    %v1419 = vld [vmem:[%s11 + $0x34] sm:$0xf]
    %v1420 = vld [vmem:[%s11 + $0x38] sm:$0xf]
    %v1421 = vld [vmem:[%s11 + $0x3c] sm:$0xf]
    %v1422 = vld [vmem:[%s12] sm:$0x1]
    %v1424 = vlaneseq
    %v1425 = vshrl.u32 %v1424, 7
    %v1426 = vsub.s32 0, %v1425
    %v1427 = vrot.slane %v1422, %v1426
    %v1445 = vunpack.c.l.b16 %v1406
    %v1446 = vunpack.c.l.b16 %v1407
    %v1447 = vunpack.c.l.b16 %v1408
    %v1448 = vunpack.c.l.b16 %v1409
    %v1449 = vunpack.c.l.b16 %v1410
    %v1450 = vunpack.c.l.b16 %v1411
    %v1451 = vunpack.c.l.b16 %v1412
    %v1452 = vunpack.c.l.b16 %v1413
    %v1453 = vunpack.c.l.b16 %v1414
    %v1454 = vunpack.c.l.b16 %v1415
    %v1455 = vunpack.c.l.b16 %v1416
    %v1456 = vunpack.c.l.b16 %v1417
    %v1457 = vunpack.c.l.b16 %v1418
    %v1458 = vunpack.c.l.b16 %v1419
    %v1459 = vunpack.c.l.b16 %v1420
    %v1460 = vunpack.c.l.b16 %v1421
    %v1461 = vpack.c.b16 %v1446, %v1445
    %v1462 = vpack.c.b16 %v1448, %v1447
    %v1463 = vpack.c.b16 %v1450, %v1449
    %v1464 = vpack.c.b16 %v1452, %v1451
    %v1465 = vpack.c.b16 %v1454, %v1453
    %v1466 = vpack.c.b16 %v1456, %v1455
    %v1467 = vpack.c.b16 %v1458, %v1457
    %v1468 = vpack.c.b16 %v1460, %v1459
    %1477 = vmatprep.subr.bf16.mxu0 0
    %1478 = vmatpush1.bf16.msra.mxu0 %v1461
    %1479 = vmatprep.subr.bf16.mxu0 0
    %1480 = vmatpush1.bf16.msra.mxu0 %v1462
    %1481 = vmatprep.subr.bf16.mxu0 0
    %1482 = vmatpush1.bf16.msra.mxu0 %v1463
    %1483 = vmatprep.subr.bf16.mxu0 0
    %1484 = vmatpush1.bf16.msra.mxu0 %v1464
    %1485 = vmatprep.subr.bf16.mxu0 0
    %1486 = vmatpush1.bf16.msra.mxu0 %v1465
    %1487 = vmatprep.subr.bf16.mxu0 0
    %1488 = vmatpush1.bf16.msra.mxu0 %v1466
    %1489 = vmatprep.subr.bf16.mxu0 0
    %1490 = vmatpush1.bf16.msra.mxu0 %v1467
    %1491 = vmatprep.subr.bf16.mxu0 0
    %1492 = vmatpush1.bf16.msra.mxu0 %v1468
    %1493 = vmatprep.subr.bf16.mxu0 0
    %1494 = vmatpush1.bf16.msra.mxu0 0
    %1495 = vmatprep.subr.bf16.mxu0 0
    %1496 = vmatpush1.bf16.msra.mxu0 0
    %1497 = vmatprep.subr.bf16.mxu0 0
    %1498 = vmatpush1.bf16.msra.mxu0 0
    %1499 = vmatprep.subr.bf16.mxu0 0
    %1500 = vmatpush1.bf16.msra.mxu0 0
    %1501 = vmatprep.subr.bf16.mxu0 0
    %1502 = vmatpush1.bf16.msra.mxu0 0
    %1503 = vmatprep.subr.bf16.mxu0 0
    %1504 = vmatpush1.bf16.msra.mxu0 0
    %1505 = vmatprep.subr.bf16.mxu0 0
    %1506 = vmatpush1.bf16.msra.mxu0 0
    %1507 = vmatprep.subr.bf16.mxu0 0
    %1508 = vmatpush1.bf16.msra.mxu0 0
    %1509 = vmatprep.mubr.bf16.mxu0 0
    %1510 = vmatmul.mubr.bf16.gmra.mrb[0].mxu0 %v1405
    %v1511 = vpop.f32.mrb[0].mxu0
    %v1512 = vadd.f32 %v1427, %v1511
    %v1513 = vpop.f32.mrb[0].mxu0
    %v1514 = vpop.f32.mrb[0].mxu0
    %v1515 = vadd.f32 %v1427, %v1514
    %v1516 = vpop.f32.mrb[0].mxu0
    %1517 = vdwg.mxu0
    %v1518 = vadd.f32 %v1512, %v1282
    %v1519 = vadd.f32 %v1515, %v1283
    %1520 = vst.msk [vmem:[#allocation4] sm:$0xff] %vm52, %v1518
    %1521 = vst.msk [vmem:[#allocation4 + $0x8] sm:$0xff] %vm52, %v1519
    // Predicated region
    $region54: #{tpu_custom_call.1} parent=1 // pred_check
      _
    $region55: #{tpu_custom_call.1} parent=1 // pred_check_branch
      %1523 = sbr.rel (0) target = $region57
    $region56: #{tpu_custom_call.1} parent=1 // pred_region
      %s1525 = ssub.s32 256, 256
      %1526 = vsyncadd [#allocation5], %s1525
      %s1527 = sshll.u32 [#allocation4], 4
      %s1528 = int_to_ptr.vmem [resolvable:$true] %s1527
      %1533 = dma.vmem_to_hbm [thread:$0]  %s1528, 256, %s13, [#allocation5], 128, 128, 8
    $region57: #{tpu_custom_call.1} parent=1 // pred_fallthru
      _
    // Predicated region
    $region58: #{tpu_custom_call.1} parent=1 // pred_check
      _
    $region59: #{tpu_custom_call.1} parent=1 // pred_check_branch
      %1535 = sbr.rel (0) target = $region61
    $region60: #{tpu_custom_call.1} parent=1 // pred_region
      %1536 = dma.done [#allocation5], 256
    $region61: #{tpu_custom_call.1} parent=1 // pred_fallthru
      _
    %1537 = vsyncpa [#allocation5], 1

// kernel: tpu_custom_call.1
$region0: #{tpu_custom_call.1}
  #allocation0 [shape = 'u32[]', space=smem, size = 0x4, offset = 0x4, fixed_abs, tag = 'smem constant byte address 0x4 - core index']
  #allocation1 [shape = 'u32[144,128]{1,0:T(1,128)}', space=vmem, size = 0x12000, scoped, tag = 'internal scratch']
  #allocation2 [shape = 'bf16[2,2,8,48]{3,2,1,0:T(8,128)(2,1)}', space=vmem, size = 0x2000, scoped, tag = 'scratch operand']
  #allocation3 [shape = 'f32[16,32]{1,0:T(8,128)}', space=vmem, size = 0x2000, scoped, tag = 'scratch operand']
  %s0 = inlined_call_operand.vmem [shape: f32[2,8,32], index: 0, kind: input, shape index: {}]
  %s1 = inlined_call_operand.vmem [shape: f32[1,32], index: 1, kind: input, shape index: {}]
  %s2 = inlined_call_operand.vmem [shape: f32[1,32], index: 2, kind: input, shape index: {}]
  %s3 = inlined_call_operand.vmem [shape: bf16[32,96], index: 3, kind: input, shape index: {}]
  %s4 = inlined_call_operand.vmem [shape: f32[1,96], index: 4, kind: input, shape index: {}]
  %s5 = inlined_call_operand.vmem [shape: bf16[32,32], index: 5, kind: input, shape index: {}]
  %s6 = inlined_call_operand.vmem [shape: f32[1,32], index: 6, kind: input, shape index: {}]
  %s7 = inlined_call_operand.vmem [shape: f32[1,32], index: 7, kind: input, shape index: {}]
  %s8 = inlined_call_operand.vmem [shape: f32[1,32], index: 8, kind: input, shape index: {}]
  %s9 = inlined_call_operand.vmem [shape: bf16[32,128], index: 9, kind: input, shape index: {}]
  %s10 = inlined_call_operand.vmem [shape: f32[1,128], index: 10, kind: input, shape index: {}]
  %s11 = inlined_call_operand.vmem [shape: bf16[128,32], index: 11, kind: input, shape index: {}]
  %s12 = inlined_call_operand.vmem [shape: f32[1,32], index: 12, kind: input, shape index: {}]
  %s13 = inlined_call_operand.hbm [shape: f32[2,8,32], index: 13, kind: output, shape index: {}]
  %s14 = sld [smem:[#allocation0]]
  $region62: #{tpu_custom_call.1} parent=0
    _
  %s16 = ssub.s32 1, %s14
  %s17 = scalar_select 0, %s16, %s14
  $region1: #{tpu_custom_call.1} parent=0
    #allocation4 [shape = 'u8[8192]{0}', space=vmem, size = 0x2000, scoped, tag = 'output window, operand 0, single buffered']
    #allocation5 [shape = 's32[1]{0}', space=sflag, size = 0x4, scoped, tag = 'scoped memory for tpu_custom_call.1']
    %18 = vsyncpa [#allocation5], 0
    // Predicated region
    $region2: #{tpu_custom_call.1} parent=1 // pred_check
      _
    $region3: #{tpu_custom_call.1} parent=1 // pred_check_branch
      %20 = sbr.rel (0) target = $region5
    $region4: #{tpu_custom_call.1} parent=1 // pred_region
      _
    $region5: #{tpu_custom_call.1} parent=1 // pred_fallthru
      _
    // Predicated region
    $region6: #{tpu_custom_call.1} parent=1 // pred_check
      _
    $region7: #{tpu_custom_call.1} parent=1 // pred_check_branch
      %22 = sbr.rel (0) target = $region9
    $region8: #{tpu_custom_call.1} parent=1 // pred_region
      _
    $region9: #{tpu_custom_call.1} parent=1 // pred_fallthru
      _
    // Predicated region
    $region10: #{tpu_custom_call.1} parent=1 // pred_check
      _
    $region11: #{tpu_custom_call.1} parent=1 // pred_check_branch
      %24 = sbr.rel (0) target = $region13
    $region12: #{tpu_custom_call.1} parent=1 // pred_region
      _
    $region13: #{tpu_custom_call.1} parent=1 // pred_fallthru
      _
    // Predicated region
    $region14: #{tpu_custom_call.1} parent=1 // pred_check
      _
    $region15: #{tpu_custom_call.1} parent=1 // pred_check_branch
      %26 = sbr.rel (0) target = $region17
    $region16: #{tpu_custom_call.1} parent=1 // pred_region
      _
    $region17: #{tpu_custom_call.1} parent=1 // pred_fallthru
      _
    // Predicated region
    $region18: #{tpu_custom_call.1} parent=1 // pred_check
      _
    $region19: #{tpu_custom_call.1} parent=1 // pred_check_branch
      %28 = sbr.rel (0) target = $region21
    $region20: #{tpu_custom_call.1} parent=1 // pred_region
      _
    $region21: #{tpu_custom_call.1} parent=1 // pred_fallthru
      _
    // Predicated region
    $region22: #{tpu_custom_call.1} parent=1 // pred_check
      _
    $region23: #{tpu_custom_call.1} parent=1 // pred_check_branch
      %30 = sbr.rel (0) target = $region25
    $region24: #{tpu_custom_call.1} parent=1 // pred_region
      _
    $region25: #{tpu_custom_call.1} parent=1 // pred_fallthru
      _
    // Predicated region
    $region26: #{tpu_custom_call.1} parent=1 // pred_check
      _
    $region27: #{tpu_custom_call.1} parent=1 // pred_check_branch
      %32 = sbr.rel (0) target = $region29
    $region28: #{tpu_custom_call.1} parent=1 // pred_region
      _
    $region29: #{tpu_custom_call.1} parent=1 // pred_fallthru
      _
    // Predicated region
    $region30: #{tpu_custom_call.1} parent=1 // pred_check
      _
    $region31: #{tpu_custom_call.1} parent=1 // pred_check_branch
      %34 = sbr.rel (0) target = $region33
    $region32: #{tpu_custom_call.1} parent=1 // pred_region
      _
    $region33: #{tpu_custom_call.1} parent=1 // pred_fallthru
      _
    // Predicated region
    $region34: #{tpu_custom_call.1} parent=1 // pred_check
      _
    $region35: #{tpu_custom_call.1} parent=1 // pred_check_branch
      %36 = sbr.rel (0) target = $region37
    $region36: #{tpu_custom_call.1} parent=1 // pred_region
      _
    $region37: #{tpu_custom_call.1} parent=1 // pred_fallthru
      _
    // Predicated region
    $region38: #{tpu_custom_call.1} parent=1 // pred_check
      _
    $region39: #{tpu_custom_call.1} parent=1 // pred_check_branch
      %38 = sbr.rel (0) target = $region41
    $region40: #{tpu_custom_call.1} parent=1 // pred_region
      _
    $region41: #{tpu_custom_call.1} parent=1 // pred_fallthru
      _
    // Predicated region
    $region42: #{tpu_custom_call.1} parent=1 // pred_check
      _
    $region43: #{tpu_custom_call.1} parent=1 // pred_check_branch
      %40 = sbr.rel (0) target = $region45
    $region44: #{tpu_custom_call.1} parent=1 // pred_region
      _
    $region45: #{tpu_custom_call.1} parent=1 // pred_fallthru
      _
    // Predicated region
    $region46: #{tpu_custom_call.1} parent=1 // pred_check
      _
    $region47: #{tpu_custom_call.1} parent=1 // pred_check_branch
      %42 = sbr.rel (0) target = $region49
    $region48: #{tpu_custom_call.1} parent=1 // pred_region
      _
    $region49: #{tpu_custom_call.1} parent=1 // pred_fallthru
      _
    // Predicated region
    $region50: #{tpu_custom_call.1} parent=1 // pred_check
      _
    $region51: #{tpu_custom_call.1} parent=1 // pred_check_branch
      %44 = sbr.rel (0) target = $region53
    $region52: #{tpu_custom_call.1} parent=1 // pred_region
      _
    $region53: #{tpu_custom_call.1} parent=1 // pred_fallthru
      _
    %v48 = vld [vmem:[%s0] sm:$0xff]
    %v49 = vld [vmem:[%s0 + $0x8] sm:$0xff]
    %v50 = vld [vmem:[%s1] sm:$0x1]
    %v51 = vld [vmem:[%s2] sm:$0x1]
    %vm52 = vcmask 261120
    %v53 = vsel %vm52, %v48, 0.0
    %54 = vadd.xlane.f32.xlu0 %v53
    %v55 = vpop.xlane.xlu0 %54
    %v56 = vsel %vm52, %v49, 0.0
    %57 = vadd.xlane.f32.xlu0 %v56
    %v58 = vpop.xlane.xlu0 %57
    %v59 = vrcp.pop 32.0
    %v60 = vmul.f32 %v55, %v59
    %v61 = vmul.f32 %v58, %v59
    %v62 = vsub.f32 %v48, %v60
    %v63 = vsub.f32 %v49, %v61
    %v64 = vmul.f32 %v62, %v62
    %v65 = vmul.f32 %v63, %v63
    %v66 = vsel %vm52, %v64, 0.0
    %67 = vadd.xlane.f32.xlu0 %v66
    %v68 = vpop.xlane.xlu0 %67
    %v69 = vsel %vm52, %v65, 0.0
    %70 = vadd.xlane.f32.xlu0 %v69
    %v71 = vpop.xlane.xlu0 %70
    %v72 = vmul.f32 %v68, %v59
    %v73 = vmul.f32 %v71, %v59
    %v74 = vadd.f32 %v72, 1e-05
    %v75 = vadd.f32 %v73, 1e-05
    %v76 = vrsqrt.pop %v74
    %v77 = vrsqrt.pop %v75
    %v78 = vmul.f32 %v62, %v76
    %v79 = vmul.f32 %v63, %v77
    %v81 = vlaneseq
    %v82 = vshrl.u32 %v81, 7
    %v83 = vsub.s32 0, %v82
    %v84 = vrot.slane %v50, %v83
    %v86 = vmul.f32 %v78, %v84
    %v87 = vmul.f32 %v79, %v84
    %v89 = vlaneseq
    %v90 = vshrl.u32 %v89, 7
    %v91 = vsub.s32 0, %v90
    %v92 = vrot.slane %v51, %v91
    %v94 = vadd.f32 %v86, %v92
    %v95 = vadd.f32 %v87, %v92
    %v96 = vpack.c.bf16 %v95, %v94
    %v97 = vld [vmem:[%s3] sm:$0xf]
    %v98 = vld [vmem:[%s3 + $0x4] sm:$0xf]
    %v99 = vld [vmem:[%s3 + $0x8] sm:$0xf]
    %v100 = vld [vmem:[%s3 + $0xc] sm:$0xf]
    %v101 = vld [vmem:[%s4] sm:$0x1]
    %v103 = vlaneseq
    %v104 = vshrl.u32 %v103, 7
    %v105 = vsub.s32 0, %v104
    %v106 = vrot.slane %v101, %v105
    %v112 = vunpack.c.l.b16 %v97
    %v113 = vunpack.c.l.b16 %v98
    %v114 = vunpack.c.l.b16 %v99
    %v115 = vunpack.c.l.b16 %v100
    %v116 = vpack.c.b16 %v113, %v112
    %v117 = vpack.c.b16 %v115, %v114
    %v121 = vsel %vm52, %v96, 0
    %123 = vmatprep.subr.bf16.mxu0 0
    %124 = vmatpush1.bf16.msra.mxu0 %v116
    %125 = vmatprep.subr.bf16.mxu0 0
    %126 = vmatpush1.bf16.msra.mxu0 %v117
    %127 = vmatprep.subr.bf16.mxu0 0
    %128 = vmatpush1.bf16.msra.mxu0 0
    %129 = vmatprep.subr.bf16.mxu0 0
    %130 = vmatpush1.bf16.msra.mxu0 0
    %131 = vmatprep.subr.bf16.mxu0 0
    %132 = vmatpush1.bf16.msra.mxu0 0
    %133 = vmatprep.subr.bf16.mxu0 0
    %134 = vmatpush1.bf16.msra.mxu0 0
    %135 = vmatprep.subr.bf16.mxu0 0
    %136 = vmatpush1.bf16.msra.mxu0 0
    %137 = vmatprep.subr.bf16.mxu0 0
    %138 = vmatpush1.bf16.msra.mxu0 0
    %139 = vmatprep.subr.bf16.mxu0 0
    %140 = vmatpush1.bf16.msra.mxu0 0
    %141 = vmatprep.subr.bf16.mxu0 0
    %142 = vmatpush1.bf16.msra.mxu0 0
    %143 = vmatprep.subr.bf16.mxu0 0
    %144 = vmatpush1.bf16.msra.mxu0 0
    %145 = vmatprep.subr.bf16.mxu0 0
    %146 = vmatpush1.bf16.msra.mxu0 0
    %147 = vmatprep.subr.bf16.mxu0 0
    %148 = vmatpush1.bf16.msra.mxu0 0
    %149 = vmatprep.subr.bf16.mxu0 0
    %150 = vmatpush1.bf16.msra.mxu0 0
    %151 = vmatprep.subr.bf16.mxu0 0
    %152 = vmatpush1.bf16.msra.mxu0 0
    %153 = vmatprep.subr.bf16.mxu0 0
    %154 = vmatpush1.bf16.msra.mxu0 0
    %155 = vmatprep.mubr.bf16.mxu0 0
    %156 = vmatmul.mubr.bf16.gmra.mrb[0].mxu0 %v121
    %v157 = vpop.f32.mrb[0].mxu0
    %v158 = vadd.f32 %v106, %v157
    %v159 = vpop.f32.mrb[0].mxu0
    %v160 = vpop.f32.mrb[0].mxu0
    %v161 = vadd.f32 %v106, %v160
    %v162 = vpop.f32.mrb[0].mxu0
    %163 = vdwg.mxu0
    %v164 = vmul.f32 %v158, 0.35355338
    %v165 = vmul.f32 %v161, 0.35355338
    %v166 = vpack.c.bf16 %v164, %v164
    %vm167 = vcmask 125952
    %168 = vst.msk [vmem:[#allocation2] sm:$0xf] %vm167, %v166
    %v169 = vpack.c.bf16 %v158, %v158
    %v171 = vunpack.c.l.b16 %v169
    %v172 = vpack.c.b16 %v171, %v171
    %173 = vrot.lane.b32.xlu0 %v172, 112
    %v174 = vpop.permute.xlu0 %173
    %vm176 = vcmask 257152
    %177 = vst.msk [vmem:[#allocation2] sm:$0xf] %vm176, %v174
    %178 = vrot.lane.b32.xlu0 %v172, 96
    %v179 = vpop.permute.xlu0 %178
    %vm181 = vcmask 388352
    %182 = vst.msk [vmem:[#allocation2] sm:$0xf] %vm181, %v179
    %v183 = vpack.c.bf16 %v165, %v165
    %s184 = scalar_lea.vmem [#allocation2], 4
    %185 = vst.msk [vmem:[%s184] sm:$0xf] %vm167, %v183
    %v186 = vpack.c.bf16 %v161, %v161
    %v188 = vunpack.c.l.b16 %v186
    %v189 = vpack.c.b16 %v188, %v188
    %190 = vrot.lane.b32.xlu0 %v189, 112
    %v191 = vpop.permute.xlu0 %190
    %193 = vst.msk [vmem:[%s184] sm:$0xf] %vm176, %v191
    %194 = vrot.lane.b32.xlu0 %v189, 96
    %v195 = vpop.permute.xlu0 %194
    %197 = vst.msk [vmem:[%s184] sm:$0xf] %vm181, %v195
    %v199 = vunpack.c.l.b16 %v166
    %v200 = vpack.c.b16 %v199, %v199
    %201 = vrot.lane.b32.xlu0 %v200, 112
    %v202 = vpop.permute.xlu0 %201
    %s204 = scalar_lea.vmem [#allocation2], 8
    %205 = vst.msk [vmem:[%s204] sm:$0xf] %vm167, %v202
    %206 = vst.msk [vmem:[%s204] sm:$0xf] %vm176, %v179
    %207 = vrot.lane.b32.xlu0 %v172, 80
    %v208 = vpop.permute.xlu0 %207
    %210 = vst.msk [vmem:[%s204] sm:$0xf] %vm181, %v208
    %v212 = vunpack.c.l.b16 %v183
    %v213 = vpack.c.b16 %v212, %v212
    %214 = vrot.lane.b32.xlu0 %v213, 112
    %v215 = vpop.permute.xlu0 %214
    %s217 = scalar_lea.vmem [#allocation2], 12
    %218 = vst.msk [vmem:[%s217] sm:$0xf] %vm167, %v215
    %219 = vst.msk [vmem:[%s217] sm:$0xf] %vm176, %v195
    %220 = vrot.lane.b32.xlu0 %v189, 80
    %v221 = vpop.permute.xlu0 %220
    %223 = vst.msk [vmem:[%s217] sm:$0xf] %vm181, %v221
    %v224 = vlaneseq
    %v225 = vshrl.u32 %v224, 7
    %v226 = vlaneseq
    %v227 = vand.u32 %v226, 127
    %vm228 = vcmp.gt.s32.totalorder %v227, %v225
    %229 = vst.msk [vmem:[#allocation3] sm:$0xff] %vm52, 0.0
    %230 = vst.msk [vmem:[#allocation3 + $0x8] sm:$0xff] %vm52, 0.0
    %v231 = vld [vmem:[#allocation2] sm:$0xf]
    %v232 = vld [vmem:[#allocation2 + $0x4] sm:$0xf]
    %v234 = vunpack.c.l.b16 %v231
    %v235 = vpack.c.b16 %v234, %v234
    %236 = vrot.lane.b32.xlu0 %v235, 112
    %v237 = vpop.permute.xlu0 %236
    %vm238 = vcmask 64512
    %v240 = vsel %vm238, %v231, 0
    %v243 = vsel %vm238, %v237, 0
    %245 = vmatprep.subr.bf16.mxu0 0
    %246 = vmatpush1.bf16.xpose.msra.mxu0 %v243
    %247 = vmatprep.subr.bf16.mxu0 0
    %248 = vmatpush1.bf16.xpose.msra.mxu0 0
    %249 = vmatprep.subr.bf16.mxu0 0
    %250 = vmatpush1.bf16.xpose.msra.mxu0 0
    %251 = vmatprep.subr.bf16.mxu0 0
    %252 = vmatpush1.bf16.xpose.msra.mxu0 0
    %253 = vmatprep.subr.bf16.mxu0 0
    %254 = vmatpush1.bf16.xpose.msra.mxu0 0
    %255 = vmatprep.subr.bf16.mxu0 0
    %256 = vmatpush1.bf16.xpose.msra.mxu0 0
    %257 = vmatprep.subr.bf16.mxu0 0
    %258 = vmatpush1.bf16.xpose.msra.mxu0 0
    %259 = vmatprep.subr.bf16.mxu0 0
    %260 = vmatpush1.bf16.xpose.msra.mxu0 0
    %261 = vmatprep.subr.bf16.mxu0 0
    %262 = vmatpush1.bf16.xpose.msra.mxu0 0
    %263 = vmatprep.subr.bf16.mxu0 0
    %264 = vmatpush1.bf16.xpose.msra.mxu0 0
    %265 = vmatprep.subr.bf16.mxu0 0
    %266 = vmatpush1.bf16.xpose.msra.mxu0 0
    %267 = vmatprep.subr.bf16.mxu0 0
    %268 = vmatpush1.bf16.xpose.msra.mxu0 0
    %269 = vmatprep.subr.bf16.mxu0 0
    %270 = vmatpush1.bf16.xpose.msra.mxu0 0
    %271 = vmatprep.subr.bf16.mxu0 0
    %272 = vmatpush1.bf16.xpose.msra.mxu0 0
    %273 = vmatprep.subr.bf16.mxu0 0
    %274 = vmatpush1.bf16.xpose.msra.mxu0 0
    %275 = vmatprep.subr.bf16.mxu0 0
    %276 = vmatpush1.bf16.xpose.msra.mxu0 0
    %277 = vmatprep.mubr.bf16.mxu0 0
    %278 = vmatmul.mubr.bf16.gmra.mrb[0].mxu0 %v240
    %v279 = vpop.f32.mrb[0].mxu0
    %v280 = vadd.f32 0.0, %v279
    %v281 = vpop.f32.mrb[0].mxu0
    %v282 = vpop.f32.mrb[0].mxu0
    %v283 = vpop.f32.mrb[0].mxu0
    %284 = vdwg.mxu0
    %v286 = vunpack.c.l.b16 %v232
    %v287 = vpack.c.b16 %v286, %v286
    %288 = vrot.lane.b32.xlu0 %v287, 112
    %v289 = vpop.permute.xlu0 %288
    %v291 = vsel %vm238, %v232, 0
    %v294 = vsel %vm238, %v289, 0
    %296 = vmatprep.subr.bf16.mxu0 0
    %297 = vmatpush1.bf16.xpose.msra.mxu0 %v294
    %298 = vmatprep.subr.bf16.mxu0 0
    %299 = vmatpush1.bf16.xpose.msra.mxu0 0
    %300 = vmatprep.subr.bf16.mxu0 0
    %301 = vmatpush1.bf16.xpose.msra.mxu0 0
    %302 = vmatprep.subr.bf16.mxu0 0
    %303 = vmatpush1.bf16.xpose.msra.mxu0 0
    %304 = vmatprep.subr.bf16.mxu0 0
    %305 = vmatpush1.bf16.xpose.msra.mxu0 0
    %306 = vmatprep.subr.bf16.mxu0 0
    %307 = vmatpush1.bf16.xpose.msra.mxu0 0
    %308 = vmatprep.subr.bf16.mxu0 0
    %309 = vmatpush1.bf16.xpose.msra.mxu0 0
    %310 = vmatprep.subr.bf16.mxu0 0
    %311 = vmatpush1.bf16.xpose.msra.mxu0 0
    %312 = vmatprep.subr.bf16.mxu0 0
    %313 = vmatpush1.bf16.xpose.msra.mxu0 0
    %314 = vmatprep.subr.bf16.mxu0 0
    %315 = vmatpush1.bf16.xpose.msra.mxu0 0
    %316 = vmatprep.subr.bf16.mxu0 0
    %317 = vmatpush1.bf16.xpose.msra.mxu0 0
    %318 = vmatprep.subr.bf16.mxu0 0
    %319 = vmatpush1.bf16.xpose.msra.mxu0 0
    %320 = vmatprep.subr.bf16.mxu0 0
    %321 = vmatpush1.bf16.xpose.msra.mxu0 0
    %322 = vmatprep.subr.bf16.mxu0 0
    %323 = vmatpush1.bf16.xpose.msra.mxu0 0
    %324 = vmatprep.subr.bf16.mxu0 0
    %325 = vmatpush1.bf16.xpose.msra.mxu0 0
    %326 = vmatprep.subr.bf16.mxu0 0
    %327 = vmatpush1.bf16.xpose.msra.mxu0 0
    %328 = vmatprep.mubr.bf16.mxu0 0
    %329 = vmatmul.mubr.bf16.gmra.mrb[0].mxu0 %v291
    %v330 = vpop.f32.mrb[0].mxu0
    %v331 = vadd.f32 0.0, %v330
    %v332 = vpop.f32.mrb[0].mxu0
    %v333 = vpop.f32.mrb[0].mxu0
    %v334 = vpop.f32.mrb[0].mxu0
    %335 = vdwg.mxu0
    %v336 = vsel %vm228, 1, 0
    %vm337 = vcmp.eq.s32.totalorder %v336, 1
    %v338 = vsel %vm337, -1e+30, %v280
    %v339 = vsel %vm337, -1e+30, %v331
    %v340 = vsel %vm238, %v338, -inf
    %341 = vmax.xlane.f32.xlu0 %v340
    %v342 = vpop.xlane.xlu0 %341
    %v343 = vsel %vm238, %v339, -inf
    %344 = vmax.xlane.f32.xlu0 %v343
    %v345 = vpop.xlane.xlu0 %344
    %v346 = vsub.f32 %v338, %v342
    %v347 = vsub.f32 %v339, %v345
    %v348 = vmul.f32 %v346, 1.442695
    %v349 = vpow.pop %v348
    %v350 = vmul.f32 %v347, 1.442695
    %v351 = vpow.pop %v350
    %v352 = vsel %vm238, %v349, 0.0
    %353 = vadd.xlane.f32.xlu0 %v352
    %v354 = vpop.xlane.xlu0 %353
    %v355 = vsel %vm238, %v351, 0.0
    %356 = vadd.xlane.f32.xlu0 %v355
    %v357 = vpop.xlane.xlu0 %356
    %v358 = vpack.c.bf16 %v349, %v349
    %v359 = vpack.c.bf16 %v351, %v351
    %360 = vrot.lane.b32.xlu0 %v235, 96
    %v361 = vpop.permute.xlu0 %360
    %v363 = vsel %vm238, %v358, 0
    %vm365 = vcmask 1043456
    %v367 = vsel %vm365, %v361, 0
    %369 = vmatprep.subr.bf16.mxu0 0
    %370 = vmatpush1.bf16.msra.mxu0 %v367
    %371 = vmatprep.subr.bf16.mxu0 0
    %372 = vmatpush1.bf16.msra.mxu0 0
    %373 = vmatprep.subr.bf16.mxu0 0
    %374 = vmatpush1.bf16.msra.mxu0 0
    %375 = vmatprep.subr.bf16.mxu0 0
    %376 = vmatpush1.bf16.msra.mxu0 0
    %377 = vmatprep.subr.bf16.mxu0 0
    %378 = vmatpush1.bf16.msra.mxu0 0
    %379 = vmatprep.subr.bf16.mxu0 0
    %380 = vmatpush1.bf16.msra.mxu0 0
    %381 = vmatprep.subr.bf16.mxu0 0
    %382 = vmatpush1.bf16.msra.mxu0 0
    %383 = vmatprep.subr.bf16.mxu0 0
    %384 = vmatpush1.bf16.msra.mxu0 0
    %385 = vmatprep.subr.bf16.mxu0 0
    %386 = vmatpush1.bf16.msra.mxu0 0
    %387 = vmatprep.subr.bf16.mxu0 0
    %388 = vmatpush1.bf16.msra.mxu0 0
    %389 = vmatprep.subr.bf16.mxu0 0
    %390 = vmatpush1.bf16.msra.mxu0 0
    %391 = vmatprep.subr.bf16.mxu0 0
    %392 = vmatpush1.bf16.msra.mxu0 0
    %393 = vmatprep.subr.bf16.mxu0 0
    %394 = vmatpush1.bf16.msra.mxu0 0
    %395 = vmatprep.subr.bf16.mxu0 0
    %396 = vmatpush1.bf16.msra.mxu0 0
    %397 = vmatprep.subr.bf16.mxu0 0
    %398 = vmatpush1.bf16.msra.mxu0 0
    %399 = vmatprep.subr.bf16.mxu0 0
    %400 = vmatpush1.bf16.msra.mxu0 0
    %401 = vmatprep.mubr.bf16.mxu0 0
    %402 = vmatmul.mubr.bf16.gmra.mrb[0].mxu0 %v363
    %v403 = vpop.f32.mrb[0].mxu0
    %v404 = vadd.f32 0.0, %v403
    %v405 = vpop.f32.mrb[0].mxu0
    %v406 = vpop.f32.mrb[0].mxu0
    %v407 = vpop.f32.mrb[0].mxu0
    %408 = vdwg.mxu0
    %409 = vrot.lane.b32.xlu0 %v287, 96
    %v410 = vpop.permute.xlu0 %409
    %v412 = vsel %vm238, %v359, 0
    %v415 = vsel %vm365, %v410, 0
    %417 = vmatprep.subr.bf16.mxu0 0
    %418 = vmatpush1.bf16.msra.mxu0 %v415
    %419 = vmatprep.subr.bf16.mxu0 0
    %420 = vmatpush1.bf16.msra.mxu0 0
    %421 = vmatprep.subr.bf16.mxu0 0
    %422 = vmatpush1.bf16.msra.mxu0 0
    %423 = vmatprep.subr.bf16.mxu0 0
    %424 = vmatpush1.bf16.msra.mxu0 0
    %425 = vmatprep.subr.bf16.mxu0 0
    %426 = vmatpush1.bf16.msra.mxu0 0
    %427 = vmatprep.subr.bf16.mxu0 0
    %428 = vmatpush1.bf16.msra.mxu0 0
    %429 = vmatprep.subr.bf16.mxu0 0
    %430 = vmatpush1.bf16.msra.mxu0 0
    %431 = vmatprep.subr.bf16.mxu0 0
    %432 = vmatpush1.bf16.msra.mxu0 0
    %433 = vmatprep.subr.bf16.mxu0 0
    %434 = vmatpush1.bf16.msra.mxu0 0
    %435 = vmatprep.subr.bf16.mxu0 0
    %436 = vmatpush1.bf16.msra.mxu0 0
    %437 = vmatprep.subr.bf16.mxu0 0
    %438 = vmatpush1.bf16.msra.mxu0 0
    %439 = vmatprep.subr.bf16.mxu0 0
    %440 = vmatpush1.bf16.msra.mxu0 0
    %441 = vmatprep.subr.bf16.mxu0 0
    %442 = vmatpush1.bf16.msra.mxu0 0
    %443 = vmatprep.subr.bf16.mxu0 0
    %444 = vmatpush1.bf16.msra.mxu0 0
    %445 = vmatprep.subr.bf16.mxu0 0
    %446 = vmatpush1.bf16.msra.mxu0 0
    %447 = vmatprep.subr.bf16.mxu0 0
    %448 = vmatpush1.bf16.msra.mxu0 0
    %449 = vmatprep.mubr.bf16.mxu0 0
    %450 = vmatmul.mubr.bf16.gmra.mrb[0].mxu0 %v412
    %v451 = vpop.f32.mrb[0].mxu0
    %v452 = vadd.f32 0.0, %v451
    %v453 = vpop.f32.mrb[0].mxu0
    %v454 = vpop.f32.mrb[0].mxu0
    %v455 = vpop.f32.mrb[0].mxu0
    %456 = vdwg.mxu0
    %v457 = vrcp.pop %v354
    %v458 = vrcp.pop %v357
    %v459 = vmul.f32 %v404, %v457
    %v460 = vmul.f32 %v452, %v458
    %461 = vrot.lane.b32.xlu0 %v235, 120
    %v462 = vpop.permute.xlu0 %461
    %463 = vrot.lane.b32.xlu0 %v235, 104
    %v464 = vpop.permute.xlu0 %463
    %v466 = vsel %vm238, %v462, 0
    %v469 = vsel %vm238, %v464, 0
    %471 = vmatprep.subr.bf16.mxu0 0
    %472 = vmatpush1.bf16.xpose.msra.mxu0 %v469
    %473 = vmatprep.subr.bf16.mxu0 0
    %474 = vmatpush1.bf16.xpose.msra.mxu0 0
    %475 = vmatprep.subr.bf16.mxu0 0
    %476 = vmatpush1.bf16.xpose.msra.mxu0 0
    %477 = vmatprep.subr.bf16.mxu0 0
    %478 = vmatpush1.bf16.xpose.msra.mxu0 0
    %479 = vmatprep.subr.bf16.mxu0 0
    %480 = vmatpush1.bf16.xpose.msra.mxu0 0
    %481 = vmatprep.subr.bf16.mxu0 0
    %482 = vmatpush1.bf16.xpose.msra.mxu0 0
    %483 = vmatprep.subr.bf16.mxu0 0
    %484 = vmatpush1.bf16.xpose.msra.mxu0 0
    %485 = vmatprep.subr.bf16.mxu0 0
    %486 = vmatpush1.bf16.xpose.msra.mxu0 0
    %487 = vmatprep.subr.bf16.mxu0 0
    %488 = vmatpush1.bf16.xpose.msra.mxu0 0
    %489 = vmatprep.subr.bf16.mxu0 0
    %490 = vmatpush1.bf16.xpose.msra.mxu0 0
    %491 = vmatprep.subr.bf16.mxu0 0
    %492 = vmatpush1.bf16.xpose.msra.mxu0 0
    %493 = vmatprep.subr.bf16.mxu0 0
    %494 = vmatpush1.bf16.xpose.msra.mxu0 0
    %495 = vmatprep.subr.bf16.mxu0 0
    %496 = vmatpush1.bf16.xpose.msra.mxu0 0
    %497 = vmatprep.subr.bf16.mxu0 0
    %498 = vmatpush1.bf16.xpose.msra.mxu0 0
    %499 = vmatprep.subr.bf16.mxu0 0
    %500 = vmatpush1.bf16.xpose.msra.mxu0 0
    %501 = vmatprep.subr.bf16.mxu0 0
    %502 = vmatpush1.bf16.xpose.msra.mxu0 0
    %503 = vmatprep.mubr.bf16.mxu0 0
    %504 = vmatmul.mubr.bf16.gmra.mrb[0].mxu0 %v466
    %v505 = vpop.f32.mrb[0].mxu0
    %v506 = vadd.f32 0.0, %v505
    %v507 = vpop.f32.mrb[0].mxu0
    %v508 = vpop.f32.mrb[0].mxu0
    %v509 = vpop.f32.mrb[0].mxu0
    %510 = vdwg.mxu0
    %511 = vrot.lane.b32.xlu0 %v287, 120
    %v512 = vpop.permute.xlu0 %511
    %513 = vrot.lane.b32.xlu0 %v287, 104
    %v514 = vpop.permute.xlu0 %513
    %v516 = vsel %vm238, %v512, 0
    %v519 = vsel %vm238, %v514, 0
    %521 = vmatprep.subr.bf16.mxu0 0
    %522 = vmatpush1.bf16.xpose.msra.mxu0 %v519
    %523 = vmatprep.subr.bf16.mxu0 0
    %524 = vmatpush1.bf16.xpose.msra.mxu0 0
    %525 = vmatprep.subr.bf16.mxu0 0
    %526 = vmatpush1.bf16.xpose.msra.mxu0 0
    %527 = vmatprep.subr.bf16.mxu0 0
    %528 = vmatpush1.bf16.xpose.msra.mxu0 0
    %529 = vmatprep.subr.bf16.mxu0 0
    %530 = vmatpush1.bf16.xpose.msra.mxu0 0
    %531 = vmatprep.subr.bf16.mxu0 0
    %532 = vmatpush1.bf16.xpose.msra.mxu0 0
    %533 = vmatprep.subr.bf16.mxu0 0
    %534 = vmatpush1.bf16.xpose.msra.mxu0 0
    %535 = vmatprep.subr.bf16.mxu0 0
    %536 = vmatpush1.bf16.xpose.msra.mxu0 0
    %537 = vmatprep.subr.bf16.mxu0 0
    %538 = vmatpush1.bf16.xpose.msra.mxu0 0
    %539 = vmatprep.subr.bf16.mxu0 0
    %540 = vmatpush1.bf16.xpose.msra.mxu0 0
    %541 = vmatprep.subr.bf16.mxu0 0
    %542 = vmatpush1.bf16.xpose.msra.mxu0 0
    %543 = vmatprep.subr.bf16.mxu0 0
    %544 = vmatpush1.bf16.xpose.msra.mxu0 0
    %545 = vmatprep.subr.bf16.mxu0 0
    %546 = vmatpush1.bf16.xpose.msra.mxu0 0
    %547 = vmatprep.subr.bf16.mxu0 0
    %548 = vmatpush1.bf16.xpose.msra.mxu0 0
    %549 = vmatprep.subr.bf16.mxu0 0
    %550 = vmatpush1.bf16.xpose.msra.mxu0 0
    %551 = vmatprep.subr.bf16.mxu0 0
    %552 = vmatpush1.bf16.xpose.msra.mxu0 0
    %553 = vmatprep.mubr.bf16.mxu0 0
    %554 = vmatmul.mubr.bf16.gmra.mrb[0].mxu0 %v516
    %v555 = vpop.f32.mrb[0].mxu0
    %v556 = vadd.f32 0.0, %v555
    %v557 = vpop.f32.mrb[0].mxu0
    %v558 = vpop.f32.mrb[0].mxu0
    %v559 = vpop.f32.mrb[0].mxu0
    %560 = vdwg.mxu0
    %v561 = vsel %vm337, -1e+30, %v506
    %v562 = vsel %vm337, -1e+30, %v556
    %v563 = vsel %vm238, %v561, -inf
    %564 = vmax.xlane.f32.xlu0 %v563
    %v565 = vpop.xlane.xlu0 %564
    %v566 = vsel %vm238, %v562, -inf
    %567 = vmax.xlane.f32.xlu0 %v566
    %v568 = vpop.xlane.xlu0 %567
    %v569 = vsub.f32 %v561, %v565
    %v570 = vsub.f32 %v562, %v568
    %v571 = vmul.f32 %v569, 1.442695
    %v572 = vpow.pop %v571
    %v573 = vmul.f32 %v570, 1.442695
    %v574 = vpow.pop %v573
    %v575 = vsel %vm238, %v572, 0.0
    %576 = vadd.xlane.f32.xlu0 %v575
    %v577 = vpop.xlane.xlu0 %576
    %v578 = vsel %vm238, %v574, 0.0
    %579 = vadd.xlane.f32.xlu0 %v578
    %v580 = vpop.xlane.xlu0 %579
    %v581 = vpack.c.bf16 %v572, %v572
    %v582 = vpack.c.bf16 %v574, %v574
    %583 = vrot.lane.b32.xlu0 %v235, 88
    %v584 = vpop.permute.xlu0 %583
    %v586 = vsel %vm238, %v581, 0
    %v589 = vsel %vm365, %v584, 0
    %591 = vmatprep.subr.bf16.mxu0 0
    %592 = vmatpush1.bf16.msra.mxu0 %v589
    %593 = vmatprep.subr.bf16.mxu0 0
    %594 = vmatpush1.bf16.msra.mxu0 0
    %595 = vmatprep.subr.bf16.mxu0 0
    %596 = vmatpush1.bf16.msra.mxu0 0
    %597 = vmatprep.subr.bf16.mxu0 0
    %598 = vmatpush1.bf16.msra.mxu0 0
    %599 = vmatprep.subr.bf16.mxu0 0
    %600 = vmatpush1.bf16.msra.mxu0 0
    %601 = vmatprep.subr.bf16.mxu0 0
    %602 = vmatpush1.bf16.msra.mxu0 0
    %603 = vmatprep.subr.bf16.mxu0 0
    %604 = vmatpush1.bf16.msra.mxu0 0
    %605 = vmatprep.subr.bf16.mxu0 0
    %606 = vmatpush1.bf16.msra.mxu0 0
    %607 = vmatprep.subr.bf16.mxu0 0
    %608 = vmatpush1.bf16.msra.mxu0 0
    %609 = vmatprep.subr.bf16.mxu0 0
    %610 = vmatpush1.bf16.msra.mxu0 0
    %611 = vmatprep.subr.bf16.mxu0 0
    %612 = vmatpush1.bf16.msra.mxu0 0
    %613 = vmatprep.subr.bf16.mxu0 0
    %614 = vmatpush1.bf16.msra.mxu0 0
    %615 = vmatprep.subr.bf16.mxu0 0
    %616 = vmatpush1.bf16.msra.mxu0 0
    %617 = vmatprep.subr.bf16.mxu0 0
    %618 = vmatpush1.bf16.msra.mxu0 0
    %619 = vmatprep.subr.bf16.mxu0 0
    %620 = vmatpush1.bf16.msra.mxu0 0
    %621 = vmatprep.subr.bf16.mxu0 0
    %622 = vmatpush1.bf16.msra.mxu0 0
    %623 = vmatprep.mubr.bf16.mxu0 0
    %624 = vmatmul.mubr.bf16.gmra.mrb[0].mxu0 %v586
    %v625 = vpop.f32.mrb[0].mxu0
    %v626 = vadd.f32 0.0, %v625
    %v627 = vpop.f32.mrb[0].mxu0
    %v628 = vpop.f32.mrb[0].mxu0
    %v629 = vpop.f32.mrb[0].mxu0
    %630 = vdwg.mxu0
    %631 = vrot.lane.b32.xlu0 %v287, 88
    %v632 = vpop.permute.xlu0 %631
    %v634 = vsel %vm238, %v582, 0
    %v637 = vsel %vm365, %v632, 0
    %639 = vmatprep.subr.bf16.mxu0 0
    %640 = vmatpush1.bf16.msra.mxu0 %v637
    %641 = vmatprep.subr.bf16.mxu0 0
    %642 = vmatpush1.bf16.msra.mxu0 0
    %643 = vmatprep.subr.bf16.mxu0 0
    %644 = vmatpush1.bf16.msra.mxu0 0
    %645 = vmatprep.subr.bf16.mxu0 0
    %646 = vmatpush1.bf16.msra.mxu0 0
    %647 = vmatprep.subr.bf16.mxu0 0
    %648 = vmatpush1.bf16.msra.mxu0 0
    %649 = vmatprep.subr.bf16.mxu0 0
    %650 = vmatpush1.bf16.msra.mxu0 0
    %651 = vmatprep.subr.bf16.mxu0 0
    %652 = vmatpush1.bf16.msra.mxu0 0
    %653 = vmatprep.subr.bf16.mxu0 0
    %654 = vmatpush1.bf16.msra.mxu0 0
    %655 = vmatprep.subr.bf16.mxu0 0
    %656 = vmatpush1.bf16.msra.mxu0 0
    %657 = vmatprep.subr.bf16.mxu0 0
    %658 = vmatpush1.bf16.msra.mxu0 0
    %659 = vmatprep.subr.bf16.mxu0 0
    %660 = vmatpush1.bf16.msra.mxu0 0
    %661 = vmatprep.subr.bf16.mxu0 0
    %662 = vmatpush1.bf16.msra.mxu0 0
    %663 = vmatprep.subr.bf16.mxu0 0
    %664 = vmatpush1.bf16.msra.mxu0 0
    %665 = vmatprep.subr.bf16.mxu0 0
    %666 = vmatpush1.bf16.msra.mxu0 0
    %667 = vmatprep.subr.bf16.mxu0 0
    %668 = vmatpush1.bf16.msra.mxu0 0
    %669 = vmatprep.subr.bf16.mxu0 0
    %670 = vmatpush1.bf16.msra.mxu0 0
    %671 = vmatprep.mubr.bf16.mxu0 0
    %672 = vmatmul.mubr.bf16.gmra.mrb[0].mxu0 %v634
    %v673 = vpop.f32.mrb[0].mxu0
    %v674 = vadd.f32 0.0, %v673
    %v675 = vpop.f32.mrb[0].mxu0
    %v676 = vpop.f32.mrb[0].mxu0
    %v677 = vpop.f32.mrb[0].mxu0
    %678 = vdwg.mxu0
    %v679 = vrcp.pop %v577
    %v680 = vrcp.pop %v580
    %v681 = vmul.f32 %v626, %v679
    %v682 = vmul.f32 %v674, %v680
    %685 = vrot.lane.b32.xlu0 %v681, 8
    %v686 = vpop.permute.xlu0 %685
    %687 = vrot.lane.b32.xlu0 %v682, 8
    %v688 = vpop.permute.xlu0 %687
    %v691 = vsel %vm238, %v459, %v686
    %v692 = vsel %vm238, %v460, %v688
    %v693 = vpack.c.bf16 %v692, %v691
    %v694 = vld [vmem:[%s5] sm:$0xf]
    %v695 = vld [vmem:[%s5 + $0x4] sm:$0xf]
    %v696 = vld [vmem:[#allocation3] sm:$0xff]
    %v697 = vld [vmem:[#allocation3 + $0x8] sm:$0xff]
    %v700 = vunpack.c.l.b16 %v694
    %v701 = vunpack.c.l.b16 %v695
    %v702 = vpack.c.b16 %v701, %v700
    %vm704 = vcmask 130048
    %v706 = vsel %vm704, %v693, 0
    %708 = vmatprep.subr.bf16.mxu0 0
    %709 = vmatpush1.bf16.msra.mxu0 %v702
    %710 = vmatprep.subr.bf16.mxu0 0
    %711 = vmatpush1.bf16.msra.mxu0 0
    %712 = vmatprep.subr.bf16.mxu0 0
    %713 = vmatpush1.bf16.msra.mxu0 0
    %714 = vmatprep.subr.bf16.mxu0 0
    %715 = vmatpush1.bf16.msra.mxu0 0
    %716 = vmatprep.subr.bf16.mxu0 0
    %717 = vmatpush1.bf16.msra.mxu0 0
    %718 = vmatprep.subr.bf16.mxu0 0
    %719 = vmatpush1.bf16.msra.mxu0 0
    %720 = vmatprep.subr.bf16.mxu0 0
    %721 = vmatpush1.bf16.msra.mxu0 0
    %722 = vmatprep.subr.bf16.mxu0 0
    %723 = vmatpush1.bf16.msra.mxu0 0
    %724 = vmatprep.subr.bf16.mxu0 0
    %725 = vmatpush1.bf16.msra.mxu0 0
    %726 = vmatprep.subr.bf16.mxu0 0
    %727 = vmatpush1.bf16.msra.mxu0 0
    %728 = vmatprep.subr.bf16.mxu0 0
    %729 = vmatpush1.bf16.msra.mxu0 0
    %730 = vmatprep.subr.bf16.mxu0 0
    %731 = vmatpush1.bf16.msra.mxu0 0
    %732 = vmatprep.subr.bf16.mxu0 0
    %733 = vmatpush1.bf16.msra.mxu0 0
    %734 = vmatprep.subr.bf16.mxu0 0
    %735 = vmatpush1.bf16.msra.mxu0 0
    %736 = vmatprep.subr.bf16.mxu0 0
    %737 = vmatpush1.bf16.msra.mxu0 0
    %738 = vmatprep.subr.bf16.mxu0 0
    %739 = vmatpush1.bf16.msra.mxu0 0
    %740 = vmatprep.mubr.bf16.mxu0 0
    %741 = vmatmul.mubr.bf16.gmra.mrb[0].mxu0 %v706
    %v742 = vpop.f32.mrb[0].mxu0
    %v743 = vadd.f32 0.0, %v742
    %v744 = vpop.f32.mrb[0].mxu0
    %v745 = vpop.f32.mrb[0].mxu0
    %v746 = vadd.f32 0.0, %v745
    %v747 = vpop.f32.mrb[0].mxu0
    %748 = vdwg.mxu0
    %v749 = vadd.f32 %v696, %v743
    %v750 = vadd.f32 %v697, %v746
    %751 = vst.msk [vmem:[#allocation3] sm:$0xff] %vm52, %v749
    %752 = vst.msk [vmem:[#allocation3 + $0x8] sm:$0xff] %vm52, %v750
    %v753 = vld [vmem:[%s204] sm:$0xf]
    %v754 = vld [vmem:[%s204 + $0x4] sm:$0xf]
    %v756 = vunpack.c.l.b16 %v753
    %v757 = vpack.c.b16 %v756, %v756
    %758 = vrot.lane.b32.xlu0 %v757, 112
    %v759 = vpop.permute.xlu0 %758
    %v761 = vsel %vm238, %v753, 0
    %v764 = vsel %vm238, %v759, 0
    %766 = vmatprep.subr.bf16.mxu0 0
    %767 = vmatpush1.bf16.xpose.msra.mxu0 %v764
    %768 = vmatprep.subr.bf16.mxu0 0
    %769 = vmatpush1.bf16.xpose.msra.mxu0 0
    %770 = vmatprep.subr.bf16.mxu0 0
    %771 = vmatpush1.bf16.xpose.msra.mxu0 0
    %772 = vmatprep.subr.bf16.mxu0 0
    %773 = vmatpush1.bf16.xpose.msra.mxu0 0
    %774 = vmatprep.subr.bf16.mxu0 0
    %775 = vmatpush1.bf16.xpose.msra.mxu0 0
    %776 = vmatprep.subr.bf16.mxu0 0
    %777 = vmatpush1.bf16.xpose.msra.mxu0 0
    %778 = vmatprep.subr.bf16.mxu0 0
    %779 = vmatpush1.bf16.xpose.msra.mxu0 0
    %780 = vmatprep.subr.bf16.mxu0 0
    %781 = vmatpush1.bf16.xpose.msra.mxu0 0
    %782 = vmatprep.subr.bf16.mxu0 0
    %783 = vmatpush1.bf16.xpose.msra.mxu0 0
    %784 = vmatprep.subr.bf16.mxu0 0
    %785 = vmatpush1.bf16.xpose.msra.mxu0 0
    %786 = vmatprep.subr.bf16.mxu0 0
    %787 = vmatpush1.bf16.xpose.msra.mxu0 0
    %788 = vmatprep.subr.bf16.mxu0 0
    %789 = vmatpush1.bf16.xpose.msra.mxu0 0
    %790 = vmatprep.subr.bf16.mxu0 0
    %791 = vmatpush1.bf16.xpose.msra.mxu0 0
    %792 = vmatprep.subr.bf16.mxu0 0
    %793 = vmatpush1.bf16.xpose.msra.mxu0 0
    %794 = vmatprep.subr.bf16.mxu0 0
    %795 = vmatpush1.bf16.xpose.msra.mxu0 0
    %796 = vmatprep.subr.bf16.mxu0 0
    %797 = vmatpush1.bf16.xpose.msra.mxu0 0
    %798 = vmatprep.mubr.bf16.mxu0 0
    %799 = vmatmul.mubr.bf16.gmra.mrb[0].mxu0 %v761
    %v800 = vpop.f32.mrb[0].mxu0
    %v801 = vadd.f32 0.0, %v800
    %v802 = vpop.f32.mrb[0].mxu0
    %v803 = vpop.f32.mrb[0].mxu0
    %v804 = vpop.f32.mrb[0].mxu0
    %805 = vdwg.mxu0
    %v807 = vunpack.c.l.b16 %v754
    %v808 = vpack.c.b16 %v807, %v807
    %809 = vrot.lane.b32.xlu0 %v808, 112
    %v810 = vpop.permute.xlu0 %809
    %v812 = vsel %vm238, %v754, 0
    %v815 = vsel %vm238, %v810, 0
    %817 = vmatprep.subr.bf16.mxu0 0
    %818 = vmatpush1.bf16.xpose.msra.mxu0 %v815
    %819 = vmatprep.subr.bf16.mxu0 0
    %820 = vmatpush1.bf16.xpose.msra.mxu0 0
    %821 = vmatprep.subr.bf16.mxu0 0
    %822 = vmatpush1.bf16.xpose.msra.mxu0 0
    %823 = vmatprep.subr.bf16.mxu0 0
    %824 = vmatpush1.bf16.xpose.msra.mxu0 0
    %825 = vmatprep.subr.bf16.mxu0 0
    %826 = vmatpush1.bf16.xpose.msra.mxu0 0
    %827 = vmatprep.subr.bf16.mxu0 0
    %828 = vmatpush1.bf16.xpose.msra.mxu0 0
    %829 = vmatprep.subr.bf16.mxu0 0
    %830 = vmatpush1.bf16.xpose.msra.mxu0 0
    %831 = vmatprep.subr.bf16.mxu0 0
    %832 = vmatpush1.bf16.xpose.msra.mxu0 0
    %833 = vmatprep.subr.bf16.mxu0 0
    %834 = vmatpush1.bf16.xpose.msra.mxu0 0
    %835 = vmatprep.subr.bf16.mxu0 0
    %836 = vmatpush1.bf16.xpose.msra.mxu0 0
    %837 = vmatprep.subr.bf16.mxu0 0
    %838 = vmatpush1.bf16.xpose.msra.mxu0 0
    %839 = vmatprep.subr.bf16.mxu0 0
    %840 = vmatpush1.bf16.xpose.msra.mxu0 0
    %841 = vmatprep.subr.bf16.mxu0 0
    %842 = vmatpush1.bf16.xpose.msra.mxu0 0
    %843 = vmatprep.subr.bf16.mxu0 0
    %844 = vmatpush1.bf16.xpose.msra.mxu0 0
    %845 = vmatprep.subr.bf16.mxu0 0
    %846 = vmatpush1.bf16.xpose.msra.mxu0 0
    %847 = vmatprep.subr.bf16.mxu0 0
    %848 = vmatpush1.bf16.xpose.msra.mxu0 0
    %849 = vmatprep.mubr.bf16.mxu0 0
    %850 = vmatmul.mubr.bf16.gmra.mrb[0].mxu0 %v812
    %v851 = vpop.f32.mrb[0].mxu0
    %v852 = vadd.f32 0.0, %v851
    %v853 = vpop.f32.mrb[0].mxu0
    %v854 = vpop.f32.mrb[0].mxu0
    %v855 = vpop.f32.mrb[0].mxu0
    %856 = vdwg.mxu0
    %v857 = vsel %vm337, -1e+30, %v801
    %v858 = vsel %vm337, -1e+30, %v852
    %v859 = vsel %vm238, %v857, -inf
    %860 = vmax.xlane.f32.xlu0 %v859
    %v861 = vpop.xlane.xlu0 %860
    %v862 = vsel %vm238, %v858, -inf
    %863 = vmax.xlane.f32.xlu0 %v862
    %v864 = vpop.xlane.xlu0 %863
    %v865 = vsub.f32 %v857, %v861
    %v866 = vsub.f32 %v858, %v864
    %v867 = vmul.f32 %v865, 1.442695
    %v868 = vpow.pop %v867
    %v869 = vmul.f32 %v866, 1.442695
    %v870 = vpow.pop %v869
    %v871 = vsel %vm238, %v868, 0.0
    %872 = vadd.xlane.f32.xlu0 %v871
    %v873 = vpop.xlane.xlu0 %872
    %v874 = vsel %vm238, %v870, 0.0
    %875 = vadd.xlane.f32.xlu0 %v874
    %v876 = vpop.xlane.xlu0 %875
    %v877 = vpack.c.bf16 %v868, %v868
    %v878 = vpack.c.bf16 %v870, %v870
    %879 = vrot.lane.b32.xlu0 %v757, 96
    %v880 = vpop.permute.xlu0 %879
    %v882 = vsel %vm238, %v877, 0
    %v885 = vsel %vm365, %v880, 0
    %887 = vmatprep.subr.bf16.mxu0 0
    %888 = vmatpush1.bf16.msra.mxu0 %v885
    %889 = vmatprep.subr.bf16.mxu0 0
    %890 = vmatpush1.bf16.msra.mxu0 0
    %891 = vmatprep.subr.bf16.mxu0 0
    %892 = vmatpush1.bf16.msra.mxu0 0
    %893 = vmatprep.subr.bf16.mxu0 0
    %894 = vmatpush1.bf16.msra.mxu0 0
    %895 = vmatprep.subr.bf16.mxu0 0
    %896 = vmatpush1.bf16.msra.mxu0 0
    %897 = vmatprep.subr.bf16.mxu0 0
    %898 = vmatpush1.bf16.msra.mxu0 0
    %899 = vmatprep.subr.bf16.mxu0 0
    %900 = vmatpush1.bf16.msra.mxu0 0
    %901 = vmatprep.subr.bf16.mxu0 0
    %902 = vmatpush1.bf16.msra.mxu0 0
    %903 = vmatprep.subr.bf16.mxu0 0
    %904 = vmatpush1.bf16.msra.mxu0 0
    %905 = vmatprep.subr.bf16.mxu0 0
    %906 = vmatpush1.bf16.msra.mxu0 0
    %907 = vmatprep.subr.bf16.mxu0 0
    %908 = vmatpush1.bf16.msra.mxu0 0
    %909 = vmatprep.subr.bf16.mxu0 0
    %910 = vmatpush1.bf16.msra.mxu0 0
    %911 = vmatprep.subr.bf16.mxu0 0
    %912 = vmatpush1.bf16.msra.mxu0 0
    %913 = vmatprep.subr.bf16.mxu0 0
    %914 = vmatpush1.bf16.msra.mxu0 0
    %915 = vmatprep.subr.bf16.mxu0 0
    %916 = vmatpush1.bf16.msra.mxu0 0
    %917 = vmatprep.subr.bf16.mxu0 0
    %918 = vmatpush1.bf16.msra.mxu0 0
    %919 = vmatprep.mubr.bf16.mxu0 0
    %920 = vmatmul.mubr.bf16.gmra.mrb[0].mxu0 %v882
    %v921 = vpop.f32.mrb[0].mxu0
    %v922 = vadd.f32 0.0, %v921
    %v923 = vpop.f32.mrb[0].mxu0
    %v924 = vpop.f32.mrb[0].mxu0
    %v925 = vpop.f32.mrb[0].mxu0
    %926 = vdwg.mxu0
    %927 = vrot.lane.b32.xlu0 %v808, 96
    %v928 = vpop.permute.xlu0 %927
    %v930 = vsel %vm238, %v878, 0
    %v933 = vsel %vm365, %v928, 0
    %935 = vmatprep.subr.bf16.mxu0 0
    %936 = vmatpush1.bf16.msra.mxu0 %v933
    %937 = vmatprep.subr.bf16.mxu0 0
    %938 = vmatpush1.bf16.msra.mxu0 0
    %939 = vmatprep.subr.bf16.mxu0 0
    %940 = vmatpush1.bf16.msra.mxu0 0
    %941 = vmatprep.subr.bf16.mxu0 0
    %942 = vmatpush1.bf16.msra.mxu0 0
    %943 = vmatprep.subr.bf16.mxu0 0
    %944 = vmatpush1.bf16.msra.mxu0 0
    %945 = vmatprep.subr.bf16.mxu0 0
    %946 = vmatpush1.bf16.msra.mxu0 0
    %947 = vmatprep.subr.bf16.mxu0 0
    %948 = vmatpush1.bf16.msra.mxu0 0
    %949 = vmatprep.subr.bf16.mxu0 0
    %950 = vmatpush1.bf16.msra.mxu0 0
    %951 = vmatprep.subr.bf16.mxu0 0
    %952 = vmatpush1.bf16.msra.mxu0 0
    %953 = vmatprep.subr.bf16.mxu0 0
    %954 = vmatpush1.bf16.msra.mxu0 0
    %955 = vmatprep.subr.bf16.mxu0 0
    %956 = vmatpush1.bf16.msra.mxu0 0
    %957 = vmatprep.subr.bf16.mxu0 0
    %958 = vmatpush1.bf16.msra.mxu0 0
    %959 = vmatprep.subr.bf16.mxu0 0
    %960 = vmatpush1.bf16.msra.mxu0 0
    %961 = vmatprep.subr.bf16.mxu0 0
    %962 = vmatpush1.bf16.msra.mxu0 0
    %963 = vmatprep.subr.bf16.mxu0 0
    %964 = vmatpush1.bf16.msra.mxu0 0
    %965 = vmatprep.subr.bf16.mxu0 0
    %966 = vmatpush1.bf16.msra.mxu0 0
    %967 = vmatprep.mubr.bf16.mxu0 0
    %968 = vmatmul.mubr.bf16.gmra.mrb[0].mxu0 %v930
    %v969 = vpop.f32.mrb[0].mxu0
    %v970 = vadd.f32 0.0, %v969
    %v971 = vpop.f32.mrb[0].mxu0
    %v972 = vpop.f32.mrb[0].mxu0
    %v973 = vpop.f32.mrb[0].mxu0
    %974 = vdwg.mxu0
    %v975 = vrcp.pop %v873
    %v976 = vrcp.pop %v876
    %v977 = vmul.f32 %v922, %v975
    %v978 = vmul.f32 %v970, %v976
    %979 = vrot.lane.b32.xlu0 %v757, 120
    %v980 = vpop.permute.xlu0 %979
    %981 = vrot.lane.b32.xlu0 %v757, 104
    %v982 = vpop.permute.xlu0 %981
    %v984 = vsel %vm238, %v980, 0
    %v987 = vsel %vm238, %v982, 0
    %989 = vmatprep.subr.bf16.mxu0 0
    %990 = vmatpush1.bf16.xpose.msra.mxu0 %v987
    %991 = vmatprep.subr.bf16.mxu0 0
    %992 = vmatpush1.bf16.xpose.msra.mxu0 0
    %993 = vmatprep.subr.bf16.mxu0 0
    %994 = vmatpush1.bf16.xpose.msra.mxu0 0
    %995 = vmatprep.subr.bf16.mxu0 0
    %996 = vmatpush1.bf16.xpose.msra.mxu0 0
    %997 = vmatprep.subr.bf16.mxu0 0
    %998 = vmatpush1.bf16.xpose.msra.mxu0 0
    %999 = vmatprep.subr.bf16.mxu0 0
    %1000 = vmatpush1.bf16.xpose.msra.mxu0 0
    %1001 = vmatprep.subr.bf16.mxu0 0
    %1002 = vmatpush1.bf16.xpose.msra.mxu0 0
    %1003 = vmatprep.subr.bf16.mxu0 0
    %1004 = vmatpush1.bf16.xpose.msra.mxu0 0
    %1005 = vmatprep.subr.bf16.mxu0 0
    %1006 = vmatpush1.bf16.xpose.msra.mxu0 0
    %1007 = vmatprep.subr.bf16.mxu0 0
    %1008 = vmatpush1.bf16.xpose.msra.mxu0 0
    %1009 = vmatprep.subr.bf16.mxu0 0
    %1010 = vmatpush1.bf16.xpose.msra.mxu0 0
    %1011 = vmatprep.subr.bf16.mxu0 0
    %1012 = vmatpush1.bf16.xpose.msra.mxu0 0
    %1013 = vmatprep.subr.bf16.mxu0 0
    %1014 = vmatpush1.bf16.xpose.msra.mxu0 0
    %1015 = vmatprep.subr.bf16.mxu0 0
    %1016 = vmatpush1.bf16.xpose.msra.mxu0 0
    %1017 = vmatprep.subr.bf16.mxu0 0
    %1018 = vmatpush1.bf16.xpose.msra.mxu0 0
    %1019 = vmatprep.subr.bf16.mxu0 0
    %1020 = vmatpush1.bf16.xpose.msra.mxu0 0
    %1021 = vmatprep.mubr.bf16.mxu0 0
    %1022 = vmatmul.mubr.bf16.gmra.mrb[0].mxu0 %v984
    %v1023 = vpop.f32.mrb[0].mxu0
    %v1024 = vadd.f32 0.0, %v1023
    %v1025 = vpop.f32.mrb[0].mxu0
    %v1026 = vpop.f32.mrb[0].mxu0
    %v1027 = vpop.f32.mrb[0].mxu0
    %1028 = vdwg.mxu0
    %1029 = vrot.lane.b32.xlu0 %v808, 120
    %v1030 = vpop.permute.xlu0 %1029
    %1031 = vrot.lane.b32.xlu0 %v808, 104
    %v1032 = vpop.permute.xlu0 %1031
    %v1034 = vsel %vm238, %v1030, 0
    %v1037 = vsel %vm238, %v1032, 0
    %1039 = vmatprep.subr.bf16.mxu0 0
    %1040 = vmatpush1.bf16.xpose.msra.mxu0 %v1037
    %1041 = vmatprep.subr.bf16.mxu0 0
    %1042 = vmatpush1.bf16.xpose.msra.mxu0 0
    %1043 = vmatprep.subr.bf16.mxu0 0
    %1044 = vmatpush1.bf16.xpose.msra.mxu0 0
    %1045 = vmatprep.subr.bf16.mxu0 0
    %1046 = vmatpush1.bf16.xpose.msra.mxu0 0
    %1047 = vmatprep.subr.bf16.mxu0 0
    %1048 = vmatpush1.bf16.xpose.msra.mxu0 0
    %1049 = vmatprep.subr.bf16.mxu0 0
    %1050 = vmatpush1.bf16.xpose.msra.mxu0 0
    %1051 = vmatprep.subr.bf16.mxu0 0
    %1052 = vmatpush1.bf16.xpose.msra.mxu0 0
    %1053 = vmatprep.subr.bf16.mxu0 0
    %1054 = vmatpush1.bf16.xpose.msra.mxu0 0
    %1055 = vmatprep.subr.bf16.mxu0 0
    %1056 = vmatpush1.bf16.xpose.msra.mxu0 0
    %1057 = vmatprep.subr.bf16.mxu0 0
    %1058 = vmatpush1.bf16.xpose.msra.mxu0 0
    %1059 = vmatprep.subr.bf16.mxu0 0
    %1060 = vmatpush1.bf16.xpose.msra.mxu0 0
    %1061 = vmatprep.subr.bf16.mxu0 0
    %1062 = vmatpush1.bf16.xpose.msra.mxu0 0
    %1063 = vmatprep.subr.bf16.mxu0 0
    %1064 = vmatpush1.bf16.xpose.msra.mxu0 0
    %1065 = vmatprep.subr.bf16.mxu0 0
    %1066 = vmatpush1.bf16.xpose.msra.mxu0 0
    %1067 = vmatprep.subr.bf16.mxu0 0
    %1068 = vmatpush1.bf16.xpose.msra.mxu0 0
    %1069 = vmatprep.subr.bf16.mxu0 0
    %1070 = vmatpush1.bf16.xpose.msra.mxu0 0
    %1071 = vmatprep.mubr.bf16.mxu0 0
    %1072 = vmatmul.mubr.bf16.gmra.mrb[0].mxu0 %v1034
    %v1073 = vpop.f32.mrb[0].mxu0
    %v1074 = vadd.f32 0.0, %v1073
    %v1075 = vpop.f32.mrb[0].mxu0
    %v1076 = vpop.f32.mrb[0].mxu0
    %v1077 = vpop.f32.mrb[0].mxu0
    %1078 = vdwg.mxu0
    %v1079 = vsel %vm337, -1e+30, %v1024
    %v1080 = vsel %vm337, -1e+30, %v1074
    %v1081 = vsel %vm238, %v1079, -inf
    %1082 = vmax.xlane.f32.xlu0 %v1081
    %v1083 = vpop.xlane.xlu0 %1082
    %v1084 = vsel %vm238, %v1080, -inf
    %1085 = vmax.xlane.f32.xlu0 %v1084
    %v1086 = vpop.xlane.xlu0 %1085
    %v1087 = vsub.f32 %v1079, %v1083
    %v1088 = vsub.f32 %v1080, %v1086
    %v1089 = vmul.f32 %v1087, 1.442695
    %v1090 = vpow.pop %v1089
    %v1091 = vmul.f32 %v1088, 1.442695
    %v1092 = vpow.pop %v1091
    %v1093 = vsel %vm238, %v1090, 0.0
    %1094 = vadd.xlane.f32.xlu0 %v1093
    %v1095 = vpop.xlane.xlu0 %1094
    %v1096 = vsel %vm238, %v1092, 0.0
    %1097 = vadd.xlane.f32.xlu0 %v1096
    %v1098 = vpop.xlane.xlu0 %1097
    %v1099 = vpack.c.bf16 %v1090, %v1090
    %v1100 = vpack.c.bf16 %v1092, %v1092
    %1101 = vrot.lane.b32.xlu0 %v757, 88
    %v1102 = vpop.permute.xlu0 %1101
    %v1104 = vsel %vm238, %v1099, 0
    %v1107 = vsel %vm365, %v1102, 0
    %1109 = vmatprep.subr.bf16.mxu0 0
    %1110 = vmatpush1.bf16.msra.mxu0 %v1107
    %1111 = vmatprep.subr.bf16.mxu0 0
    %1112 = vmatpush1.bf16.msra.mxu0 0
    %1113 = vmatprep.subr.bf16.mxu0 0
    %1114 = vmatpush1.bf16.msra.mxu0 0
    %1115 = vmatprep.subr.bf16.mxu0 0
    %1116 = vmatpush1.bf16.msra.mxu0 0
    %1117 = vmatprep.subr.bf16.mxu0 0
    %1118 = vmatpush1.bf16.msra.mxu0 0
    %1119 = vmatprep.subr.bf16.mxu0 0
    %1120 = vmatpush1.bf16.msra.mxu0 0
    %1121 = vmatprep.subr.bf16.mxu0 0
    %1122 = vmatpush1.bf16.msra.mxu0 0
    %1123 = vmatprep.subr.bf16.mxu0 0
    %1124 = vmatpush1.bf16.msra.mxu0 0
    %1125 = vmatprep.subr.bf16.mxu0 0
    %1126 = vmatpush1.bf16.msra.mxu0 0
    %1127 = vmatprep.subr.bf16.mxu0 0
    %1128 = vmatpush1.bf16.msra.mxu0 0
    %1129 = vmatprep.subr.bf16.mxu0 0
    %1130 = vmatpush1.bf16.msra.mxu0 0
    %1131 = vmatprep.subr.bf16.mxu0 0
    %1132 = vmatpush1.bf16.msra.mxu0 0
    %1133 = vmatprep.subr.bf16.mxu0 0
    %1134 = vmatpush1.bf16.msra.mxu0 0
    %1135 = vmatprep.subr.bf16.mxu0 0
    %1136 = vmatpush1.bf16.msra.mxu0 0
    %1137 = vmatprep.subr.bf16.mxu0 0
    %1138 = vmatpush1.bf16.msra.mxu0 0
    %1139 = vmatprep.subr.bf16.mxu0 0
    %1140 = vmatpush1.bf16.msra.mxu0 0
    %1141 = vmatprep.mubr.bf16.mxu0 0
    %1142 = vmatmul.mubr.bf16.gmra.mrb[0].mxu0 %v1104
    %v1143 = vpop.f32.mrb[0].mxu0
    %v1144 = vadd.f32 0.0, %v1143
    %v1145 = vpop.f32.mrb[0].mxu0
    %v1146 = vpop.f32.mrb[0].mxu0
    %v1147 = vpop.f32.mrb[0].mxu0
    %1148 = vdwg.mxu0
    %1149 = vrot.lane.b32.xlu0 %v808, 88
    %v1150 = vpop.permute.xlu0 %1149
    %v1152 = vsel %vm238, %v1100, 0
    %v1155 = vsel %vm365, %v1150, 0
    %1157 = vmatprep.subr.bf16.mxu0 0
    %1158 = vmatpush1.bf16.msra.mxu0 %v1155
    %1159 = vmatprep.subr.bf16.mxu0 0
    %1160 = vmatpush1.bf16.msra.mxu0 0
    %1161 = vmatprep.subr.bf16.mxu0 0
    %1162 = vmatpush1.bf16.msra.mxu0 0
    %1163 = vmatprep.subr.bf16.mxu0 0
    %1164 = vmatpush1.bf16.msra.mxu0 0
    %1165 = vmatprep.subr.bf16.mxu0 0
    %1166 = vmatpush1.bf16.msra.mxu0 0
    %1167 = vmatprep.subr.bf16.mxu0 0
    %1168 = vmatpush1.bf16.msra.mxu0 0
    %1169 = vmatprep.subr.bf16.mxu0 0
    %1170 = vmatpush1.bf16.msra.mxu0 0
    %1171 = vmatprep.subr.bf16.mxu0 0
    %1172 = vmatpush1.bf16.msra.mxu0 0
    %1173 = vmatprep.subr.bf16.mxu0 0
    %1174 = vmatpush1.bf16.msra.mxu0 0
    %1175 = vmatprep.subr.bf16.mxu0 0
    %1176 = vmatpush1.bf16.msra.mxu0 0
    %1177 = vmatprep.subr.bf16.mxu0 0
    %1178 = vmatpush1.bf16.msra.mxu0 0
    %1179 = vmatprep.subr.bf16.mxu0 0
    %1180 = vmatpush1.bf16.msra.mxu0 0
    %1181 = vmatprep.subr.bf16.mxu0 0
    %1182 = vmatpush1.bf16.msra.mxu0 0
    %1183 = vmatprep.subr.bf16.mxu0 0
    %1184 = vmatpush1.bf16.msra.mxu0 0
    %1185 = vmatprep.subr.bf16.mxu0 0
    %1186 = vmatpush1.bf16.msra.mxu0 0
    %1187 = vmatprep.subr.bf16.mxu0 0
    %1188 = vmatpush1.bf16.msra.mxu0 0
    %1189 = vmatprep.mubr.bf16.mxu0 0
    %1190 = vmatmul.mubr.bf16.gmra.mrb[0].mxu0 %v1152
    %v1191 = vpop.f32.mrb[0].mxu0
    %v1192 = vadd.f32 0.0, %v1191
    %v1193 = vpop.f32.mrb[0].mxu0
    %v1194 = vpop.f32.mrb[0].mxu0
    %v1195 = vpop.f32.mrb[0].mxu0
    %1196 = vdwg.mxu0
    %v1197 = vrcp.pop %v1095
    %v1198 = vrcp.pop %v1098
    %v1199 = vmul.f32 %v1144, %v1197
    %v1200 = vmul.f32 %v1192, %v1198
    %1203 = vrot.lane.b32.xlu0 %v1199, 8
    %v1204 = vpop.permute.xlu0 %1203
    %1205 = vrot.lane.b32.xlu0 %v1200, 8
    %v1206 = vpop.permute.xlu0 %1205
    %v1209 = vsel %vm238, %v977, %v1204
    %v1210 = vsel %vm238, %v978, %v1206
    %v1211 = vpack.c.bf16 %v1210, %v1209
    %s1212 = scalar_lea.vmem %s5, 8
    %v1213 = vld [vmem:[%s1212] sm:$0xf]
    %v1214 = vld [vmem:[%s1212 + $0x4] sm:$0xf]
    %v1215 = vld [vmem:[#allocation3] sm:$0xff]
    %v1216 = vld [vmem:[#allocation3 + $0x8] sm:$0xff]
    %v1219 = vunpack.c.l.b16 %v1213
    %v1220 = vunpack.c.l.b16 %v1214
    %v1221 = vpack.c.b16 %v1220, %v1219
    %v1224 = vsel %vm704, %v1211, 0
    %1226 = vmatprep.subr.bf16.mxu0 0
    %1227 = vmatpush1.bf16.msra.mxu0 %v1221
    %1228 = vmatprep.subr.bf16.mxu0 0
    %1229 = vmatpush1.bf16.msra.mxu0 0
    %1230 = vmatprep.subr.bf16.mxu0 0
    %1231 = vmatpush1.bf16.msra.mxu0 0
    %1232 = vmatprep.subr.bf16.mxu0 0
    %1233 = vmatpush1.bf16.msra.mxu0 0
    %1234 = vmatprep.subr.bf16.mxu0 0
    %1235 = vmatpush1.bf16.msra.mxu0 0
    %1236 = vmatprep.subr.bf16.mxu0 0
    %1237 = vmatpush1.bf16.msra.mxu0 0
    %1238 = vmatprep.subr.bf16.mxu0 0
    %1239 = vmatpush1.bf16.msra.mxu0 0
    %1240 = vmatprep.subr.bf16.mxu0 0
    %1241 = vmatpush1.bf16.msra.mxu0 0
    %1242 = vmatprep.subr.bf16.mxu0 0
    %1243 = vmatpush1.bf16.msra.mxu0 0
    %1244 = vmatprep.subr.bf16.mxu0 0
    %1245 = vmatpush1.bf16.msra.mxu0 0
    %1246 = vmatprep.subr.bf16.mxu0 0
    %1247 = vmatpush1.bf16.msra.mxu0 0
    %1248 = vmatprep.subr.bf16.mxu0 0
    %1249 = vmatpush1.bf16.msra.mxu0 0
    %1250 = vmatprep.subr.bf16.mxu0 0
    %1251 = vmatpush1.bf16.msra.mxu0 0
    %1252 = vmatprep.subr.bf16.mxu0 0
    %1253 = vmatpush1.bf16.msra.mxu0 0
    %1254 = vmatprep.subr.bf16.mxu0 0
    %1255 = vmatpush1.bf16.msra.mxu0 0
    %1256 = vmatprep.subr.bf16.mxu0 0
    %1257 = vmatpush1.bf16.msra.mxu0 0
    %1258 = vmatprep.mubr.bf16.mxu0 0
    %1259 = vmatmul.mubr.bf16.gmra.mrb[0].mxu0 %v1224
    %v1260 = vpop.f32.mrb[0].mxu0
    %v1261 = vadd.f32 0.0, %v1260
    %v1262 = vpop.f32.mrb[0].mxu0
    %v1263 = vpop.f32.mrb[0].mxu0
    %v1264 = vadd.f32 0.0, %v1263
    %v1265 = vpop.f32.mrb[0].mxu0
    %1266 = vdwg.mxu0
    %v1267 = vadd.f32 %v1215, %v1261
    %v1268 = vadd.f32 %v1216, %v1264
    %1269 = vst.msk [vmem:[#allocation3] sm:$0xff] %vm52, %v1267
    %1270 = vst.msk [vmem:[#allocation3 + $0x8] sm:$0xff] %vm52, %v1268
    %v1271 = vld [vmem:[#allocation3] sm:$0xff]
    %v1272 = vld [vmem:[#allocation3 + $0x8] sm:$0xff]
    %v1273 = vld [vmem:[%s6] sm:$0x1]
    %v1275 = vlaneseq
    %v1276 = vshrl.u32 %v1275, 7
    %v1277 = vsub.s32 0, %v1276
    %v1278 = vrot.slane %v1273, %v1277
    %v1280 = vadd.f32 %v1271, %v1278
    %v1281 = vadd.f32 %v1272, %v1278
    %v1282 = vadd.f32 %v1280, %v48
    %v1283 = vadd.f32 %v1281, %v49
    %v1284 = vld [vmem:[%s7] sm:$0x1]
    %v1285 = vld [vmem:[%s8] sm:$0x1]
    %v1286 = vsel %vm52, %v1282, 0.0
    %1287 = vadd.xlane.f32.xlu0 %v1286
    %v1288 = vpop.xlane.xlu0 %1287
    %v1289 = vsel %vm52, %v1283, 0.0
    %1290 = vadd.xlane.f32.xlu0 %v1289
    %v1291 = vpop.xlane.xlu0 %1290
    %v1292 = vmul.f32 %v1288, %v59
    %v1293 = vmul.f32 %v1291, %v59
    %v1294 = vsub.f32 %v1282, %v1292
    %v1295 = vsub.f32 %v1283, %v1293
    %v1296 = vmul.f32 %v1294, %v1294
    %v1297 = vmul.f32 %v1295, %v1295
    %v1298 = vsel %vm52, %v1296, 0.0
    %1299 = vadd.xlane.f32.xlu0 %v1298
    %v1300 = vpop.xlane.xlu0 %1299
    %v1301 = vsel %vm52, %v1297, 0.0
    %1302 = vadd.xlane.f32.xlu0 %v1301
    %v1303 = vpop.xlane.xlu0 %1302
    %v1304 = vmul.f32 %v1300, %v59
    %v1305 = vmul.f32 %v1303, %v59
    %v1306 = vadd.f32 %v1304, 1e-05
    %v1307 = vadd.f32 %v1305, 1e-05
    %v1308 = vrsqrt.pop %v1306
    %v1309 = vrsqrt.pop %v1307
    %v1310 = vmul.f32 %v1294, %v1308
    %v1311 = vmul.f32 %v1295, %v1309
    %v1313 = vlaneseq
    %v1314 = vshrl.u32 %v1313, 7
    %v1315 = vsub.s32 0, %v1314
    %v1316 = vrot.slane %v1284, %v1315
    %v1318 = vmul.f32 %v1310, %v1316
    %v1319 = vmul.f32 %v1311, %v1316
    %v1321 = vlaneseq
    %v1322 = vshrl.u32 %v1321, 7
    %v1323 = vsub.s32 0, %v1322
    %v1324 = vrot.slane %v1285, %v1323
    %v1326 = vadd.f32 %v1318, %v1324
    %v1327 = vadd.f32 %v1319, %v1324
    %v1328 = vpack.c.bf16 %v1327, %v1326
    %v1329 = vld [vmem:[%s9] sm:$0xf]
    %v1330 = vld [vmem:[%s9 + $0x4] sm:$0xf]
    %v1331 = vld [vmem:[%s9 + $0x8] sm:$0xf]
    %v1332 = vld [vmem:[%s9 + $0xc] sm:$0xf]
    %v1333 = vld [vmem:[%s10] sm:$0x1]
    %v1335 = vlaneseq
    %v1336 = vshrl.u32 %v1335, 7
    %v1337 = vsub.s32 0, %v1336
    %v1338 = vrot.slane %v1333, %v1337
    %v1344 = vunpack.c.l.b16 %v1329
    %v1345 = vunpack.c.l.b16 %v1330
    %v1346 = vunpack.c.l.b16 %v1331
    %v1347 = vunpack.c.l.b16 %v1332
    %v1348 = vpack.c.b16 %v1345, %v1344
    %v1349 = vpack.c.b16 %v1347, %v1346
    %v1353 = vsel %vm52, %v1328, 0
    %1355 = vmatprep.subr.bf16.mxu0 0
    %1356 = vmatpush1.bf16.msra.mxu0 %v1348
    %1357 = vmatprep.subr.bf16.mxu0 0
    %1358 = vmatpush1.bf16.msra.mxu0 %v1349
    %1359 = vmatprep.subr.bf16.mxu0 0
    %1360 = vmatpush1.bf16.msra.mxu0 0
    %1361 = vmatprep.subr.bf16.mxu0 0
    %1362 = vmatpush1.bf16.msra.mxu0 0
    %1363 = vmatprep.subr.bf16.mxu0 0
    %1364 = vmatpush1.bf16.msra.mxu0 0
    %1365 = vmatprep.subr.bf16.mxu0 0
    %1366 = vmatpush1.bf16.msra.mxu0 0
    %1367 = vmatprep.subr.bf16.mxu0 0
    %1368 = vmatpush1.bf16.msra.mxu0 0
    %1369 = vmatprep.subr.bf16.mxu0 0
    %1370 = vmatpush1.bf16.msra.mxu0 0
    %1371 = vmatprep.subr.bf16.mxu0 0
    %1372 = vmatpush1.bf16.msra.mxu0 0
    %1373 = vmatprep.subr.bf16.mxu0 0
    %1374 = vmatpush1.bf16.msra.mxu0 0
    %1375 = vmatprep.subr.bf16.mxu0 0
    %1376 = vmatpush1.bf16.msra.mxu0 0
    %1377 = vmatprep.subr.bf16.mxu0 0
    %1378 = vmatpush1.bf16.msra.mxu0 0
    %1379 = vmatprep.subr.bf16.mxu0 0
    %1380 = vmatpush1.bf16.msra.mxu0 0
    %1381 = vmatprep.subr.bf16.mxu0 0
    %1382 = vmatpush1.bf16.msra.mxu0 0
    %1383 = vmatprep.subr.bf16.mxu0 0
    %1384 = vmatpush1.bf16.msra.mxu0 0
    %1385 = vmatprep.subr.bf16.mxu0 0
    %1386 = vmatpush1.bf16.msra.mxu0 0
    %1387 = vmatprep.mubr.bf16.mxu0 0
    %1388 = vmatmul.mubr.bf16.gmra.mrb[0].mxu0 %v1353
    %v1389 = vpop.f32.mrb[0].mxu0
    %v1390 = vadd.f32 %v1338, %v1389
    %v1391 = vpop.f32.mrb[0].mxu0
    %v1392 = vpop.f32.mrb[0].mxu0
    %v1393 = vadd.f32 %v1338, %v1392
    %v1394 = vpop.f32.mrb[0].mxu0
    %1395 = vdwg.mxu0
    %v1396 = vpack.c.bf16 %v1393, %v1390
    %v1397 = vmul.bf16 %v1396, 1071267802
    %v1398 = vxor.u32 %v1397, 2147516416
    %v1400 = vmul.bf16 %v1398, 1069105081
    %v1401 = vpow.bf16.pop %v1400
    %v1402 = vadd.bf16 %v1401, 1065369472
    %v1403 = vrcp.bf16.pop %v1402
    %v1404 = vmul.bf16 1065369472, %v1403
    %v1405 = vmul.bf16 %v1396, %v1404
    %v1406 = vld [vmem:[%s11] sm:$0xf]
    %v1407 = vld [vmem:[%s11 + $0x4] sm:$0xf]
    %v1408 = vld [vmem:[%s11 + $0x8] sm:$0xf]
    %v1409 = vld [vmem:[%s11 + $0xc] sm:$0xf]
    %v1410 = vld [vmem:[%s11 + $0x10] sm:$0xf]
    %v1411 = vld [vmem:[%s11 + $0x14] sm:$0xf]
    %v1412 = vld [vmem:[%s11 + $0x18] sm:$0xf]
    %v1413 = vld [vmem:[%s11 + $0x1c] sm:$0xf]
    %v1414 = vld [vmem:[%s11 + $0x20] sm:$0xf]
    %v1415 = vld [vmem:[%s11 + $0x24] sm:$0xf]
    %v1416 = vld [vmem:[%s11 + $0x28] sm:$0xf]
    %v1417 = vld [vmem:[%s11 + $0x2c] sm:$0xf]
    %v1418 = vld [vmem:[%s11 + $0x30] sm:$0xf]
    %v1419 = vld [vmem:[%s11 + $0x34] sm:$0xf]
    %v1420 = vld [vmem:[%s11 + $0x38] sm:$0xf]
    %v1421 = vld [vmem:[%s11 + $0x3c] sm:$0xf]
    %v1422 = vld [vmem:[%s12] sm:$0x1]
    %v1424 = vlaneseq
    %v1425 = vshrl.u32 %v1424, 7
    %v1426 = vsub.s32 0, %v1425
    %v1427 = vrot.slane %v1422, %v1426
    %v1445 = vunpack.c.l.b16 %v1406
    %v1446 = vunpack.c.l.b16 %v1407
    %v1447 = vunpack.c.l.b16 %v1408
    %v1448 = vunpack.c.l.b16 %v1409
    %v1449 = vunpack.c.l.b16 %v1410
    %v1450 = vunpack.c.l.b16 %v1411
    %v1451 = vunpack.c.l.b16 %v1412
    %v1452 = vunpack.c.l.b16 %v1413
    %v1453 = vunpack.c.l.b16 %v1414
    %v1454 = vunpack.c.l.b16 %v1415
    %v1455 = vunpack.c.l.b16 %v1416
    %v1456 = vunpack.c.l.b16 %v1417
    %v1457 = vunpack.c.l.b16 %v1418
    %v1458 = vunpack.c.l.b16 %v1419
    %v1459 = vunpack.c.l.b16 %v1420
    %v1460 = vunpack.c.l.b16 %v1421
    %v1461 = vpack.c.b16 %v1446, %v1445
    %v1462 = vpack.c.b16 %v1448, %v1447
    %v1463 = vpack.c.b16 %v1450, %v1449
    %v1464 = vpack.c.b16 %v1452, %v1451
    %v1465 = vpack.c.b16 %v1454, %v1453
    %v1466 = vpack.c.b16 %v1456, %v1455
    %v1467 = vpack.c.b16 %v1458, %v1457
    %v1468 = vpack.c.b16 %v1460, %v1459
    %1477 = vmatprep.subr.bf16.mxu0 0
    %1478 = vmatpush1.bf16.msra.mxu0 %v1461
    %1479 = vmatprep.subr.bf16.mxu0 0
    %1480 = vmatpush1.bf16.msra.mxu0 %v1462
    %1481 = vmatprep.subr.bf16.mxu0 0
    %1482 = vmatpush1.bf16.msra.mxu0 %v1463
    %1483 = vmatprep.subr.bf16.mxu0 0
    %1484 = vmatpush1.bf16.msra.mxu0 %v1464
    %1485 = vmatprep.subr.bf16.mxu0 0
    %1486 = vmatpush1.bf16.msra.mxu0 %v1465
    %1487 = vmatprep.subr.bf16.mxu0 0
    %1488 = vmatpush1.bf16.msra.mxu0 %v1466
    %1489 = vmatprep.subr.bf16.mxu0 0
    %1490 = vmatpush1.bf16.msra.mxu0 %v1467
    %1491 = vmatprep.subr.bf16.mxu0 0
    %1492 = vmatpush1.bf16.msra.mxu0 %v1468
    %1493 = vmatprep.subr.bf16.mxu0 0
    %1494 = vmatpush1.bf16.msra.mxu0 0
    %1495 = vmatprep.subr.bf16.mxu0 0
    %1496 = vmatpush1.bf16.msra.mxu0 0
    %1497 = vmatprep.subr.bf16.mxu0 0
    %1498 = vmatpush1.bf16.msra.mxu0 0
    %1499 = vmatprep.subr.bf16.mxu0 0
    %1500 = vmatpush1.bf16.msra.mxu0 0
    %1501 = vmatprep.subr.bf16.mxu0 0
    %1502 = vmatpush1.bf16.msra.mxu0 0
    %1503 = vmatprep.subr.bf16.mxu0 0
    %1504 = vmatpush1.bf16.msra.mxu0 0
    %1505 = vmatprep.subr.bf16.mxu0 0
    %1506 = vmatpush1.bf16.msra.mxu0 0
    %1507 = vmatprep.subr.bf16.mxu0 0
    %1508 = vmatpush1.bf16.msra.mxu0 0
    %1509 = vmatprep.mubr.bf16.mxu0 0
    %1510 = vmatmul.mubr.bf16.gmra.mrb[0].mxu0 %v1405
    %v1511 = vpop.f32.mrb[0].mxu0
    %v1512 = vadd.f32 %v1427, %v1511
    %v1513 = vpop.f32.mrb[0].mxu0
    %v1514 = vpop.f32.mrb[0].mxu0
    %v1515 = vadd.f32 %v1427, %v1514
    %v1516 = vpop.f32.mrb[0].mxu0
    %1517 = vdwg.mxu0
    %v1518 = vadd.f32 %v1512, %v1282
    %v1519 = vadd.f32 %v1515, %v1283
    %1520 = vst.msk [vmem:[#allocation4] sm:$0xff] %vm52, %v1518
    %1521 = vst.msk [vmem:[#allocation4 + $0x8] sm:$0xff] %vm52, %v1519
    // Predicated region
    $region54: #{tpu_custom_call.1} parent=1 // pred_check
      _
    $region55: #{tpu_custom_call.1} parent=1 // pred_check_branch
      %1523 = sbr.rel (0) target = $region57
    $region56: #{tpu_custom_call.1} parent=1 // pred_region
      %s1525 = ssub.s32 256, 256
      %1526 = vsyncadd [#allocation5], %s1525
      %s1527 = sshll.u32 [#allocation4], 4
      %s1528 = int_to_ptr.vmem [resolvable:$true] %s1527
      %1533 = dma.vmem_to_hbm [thread:$0]  %s1528, 256, %s13, [#allocation5], 128, 128, 8
    $region57: #{tpu_custom_call.1} parent=1 // pred_fallthru
      _
    // Predicated region
    $region58: #{tpu_custom_call.1} parent=1 // pred_check
      _
    $region59: #{tpu_custom_call.1} parent=1 // pred_check_branch
      %1535 = sbr.rel (0) target = $region61
    $region60: #{tpu_custom_call.1} parent=1 // pred_region
      %1536 = dma.done [#allocation5], 256
    $region61: #{tpu_custom_call.1} parent=1 // pred_fallthru
      _
    %1537 = vsyncpa [#allocation5], 1

</llo_original>
